<compile_context>
chip_gen: v7x
topology: tpu7x:2x2x1
jax: 0.10.0
libtpu: 0.0.40
codegen_flags: <defaults>
</compile_context>

<pallas_src>
import functools
import math

import jax
import jax.numpy as jnp
from jax import lax
from jax.experimental import pallas as pl
from jax.experimental.pallas import tpu as pltpu


# ----------------------------------------------------------------------------
# Fused forward kernel: one grid step == (one batch element, one q tile).
# ----------------------------------------------------------------------------
def _fused_sdpa_mem_kernel(
    q_in_ref, k_in_ref, v_in_ref,
    w_q_ref, b_q_ref, w_k_ref, b_k_ref, w_v_ref, b_v_ref,
    w_o_ref, b_o_ref, m_k_ref, m_v_ref,
    out_ref, att_ref,
    k_full_ref, v_full_ref,
    *, h, d_k, d_v, m, nk, matmul_dtype,
):
    nkm = nk + m

    # ---- K / V projection + memory-slot append: once per batch element ----
    @pl.when(pl.program_id(1) == 0)
    def _():
        x_k = k_in_ref[0].astype(matmul_dtype)                       # (nk, d_model)
        x_v = v_in_ref[0].astype(matmul_dtype)
        k = jnp.dot(x_k, w_k_ref[...], preferred_element_type=jnp.float32) + b_k_ref[...]
        v = jnp.dot(x_v, w_v_ref[...], preferred_element_type=jnp.float32) + b_v_ref[...]
        # Assemble K/V + memory slots directly in VMEM (single cast, no concat).
        k_full_ref[:nk, :] = k.astype(matmul_dtype)
        k_full_ref[nk:, :] = m_k_ref[...]          # pre-scaled sqrt(d_k)*m_k (matmul_dtype)
        v_full_ref[:nk, :] = v.astype(matmul_dtype)
        v_full_ref[nk:, :] = m_v_ref[...]          # pre-scaled sqrt(m)*m_v   (matmul_dtype)

    # ---- Q projection for this q tile; fold 1/sqrt(d_k) into q ----
    x_q = q_in_ref[0].astype(matmul_dtype)                            # (tq, d_model)
    q = jnp.dot(x_q, w_q_ref[...], preferred_element_type=jnp.float32) + b_q_ref[...]
    q = (q * (1.0 / math.sqrt(d_k))).astype(matmul_dtype)             # cast once for all heads

    k_full = k_full_ref[...]                                          # (nkm, h*d_k)
    v_full = v_full_ref[...]                                          # (nkm, h*d_v)

    out_acc = None
    for i in range(h):  # static unroll over heads
        q_h = q[:, i * d_k:(i + 1) * d_k]                             # (tq, d_k)
        k_h = k_full[:, i * d_k:(i + 1) * d_k]                        # (nkm, d_k)
        v_h = v_full[:, i * d_v:(i + 1) * d_v]                        # (nkm, d_v)

        # Contract trailing d_k dims directly (K is never transposed in HBM).
        s = lax.dot_general(q_h, k_h, (((1,), (1,)), ((), ())),
                            preferred_element_type=jnp.float32)       # (tq, nkm)

        # Numerically-stable softmax in f32; exact reciprocal -> rows sum to 1.
        s_max = jnp.max(s, axis=-1, keepdims=True)
        e = jnp.exp(s - s_max)
        denom = jnp.sum(e, axis=-1, keepdims=True)
        att_h = e * pl.reciprocal(denom, approx=False)

        # Lane-dense att layout: head i occupies lanes [i*nkm, (i+1)*nkm).
        att_ref[0, :, i * nkm:(i + 1) * nkm] = att_h.astype(att_ref.dtype)

        # Per-head output-projection accumulation (w_o is head-major).
        o_h = jnp.dot(att_h.astype(matmul_dtype), v_h,
                      preferred_element_type=jnp.float32)             # (tq, d_v)
        contrib = jnp.dot(o_h.astype(matmul_dtype), w_o_ref[i],
                          preferred_element_type=jnp.float32)         # (tq, d_model)
        out_acc = contrib if out_acc is None else out_acc + contrib

    out_ref[0] = (out_acc + b_o_ref[...]).astype(out_ref.dtype)


# ----------------------------------------------------------------------------
# Generation-aware tiling helpers.
# ----------------------------------------------------------------------------
def _vmem_capacity_bytes():
    try:
        return int(pltpu.get_tpu_info().vmem_capacity_bytes)
    except Exception:
        return 64 << 20  # conservative default (v7x per-TensorCore VMEM)


def _pick_q_tile(nq, d_model, h, d_k, d_v, nkm, vmem_cap):
    """Largest q tile whose per-step footprint fits comfortably in VMEM."""
    # Per-q-row f32 bytes: double-buffered q/out/att blocks + in-kernel
    # q / scores / att intermediates. K/V, weights and scratch are
    # tile-independent and covered by the budget headroom.
    bytes_per_row = 4 * (4 * d_model + 4 * h * nkm + 2 * h * (d_k + d_v))
    budget = int(vmem_cap * 0.35)
    tile = max(8, budget // max(bytes_per_row, 1))
    tile = max(8, (tile // 8) * 8)     # sublane-aligned
    tile = min(tile, 1024)
    return nq if tile >= nq else tile


# ----------------------------------------------------------------------------
# Wrapper.
# ----------------------------------------------------------------------------
def sdpa_memory_forward(params, queries, keys, values, *, d_k, d_v, h, m,
                        matmul_dtype=jnp.bfloat16, att_dtype=jnp.float32):
    """Fused forward pass. Returns (out, att) like the PyTorch module.

    matmul_dtype: dtype fed to the MXU (accumulation stays f32). bfloat16 is
      the fast/native path on all current TPUs; pass jnp.float32 for a
      bit-tighter numerical match.
    att_dtype: dtype of the returned attention map; bfloat16 halves its HBM
      writeback (the dominant output traffic at realistic sizes).
    """
    # TODO(synk): attention_mask / attention_weights branches of the PyTorch
    # module are not implemented (default None path only).
    b_s, nq, d_model = queries.shape
    nk = keys.shape[1]
    nkm = nk + m

    # ---- One-time parameter plumbing (wrapper-side, outside the kernel) ----
    w_q = params["w_q"].astype(matmul_dtype)
    w_k = params["w_k"].astype(matmul_dtype)
    w_v = params["w_v"].astype(matmul_dtype)
    w_o = params["w_o"].reshape(h, d_v, d_model).astype(matmul_dtype)   # head-major
    b_q, b_k, b_v, b_o = params["b_q"], params["b_k"], params["b_v"], params["b_o"]
    m_k = (math.sqrt(d_k) * params["m_k"][0]).astype(matmul_dtype)      # (m, h*d_k), pre-scaled
    m_v = (math.sqrt(m) * params["m_v"][0]).astype(matmul_dtype)        # (m, h*d_v), pre-scaled

    vmem_cap = _vmem_capacity_bytes()
    tq = _pick_q_tile(nq, d_model, h, d_k, d_v, nkm, vmem_cap)
    n_q_tiles = pl.cdiv(nq, tq)

    kern = functools.partial(
        _fused_sdpa_mem_kernel, h=h, d_k=d_k, d_v=d_v, m=m, nk=nk,
        matmul_dtype=matmul_dtype)

    # Advisory cost estimate so XLA can overlap neighbors around the call.
    flops = 2 * b_s * (nq * d_model * h * d_k
                       + nk * d_model * h * (d_k + d_v)
                       + h * nq * nkm * (d_k + d_v)
                       + nq * h * d_v * d_model)
    bytes_accessed = ((queries.size + keys.size + values.size) * 4
                      + sum(int(a.size) * a.dtype.itemsize
                            for a in (w_q, w_k, w_v, w_o, b_q, b_k, b_v, b_o, m_k, m_v))
                      + b_s * nq * d_model * 4
                      + b_s * nq * h * nkm * jnp.dtype(att_dtype).itemsize)
    cost = pl.CostEstimate(flops=int(flops),
                           transcendentals=int(b_s * h * nq * nkm),
                           bytes_accessed=int(bytes_accessed))

    def call(single_buffer_consts):
        def const_spec(shape):
            ndim = len(shape)
            imap = lambda b, t, _n=ndim: (0,) * _n
            if single_buffer_consts:
                # Grid-invariant operand: no need to double-buffer it.
                return pl.BlockSpec(shape, imap,
                                    pipeline_mode=pl.Buffered(buffer_count=1))
            return pl.BlockSpec(shape, imap)

        return pl.pallas_call(
            kern,
            out_shape=(
                jax.ShapeDtypeStruct((b_s, nq, d_model), jnp.float32),
                jax.ShapeDtypeStruct((b_s, nq, h * nkm), att_dtype),   # lane-dense att
            ),
            grid=(b_s, n_q_tiles),
            in_specs=[
                pl.BlockSpec((1, tq, d_model), lambda b, t: (b, t, 0)),   # queries
                pl.BlockSpec((1, nk, d_model), lambda b, t: (b, 0, 0)),   # keys
                pl.BlockSpec((1, nk, d_model), lambda b, t: (b, 0, 0)),   # values
                const_spec((d_model, h * d_k)),                            # w_q
                const_spec((1, h * d_k)),                                  # b_q
                const_spec((d_model, h * d_k)),                            # w_k
                const_spec((1, h * d_k)),                                  # b_k
                const_spec((d_model, h * d_v)),                            # w_v
                const_spec((1, h * d_v)),                                  # b_v
                const_spec((h, d_v, d_model)),                             # w_o (head-major)
                const_spec((1, d_model)),                                  # b_o
                const_spec((m, h * d_k)),                                  # m_k (pre-scaled)
                const_spec((m, h * d_v)),                                  # m_v (pre-scaled)
            ],
            out_specs=(
                pl.BlockSpec((1, tq, d_model), lambda b, t: (b, t, 0)),
                pl.BlockSpec((1, tq, h * nkm), lambda b, t: (b, t, 0)),
            ),
            scratch_shapes=[
                pltpu.VMEM((nkm, h * d_k), matmul_dtype),   # K + memory slots
                pltpu.VMEM((nkm, h * d_v), matmul_dtype),   # V + memory slots
            ],
            compiler_params=pltpu.CompilerParams(
                # batch: megacore-parallel; q tiles: sequential so the K/V
                # scratch computed at tile 0 is reused by later tiles.
                dimension_semantics=("parallel", "arbitrary"),
                vmem_limit_bytes=int(vmem_cap * 0.8)),
            cost_estimate=cost,
        )(queries, keys, values,
          w_q, b_q, w_k, b_k, w_v, b_v, w_o, b_o, m_k, m_v)

    try:
        out, att_flat = call(True)
        out = jax.block_until_ready(out)
    except Exception:
        # Installed jax does not support pipeline_mode=pl.Buffered on
        # pallas_call BlockSpecs; fall back to default double buffering.
        out, att_flat = call(False)

    att = att_flat.reshape(b_s, nq, h, nkm).transpose(0, 2, 1, 3)
    return out, att


# ----------------------------------------------------------------------------
# Parameter init (deterministic, mirrors the PyTorch __init__ shapes)
# ----------------------------------------------------------------------------
def init_params(key, d_model, d_k, d_v, h, m):
    def xavier(key, d_in, d_out):
        bound = math.sqrt(6.0 / (d_in + d_out))
        return jax.random.uniform(key, (d_in, d_out), jnp.float32, -bound, bound)

    ks = jax.random.split(key, 6)
    return {
        "w_q": xavier(ks[0], d_model, h * d_k),
        "b_q": jnp.zeros((1, h * d_k), jnp.float32),
        "w_k": xavier(ks[1], d_model, h * d_k),
        "b_k": jnp.zeros((1, h * d_k), jnp.float32),
        "w_v": xavier(ks[2], d_model, h * d_v),
        "b_v": jnp.zeros((1, h * d_v), jnp.float32),
        "w_o": xavier(ks[3], h * d_v, d_model),
        "b_o": jnp.zeros((1, d_model), jnp.float32),
        "m_k": (1.0 / d_k) * jax.random.normal(ks[4], (1, m, h * d_k), jnp.float32),
        "m_v": (1.0 / m) * jax.random.normal(ks[5], (1, m, h * d_v), jnp.float32),
    }


# Pure-JAX reference for verification.
def reference_forward(params, queries, keys, values, *, d_k, d_v, h, m):
    b_s, nq, d_model = queries.shape
    nk = keys.shape[1]
    q = (queries @ params["w_q"] + params["b_q"]).reshape(b_s, nq, h, d_k).transpose(0, 2, 1, 3)
    m_k = math.sqrt(d_k) * jnp.broadcast_to(params["m_k"], (b_s, m, h * d_k))
    m_v = math.sqrt(m) * jnp.broadcast_to(params["m_v"], (b_s, m, h * d_v))
    k = jnp.concatenate([keys @ params["w_k"] + params["b_k"], m_k], 1)
    k = k.reshape(b_s, nk + m, h, d_k).transpose(0, 2, 3, 1)
    v = jnp.concatenate([values @ params["w_v"] + params["b_v"], m_v], 1)
    v = v.reshape(b_s, nk + m, h, d_v).transpose(0, 2, 1, 3)
    att = jnp.einsum("bhqd,bhdk->bhqk", q, k) / math.sqrt(d_k)
    att = jax.nn.softmax(att, axis=-1)
    out = jnp.einsum("bhqk,bhkd->bhqd", att, v).transpose(0, 2, 1, 3).reshape(b_s, nq, h * d_v)
    out = out @ params["w_o"] + params["b_o"]
    return out, att


if __name__ == "__main__":
    d_model, d_k, d_v, h, m = 32, 8, 8, 4, 8
    b_s, nq, nk = 2, 8, 8

    key = jax.random.PRNGKey(0)
    kp, kq, kk, kv = jax.random.split(key, 4)
    params = init_params(kp, d_model, d_k, d_v, h, m)

    queries = jax.random.normal(kq, (b_s, nq, d_model), jnp.float32)
    keys = jax.random.normal(kk, (b_s, nk, d_model), jnp.float32)
    values = jax.random.normal(kv, (b_s, nk, d_model), jnp.float32)

    ref_out, ref_att = reference_forward(
        params, queries, keys, values, d_k=d_k, d_v=d_v, h=h, m=m)

    # Default fast path: bf16 MXU matmuls, f32 accumulation/softmax.
    out, att = sdpa_memory_forward(
        params, queries, keys, values, d_k=d_k, d_v=d_v, h=h, m=m)
    out = jax.block_until_ready(out)
    att = jax.block_until_ready(att)
    assert out.shape == (b_s, nq, d_model)
    assert att.shape == (b_s, h, nq, nk + m)
    # bf16 matmul inputs => looser tolerances than a pure-f32 run (expected).
    assert jnp.allclose(att, ref_att, atol=5e-2, rtol=5e-2)
    assert jnp.allclose(out, ref_out, atol=1e-1, rtol=1e-1)

    # f32 path for a tight numerical check of the kernel structure.
    out32, att32 = sdpa_memory_forward(
        params, queries, keys, values, d_k=d_k, d_v=d_v, h=h, m=m,
        matmul_dtype=jnp.float32)
    out32 = jax.block_until_ready(out32)
    att32 = jax.block_until_ready(att32)
    assert jnp.allclose(att32, ref_att, atol=3e-3, rtol=3e-3)
    assert jnp.allclose(out32, ref_out, atol=2e-2, rtol=2e-2)

    print("KERNEL_OK")
</pallas_src>

<mosaic_0001>
module attributes {stable_mosaic.version = 11 : i64} {
  func.func @_fused_sdpa_mem_kernel(%arg0: i32, %arg1: i32, %arg2: memref<1x8x32xf32, #tpu.memory_space<vmem>>, %arg3: memref<1x8x32xf32, #tpu.memory_space<vmem>>, %arg4: memref<1x8x32xf32, #tpu.memory_space<vmem>>, %arg5: memref<32x32xbf16, #tpu.memory_space<vmem>>, %arg6: memref<1x32xf32, #tpu.memory_space<vmem>>, %arg7: memref<32x32xbf16, #tpu.memory_space<vmem>>, %arg8: memref<1x32xf32, #tpu.memory_space<vmem>>, %arg9: memref<32x32xbf16, #tpu.memory_space<vmem>>, %arg10: memref<1x32xf32, #tpu.memory_space<vmem>>, %arg11: memref<4x8x32xbf16, #tpu.memory_space<vmem>>, %arg12: memref<1x32xf32, #tpu.memory_space<vmem>>, %arg13: memref<8x32xbf16, #tpu.memory_space<vmem>>, %arg14: memref<8x32xbf16, #tpu.memory_space<vmem>>, %arg15: memref<1x8x32xf32, #tpu.memory_space<vmem>>, %arg16: memref<1x8x64xf32, #tpu.memory_space<vmem>>, %arg17: memref<16x32xbf16, #tpu.memory_space<vmem>>, %arg18: memref<16x32xbf16, #tpu.memory_space<vmem>>) attributes {dimension_semantics = [#tpu.dimension_semantics<parallel>, #tpu.dimension_semantics<arbitrary>], iteration_bounds = array<i64: 2, 1>, scalar_prefetch = 0 : i64, scratch_operands = 2 : i64, tpu.core_type = #tpu.core_type<tc>, window_params = [{transform_indices = @transform_0, window_bounds = array<i64: 1, 8, 32>}, {transform_indices = @transform_1, window_bounds = array<i64: 1, 8, 32>}, {transform_indices = @transform_2, window_bounds = array<i64: 1, 8, 32>}, {pipeline_mode = #tpu.pipeline_mode<synchronous>, transform_indices = @transform_3, window_bounds = array<i64: 32, 32>}, {pipeline_mode = #tpu.pipeline_mode<synchronous>, transform_indices = @transform_4, window_bounds = array<i64: 1, 32>}, {pipeline_mode = #tpu.pipeline_mode<synchronous>, transform_indices = @transform_5, window_bounds = array<i64: 32, 32>}, {pipeline_mode = #tpu.pipeline_mode<synchronous>, transform_indices = @transform_6, window_bounds = array<i64: 1, 32>}, {pipeline_mode = #tpu.pipeline_mode<synchronous>, transform_indices = @transform_7, window_bounds = array<i64: 32, 32>}, {pipeline_mode = #tpu.pipeline_mode<synchronous>, transform_indices = @transform_8, window_bounds = array<i64: 1, 32>}, {pipeline_mode = #tpu.pipeline_mode<synchronous>, transform_indices = @transform_9, window_bounds = array<i64: 4, 8, 32>}, {pipeline_mode = #tpu.pipeline_mode<synchronous>, transform_indices = @transform_10, window_bounds = array<i64: 1, 32>}, {pipeline_mode = #tpu.pipeline_mode<synchronous>, transform_indices = @transform_11, window_bounds = array<i64: 8, 32>}, {pipeline_mode = #tpu.pipeline_mode<synchronous>, transform_indices = @transform_12, window_bounds = array<i64: 8, 32>}, {transform_indices = @transform_13, window_bounds = array<i64: 1, 8, 32>}, {transform_indices = @transform_14, window_bounds = array<i64: 1, 8, 64>}]} {
    %c0_i32 = arith.constant 0 : i32
    %0 = arith.cmpi eq, %arg1, %c0_i32 : i32
    %1 = arith.extui %0 : i1 to i32
    %c0_i32_0 = arith.constant 0 : i32
    %2 = arith.cmpi ne, %1, %c0_i32_0 : i32
    scf.if %2 {
      %c0_55 = arith.constant 0 : index
      %c0_56 = arith.constant 0 : index
      %c0_57 = arith.constant 0 : index
      %117 = vector.load %arg3[%c0_55, %c0_56, %c0_57] : memref<1x8x32xf32, #tpu.memory_space<vmem>>, vector<1x8x32xf32>
      %118 = vector.shape_cast %117 : vector<1x8x32xf32> to vector<8x32xf32>
      %119 = arith.truncf %118 : vector<8x32xf32> to vector<8x32xbf16>
      %c0_58 = arith.constant 0 : index
      %c0_59 = arith.constant 0 : index
      %c0_60 = arith.constant 0 : index
      %120 = vector.load %arg4[%c0_58, %c0_59, %c0_60] : memref<1x8x32xf32, #tpu.memory_space<vmem>>, vector<1x8x32xf32>
      %121 = vector.shape_cast %120 : vector<1x8x32xf32> to vector<8x32xf32>
      %122 = arith.truncf %121 : vector<8x32xf32> to vector<8x32xbf16>
      %c0_61 = arith.constant 0 : index
      %c0_62 = arith.constant 0 : index
      %123 = vector.load %arg7[%c0_61, %c0_62] : memref<32x32xbf16, #tpu.memory_space<vmem>>, vector<32x32xbf16>
      %cst_63 = arith.constant dense<0.000000e+00> : vector<8x32xf32>
      %124 = tpu.matmul %119, %123, %cst_63 {dimension_numbers = #tpu.dot_dimension_numbers<[1], [0], [0], [1], [0, 0, 1, 1], [], []>} : vector<8x32xbf16>, vector<32x32xbf16>, vector<8x32xf32> -> vector<8x32xf32>
      %c0_64 = arith.constant 0 : index
      %c0_65 = arith.constant 0 : index
      %125 = vector.load %arg8[%c0_64, %c0_65] : memref<1x32xf32, #tpu.memory_space<vmem>>, vector<1x32xf32>
      %126 = vector.broadcast %125 : vector<1x32xf32> to vector<8x32xf32>
      %127 = arith.addf %124, %126 : vector<8x32xf32>
      %c0_66 = arith.constant 0 : index
      %c0_67 = arith.constant 0 : index
      %128 = vector.load %arg9[%c0_66, %c0_67] : memref<32x32xbf16, #tpu.memory_space<vmem>>, vector<32x32xbf16>
      %cst_68 = arith.constant dense<0.000000e+00> : vector<8x32xf32>
      %129 = tpu.matmul %122, %128, %cst_68 {dimension_numbers = #tpu.dot_dimension_numbers<[1], [0], [0], [1], [0, 0, 1, 1], [], []>} : vector<8x32xbf16>, vector<32x32xbf16>, vector<8x32xf32> -> vector<8x32xf32>
      %c0_69 = arith.constant 0 : index
      %c0_70 = arith.constant 0 : index
      %130 = vector.load %arg10[%c0_69, %c0_70] : memref<1x32xf32, #tpu.memory_space<vmem>>, vector<1x32xf32>
      %131 = vector.broadcast %130 : vector<1x32xf32> to vector<8x32xf32>
      %132 = arith.addf %129, %131 : vector<8x32xf32>
      %133 = arith.truncf %127 : vector<8x32xf32> to vector<8x32xbf16>
      %c0_71 = arith.constant 0 : index
      %c0_72 = arith.constant 0 : index
      %134 = vector.load %arg17[%c0_71, %c0_72] : memref<16x32xbf16, #tpu.memory_space<vmem>>, vector<8x32xbf16>
      tpu.vector_store %arg17[%c0_71, %c0_72], %133 {strides = array<i32>} : memref<16x32xbf16, #tpu.memory_space<vmem>>, vector<8x32xbf16>,
      %c0_73 = arith.constant 0 : index
      %c0_74 = arith.constant 0 : index
      %135 = vector.load %arg13[%c0_73, %c0_74] : memref<8x32xbf16, #tpu.memory_space<vmem>>, vector<8x32xbf16>
      %c8 = arith.constant 8 : index
      %c0_75 = arith.constant 0 : index
      %136 = vector.load %arg17[%c8, %c0_75] : memref<16x32xbf16, #tpu.memory_space<vmem>>, vector<8x32xbf16>
      tpu.vector_store %arg17[%c8, %c0_75], %135 {strides = array<i32>} : memref<16x32xbf16, #tpu.memory_space<vmem>>, vector<8x32xbf16>,
      %137 = arith.truncf %132 : vector<8x32xf32> to vector<8x32xbf16>
      %c0_76 = arith.constant 0 : index
      %c0_77 = arith.constant 0 : index
      %138 = vector.load %arg18[%c0_76, %c0_77] : memref<16x32xbf16, #tpu.memory_space<vmem>>, vector<8x32xbf16>
      tpu.vector_store %arg18[%c0_76, %c0_77], %137 {strides = array<i32>} : memref<16x32xbf16, #tpu.memory_space<vmem>>, vector<8x32xbf16>,
      %c0_78 = arith.constant 0 : index
      %c0_79 = arith.constant 0 : index
      %139 = vector.load %arg14[%c0_78, %c0_79] : memref<8x32xbf16, #tpu.memory_space<vmem>>, vector<8x32xbf16>
      %c8_80 = arith.constant 8 : index
      %c0_81 = arith.constant 0 : index
      %140 = vector.load %arg18[%c8_80, %c0_81] : memref<16x32xbf16, #tpu.memory_space<vmem>>, vector<8x32xbf16>
      tpu.vector_store %arg18[%c8_80, %c0_81], %139 {strides = array<i32>} : memref<16x32xbf16, #tpu.memory_space<vmem>>, vector<8x32xbf16>,
    } else {
    }
    %c0 = arith.constant 0 : index
    %c0_1 = arith.constant 0 : index
    %c0_2 = arith.constant 0 : index
    %3 = vector.load %arg2[%c0, %c0_1, %c0_2] : memref<1x8x32xf32, #tpu.memory_space<vmem>>, vector<1x8x32xf32>
    %4 = vector.shape_cast %3 : vector<1x8x32xf32> to vector<8x32xf32>
    %5 = arith.truncf %4 : vector<8x32xf32> to vector<8x32xbf16>
    %c0_3 = arith.constant 0 : index
    %c0_4 = arith.constant 0 : index
    %6 = vector.load %arg5[%c0_3, %c0_4] : memref<32x32xbf16, #tpu.memory_space<vmem>>, vector<32x32xbf16>
    %cst = arith.constant dense<0.000000e+00> : vector<8x32xf32>
    %7 = tpu.matmul %5, %6, %cst {dimension_numbers = #tpu.dot_dimension_numbers<[1], [0], [0], [1], [0, 0, 1, 1], [], []>} : vector<8x32xbf16>, vector<32x32xbf16>, vector<8x32xf32> -> vector<8x32xf32>
    %c0_5 = arith.constant 0 : index
    %c0_6 = arith.constant 0 : index
    %8 = vector.load %arg6[%c0_5, %c0_6] : memref<1x32xf32, #tpu.memory_space<vmem>>, vector<1x32xf32>
    %9 = vector.broadcast %8 : vector<1x32xf32> to vector<8x32xf32>
    %10 = arith.addf %7, %9 : vector<8x32xf32>
    %cst_7 = arith.constant 0.353553385 : f32
    %11 = vector.broadcast %cst_7 : f32 to vector<8x32xf32>
    %12 = arith.mulf %10, %11 : vector<8x32xf32>
    %13 = arith.truncf %12 : vector<8x32xf32> to vector<8x32xbf16>
    %c0_8 = arith.constant 0 : index
    %c0_9 = arith.constant 0 : index
    %14 = vector.load %arg17[%c0_8, %c0_9] : memref<16x32xbf16, #tpu.memory_space<vmem>>, vector<16x32xbf16>
    %c0_10 = arith.constant 0 : index
    %c0_11 = arith.constant 0 : index
    %15 = vector.load %arg18[%c0_10, %c0_11] : memref<16x32xbf16, #tpu.memory_space<vmem>>, vector<16x32xbf16>
    %16 = vector.extract_strided_slice %13 {offsets = [0, 0], sizes = [8, 8], strides = [1, 1]} : vector<8x32xbf16> to vector<8x8xbf16>
    %17 = vector.extract_strided_slice %14 {offsets = [0, 0], sizes = [16, 8], strides = [1, 1]} : vector<16x32xbf16> to vector<16x8xbf16>
    %18 = vector.extract_strided_slice %15 {offsets = [0, 0], sizes = [16, 8], strides = [1, 1]} : vector<16x32xbf16> to vector<16x8xbf16>
    %cst_12 = arith.constant dense<0.000000e+00> : vector<8x16xf32>
    %19 = tpu.matmul %16, %17, %cst_12 {dimension_numbers = #tpu.dot_dimension_numbers<[1], [1], [0], [0], [0, 0, 1, 0], [], []>} : vector<8x8xbf16>, vector<16x8xbf16>, vector<8x16xf32> -> vector<8x16xf32>
    %cst_13 = arith.constant dense<0xFF800000> : vector<8xf32>
    %20 = vector.multi_reduction <maximumf>, %19, %cst_13 [1] : vector<8x16xf32> to vector<8xf32>
    %21 = vector.shape_cast %20 : vector<8xf32> to vector<8x1xf32>
    %22 = vector.broadcast %21 : vector<8x1xf32> to vector<8x16xf32>
    %23 = arith.subf %19, %22 : vector<8x16xf32>
    %24 = math.exp %23 : vector<8x16xf32>
    %cst_14 = arith.constant dense<0.000000e+00> : vector<8xf32>
    %25 = vector.multi_reduction <add>, %24, %cst_14 [1] : vector<8x16xf32> to vector<8xf32>
    %26 = vector.shape_cast %25 : vector<8xf32> to vector<8x1xf32>
    %27 = tpu.reciprocal %26 : vector<8x1xf32> -> vector<8x1xf32>
    %28 = vector.broadcast %27 : vector<8x1xf32> to vector<8x16xf32>
    %29 = arith.mulf %24, %28 : vector<8x16xf32>
    %c0_15 = arith.constant 0 : index
    %c0_16 = arith.constant 0 : index
    %c0_17 = arith.constant 0 : index
    %30 = vector.load %arg16[%c0_15, %c0_16, %c0_17] : memref<1x8x64xf32, #tpu.memory_space<vmem>>, vector<1x8x16xf32>
    %31 = vector.shape_cast %30 : vector<1x8x16xf32> to vector<8x16xf32>
    %32 = vector.shape_cast %29 : vector<8x16xf32> to vector<1x8x16xf32>
    tpu.vector_store %arg16[%c0_15, %c0_16, %c0_17], %32 {strides = array<i32>} : memref<1x8x64xf32, #tpu.memory_space<vmem>>, vector<1x8x16xf32>,
    %33 = arith.truncf %29 : vector<8x16xf32> to vector<8x16xbf16>
    %cst_18 = arith.constant dense<0.000000e+00> : vector<8x8xf32>
    %34 = tpu.matmul %33, %18, %cst_18 {dimension_numbers = #tpu.dot_dimension_numbers<[1], [0], [0], [1], [0, 0, 1, 1], [], []>} : vector<8x16xbf16>, vector<16x8xbf16>, vector<8x8xf32> -> vector<8x8xf32>
    %35 = arith.truncf %34 : vector<8x8xf32> to vector<8x8xbf16>
    %c0_19 = arith.constant 0 : index
    %c0_20 = arith.constant 0 : index
    %c0_21 = arith.constant 0 : index
    %36 = vector.load %arg11[%c0_19, %c0_20, %c0_21] : memref<4x8x32xbf16, #tpu.memory_space<vmem>>, vector<1x8x32xbf16>
    %37 = vector.shape_cast %36 : vector<1x8x32xbf16> to vector<8x32xbf16>
    %cst_22 = arith.constant dense<0.000000e+00> : vector<8x32xf32>
    %38 = tpu.matmul %35, %37, %cst_22 {dimension_numbers = #tpu.dot_dimension_numbers<[1], [0], [0], [1], [0, 0, 1, 1], [], []>} : vector<8x8xbf16>, vector<8x32xbf16>, vector<8x32xf32> -> vector<8x32xf32>
    %39 = vector.extract_strided_slice %13 {offsets = [0, 8], sizes = [8, 8], strides = [1, 1]} : vector<8x32xbf16> to vector<8x8xbf16>
    %40 = vector.extract_strided_slice %14 {offsets = [0, 8], sizes = [16, 8], strides = [1, 1]} : vector<16x32xbf16> to vector<16x8xbf16>
    %41 = vector.extract_strided_slice %15 {offsets = [0, 8], sizes = [16, 8], strides = [1, 1]} : vector<16x32xbf16> to vector<16x8xbf16>
    %cst_23 = arith.constant dense<0.000000e+00> : vector<8x16xf32>
    %42 = tpu.matmul %39, %40, %cst_23 {dimension_numbers = #tpu.dot_dimension_numbers<[1], [1], [0], [0], [0, 0, 1, 0], [], []>} : vector<8x8xbf16>, vector<16x8xbf16>, vector<8x16xf32> -> vector<8x16xf32>
    %cst_24 = arith.constant dense<0xFF800000> : vector<8xf32>
    %43 = vector.multi_reduction <maximumf>, %42, %cst_24 [1] : vector<8x16xf32> to vector<8xf32>
    %44 = vector.shape_cast %43 : vector<8xf32> to vector<8x1xf32>
    %45 = vector.broadcast %44 : vector<8x1xf32> to vector<8x16xf32>
    %46 = arith.subf %42, %45 : vector<8x16xf32>
    %47 = math.exp %46 : vector<8x16xf32>
    %cst_25 = arith.constant dense<0.000000e+00> : vector<8xf32>
    %48 = vector.multi_reduction <add>, %47, %cst_25 [1] : vector<8x16xf32> to vector<8xf32>
    %49 = vector.shape_cast %48 : vector<8xf32> to vector<8x1xf32>
    %50 = tpu.reciprocal %49 : vector<8x1xf32> -> vector<8x1xf32>
    %51 = vector.broadcast %50 : vector<8x1xf32> to vector<8x16xf32>
    %52 = arith.mulf %47, %51 : vector<8x16xf32>
    %c0_26 = arith.constant 0 : index
    %c0_27 = arith.constant 0 : index
    %c16 = arith.constant 16 : index
    %53 = vector.load %arg16[%c0_26, %c0_27, %c16] : memref<1x8x64xf32, #tpu.memory_space<vmem>>, vector<1x8x16xf32>
    %54 = vector.shape_cast %53 : vector<1x8x16xf32> to vector<8x16xf32>
    %55 = vector.shape_cast %52 : vector<8x16xf32> to vector<1x8x16xf32>
    tpu.vector_store %arg16[%c0_26, %c0_27, %c16], %55 {strides = array<i32>} : memref<1x8x64xf32, #tpu.memory_space<vmem>>, vector<1x8x16xf32>,
    %56 = arith.truncf %52 : vector<8x16xf32> to vector<8x16xbf16>
    %cst_28 = arith.constant dense<0.000000e+00> : vector<8x8xf32>
    %57 = tpu.matmul %56, %41, %cst_28 {dimension_numbers = #tpu.dot_dimension_numbers<[1], [0], [0], [1], [0, 0, 1, 1], [], []>} : vector<8x16xbf16>, vector<16x8xbf16>, vector<8x8xf32> -> vector<8x8xf32>
    %58 = arith.truncf %57 : vector<8x8xf32> to vector<8x8xbf16>
    %c1 = arith.constant 1 : index
    %c0_29 = arith.constant 0 : index
    %c0_30 = arith.constant 0 : index
    %59 = vector.load %arg11[%c1, %c0_29, %c0_30] : memref<4x8x32xbf16, #tpu.memory_space<vmem>>, vector<1x8x32xbf16>
    %60 = vector.shape_cast %59 : vector<1x8x32xbf16> to vector<8x32xbf16>
    %cst_31 = arith.constant dense<0.000000e+00> : vector<8x32xf32>
    %61 = tpu.matmul %58, %60, %cst_31 {dimension_numbers = #tpu.dot_dimension_numbers<[1], [0], [0], [1], [0, 0, 1, 1], [], []>} : vector<8x8xbf16>, vector<8x32xbf16>, vector<8x32xf32> -> vector<8x32xf32>
    %62 = arith.addf %38, %61 : vector<8x32xf32>
    %63 = vector.extract_strided_slice %13 {offsets = [0, 16], sizes = [8, 8], strides = [1, 1]} : vector<8x32xbf16> to vector<8x8xbf16>
    %64 = vector.extract_strided_slice %14 {offsets = [0, 16], sizes = [16, 8], strides = [1, 1]} : vector<16x32xbf16> to vector<16x8xbf16>
    %65 = vector.extract_strided_slice %15 {offsets = [0, 16], sizes = [16, 8], strides = [1, 1]} : vector<16x32xbf16> to vector<16x8xbf16>
    %cst_32 = arith.constant dense<0.000000e+00> : vector<8x16xf32>
    %66 = tpu.matmul %63, %64, %cst_32 {dimension_numbers = #tpu.dot_dimension_numbers<[1], [1], [0], [0], [0, 0, 1, 0], [], []>} : vector<8x8xbf16>, vector<16x8xbf16>, vector<8x16xf32> -> vector<8x16xf32>
    %cst_33 = arith.constant dense<0xFF800000> : vector<8xf32>
    %67 = vector.multi_reduction <maximumf>, %66, %cst_33 [1] : vector<8x16xf32> to vector<8xf32>
    %68 = vector.shape_cast %67 : vector<8xf32> to vector<8x1xf32>
    %69 = vector.broadcast %68 : vector<8x1xf32> to vector<8x16xf32>
    %70 = arith.subf %66, %69 : vector<8x16xf32>
    %71 = math.exp %70 : vector<8x16xf32>
    %cst_34 = arith.constant dense<0.000000e+00> : vector<8xf32>
    %72 = vector.multi_reduction <add>, %71, %cst_34 [1] : vector<8x16xf32> to vector<8xf32>
    %73 = vector.shape_cast %72 : vector<8xf32> to vector<8x1xf32>
    %74 = tpu.reciprocal %73 : vector<8x1xf32> -> vector<8x1xf32>
    %75 = vector.broadcast %74 : vector<8x1xf32> to vector<8x16xf32>
    %76 = arith.mulf %71, %75 : vector<8x16xf32>
    %c0_35 = arith.constant 0 : index
    %c0_36 = arith.constant 0 : index
    %c32 = arith.constant 32 : index
    %77 = vector.load %arg16[%c0_35, %c0_36, %c32] : memref<1x8x64xf32, #tpu.memory_space<vmem>>, vector<1x8x16xf32>
    %78 = vector.shape_cast %77 : vector<1x8x16xf32> to vector<8x16xf32>
    %79 = vector.shape_cast %76 : vector<8x16xf32> to vector<1x8x16xf32>
    tpu.vector_store %arg16[%c0_35, %c0_36, %c32], %79 {strides = array<i32>} : memref<1x8x64xf32, #tpu.memory_space<vmem>>, vector<1x8x16xf32>,
    %80 = arith.truncf %76 : vector<8x16xf32> to vector<8x16xbf16>
    %cst_37 = arith.constant dense<0.000000e+00> : vector<8x8xf32>
    %81 = tpu.matmul %80, %65, %cst_37 {dimension_numbers = #tpu.dot_dimension_numbers<[1], [0], [0], [1], [0, 0, 1, 1], [], []>} : vector<8x16xbf16>, vector<16x8xbf16>, vector<8x8xf32> -> vector<8x8xf32>
    %82 = arith.truncf %81 : vector<8x8xf32> to vector<8x8xbf16>
    %c2 = arith.constant 2 : index
    %c0_38 = arith.constant 0 : index
    %c0_39 = arith.constant 0 : index
    %83 = vector.load %arg11[%c2, %c0_38, %c0_39] : memref<4x8x32xbf16, #tpu.memory_space<vmem>>, vector<1x8x32xbf16>
    %84 = vector.shape_cast %83 : vector<1x8x32xbf16> to vector<8x32xbf16>
    %cst_40 = arith.constant dense<0.000000e+00> : vector<8x32xf32>
    %85 = tpu.matmul %82, %84, %cst_40 {dimension_numbers = #tpu.dot_dimension_numbers<[1], [0], [0], [1], [0, 0, 1, 1], [], []>} : vector<8x8xbf16>, vector<8x32xbf16>, vector<8x32xf32> -> vector<8x32xf32>
    %86 = arith.addf %62, %85 : vector<8x32xf32>
    %87 = vector.extract_strided_slice %13 {offsets = [0, 24], sizes = [8, 8], strides = [1, 1]} : vector<8x32xbf16> to vector<8x8xbf16>
    %88 = vector.extract_strided_slice %14 {offsets = [0, 24], sizes = [16, 8], strides = [1, 1]} : vector<16x32xbf16> to vector<16x8xbf16>
    %89 = vector.extract_strided_slice %15 {offsets = [0, 24], sizes = [16, 8], strides = [1, 1]} : vector<16x32xbf16> to vector<16x8xbf16>
    %cst_41 = arith.constant dense<0.000000e+00> : vector<8x16xf32>
    %90 = tpu.matmul %87, %88, %cst_41 {dimension_numbers = #tpu.dot_dimension_numbers<[1], [1], [0], [0], [0, 0, 1, 0], [], []>} : vector<8x8xbf16>, vector<16x8xbf16>, vector<8x16xf32> -> vector<8x16xf32>
    %cst_42 = arith.constant dense<0xFF800000> : vector<8xf32>
    %91 = vector.multi_reduction <maximumf>, %90, %cst_42 [1] : vector<8x16xf32> to vector<8xf32>
    %92 = vector.shape_cast %91 : vector<8xf32> to vector<8x1xf32>
    %93 = vector.broadcast %92 : vector<8x1xf32> to vector<8x16xf32>
    %94 = arith.subf %90, %93 : vector<8x16xf32>
    %95 = math.exp %94 : vector<8x16xf32>
    %cst_43 = arith.constant dense<0.000000e+00> : vector<8xf32>
    %96 = vector.multi_reduction <add>, %95, %cst_43 [1] : vector<8x16xf32> to vector<8xf32>
    %97 = vector.shape_cast %96 : vector<8xf32> to vector<8x1xf32>
    %98 = tpu.reciprocal %97 : vector<8x1xf32> -> vector<8x1xf32>
    %99 = vector.broadcast %98 : vector<8x1xf32> to vector<8x16xf32>
    %100 = arith.mulf %95, %99 : vector<8x16xf32>
    %c0_44 = arith.constant 0 : index
    %c0_45 = arith.constant 0 : index
    %c48 = arith.constant 48 : index
    %101 = vector.load %arg16[%c0_44, %c0_45, %c48] : memref<1x8x64xf32, #tpu.memory_space<vmem>>, vector<1x8x16xf32>
    %102 = vector.shape_cast %101 : vector<1x8x16xf32> to vector<8x16xf32>
    %103 = vector.shape_cast %100 : vector<8x16xf32> to vector<1x8x16xf32>
    tpu.vector_store %arg16[%c0_44, %c0_45, %c48], %103 {strides = array<i32>} : memref<1x8x64xf32, #tpu.memory_space<vmem>>, vector<1x8x16xf32>,
    %104 = arith.truncf %100 : vector<8x16xf32> to vector<8x16xbf16>
    %cst_46 = arith.constant dense<0.000000e+00> : vector<8x8xf32>
    %105 = tpu.matmul %104, %89, %cst_46 {dimension_numbers = #tpu.dot_dimension_numbers<[1], [0], [0], [1], [0, 0, 1, 1], [], []>} : vector<8x16xbf16>, vector<16x8xbf16>, vector<8x8xf32> -> vector<8x8xf32>
    %106 = arith.truncf %105 : vector<8x8xf32> to vector<8x8xbf16>
    %c3 = arith.constant 3 : index
    %c0_47 = arith.constant 0 : index
    %c0_48 = arith.constant 0 : index
    %107 = vector.load %arg11[%c3, %c0_47, %c0_48] : memref<4x8x32xbf16, #tpu.memory_space<vmem>>, vector<1x8x32xbf16>
    %108 = vector.shape_cast %107 : vector<1x8x32xbf16> to vector<8x32xbf16>
    %cst_49 = arith.constant dense<0.000000e+00> : vector<8x32xf32>
    %109 = tpu.matmul %106, %108, %cst_49 {dimension_numbers = #tpu.dot_dimension_numbers<[1], [0], [0], [1], [0, 0, 1, 1], [], []>} : vector<8x8xbf16>, vector<8x32xbf16>, vector<8x32xf32> -> vector<8x32xf32>
    %110 = arith.addf %86, %109 : vector<8x32xf32>
    %c0_50 = arith.constant 0 : index
    %c0_51 = arith.constant 0 : index
    %111 = vector.load %arg12[%c0_50, %c0_51] : memref<1x32xf32, #tpu.memory_space<vmem>>, vector<1x32xf32>
    %112 = vector.broadcast %111 : vector<1x32xf32> to vector<8x32xf32>
    %113 = arith.addf %110, %112 : vector<8x32xf32>
    %c0_52 = arith.constant 0 : index
    %c0_53 = arith.constant 0 : index
    %c0_54 = arith.constant 0 : index
    %114 = vector.load %arg15[%c0_52, %c0_53, %c0_54] : memref<1x8x32xf32, #tpu.memory_space<vmem>>, vector<1x8x32xf32>
    %115 = vector.shape_cast %114 : vector<1x8x32xf32> to vector<8x32xf32>
    %116 = vector.shape_cast %113 : vector<8x32xf32> to vector<1x8x32xf32>
    tpu.vector_store %arg15[%c0_52, %c0_53, %c0_54], %116 {strides = array<i32>} : memref<1x8x32xf32, #tpu.memory_space<vmem>>, vector<1x8x32xf32>,
    return
  }
  func.func @transform_0(%arg0: i32, %arg1: i32) -> (i32, i32, i32) {
    %c0_i32 = arith.constant 0 : i32
    %c0_i32_0 = arith.constant 0 : i32
    return %arg0, %arg1, %c0_i32 : i32, i32, i32
  }
  func.func @transform_1(%arg0: i32, %arg1: i32) -> (i32, i32, i32) {
    %c0_i32 = arith.constant 0 : i32
    %c0_i32_0 = arith.constant 0 : i32
    %c0_i32_1 = arith.constant 0 : i32
    return %arg0, %c0_i32, %c0_i32_0 : i32, i32, i32
  }
  func.func @transform_2(%arg0: i32, %arg1: i32) -> (i32, i32, i32) {
    %c0_i32 = arith.constant 0 : i32
    %c0_i32_0 = arith.constant 0 : i32
    %c0_i32_1 = arith.constant 0 : i32
    return %arg0, %c0_i32, %c0_i32_0 : i32, i32, i32
  }
  func.func @transform_3(%arg0: i32, %arg1: i32) -> (i32, i32) {
    %c0_i32 = arith.constant 0 : i32
    %c0_i32_0 = arith.constant 0 : i32
    %c0_i32_1 = arith.constant 0 : i32
    return %c0_i32, %c0_i32_0 : i32, i32
  }
  func.func @transform_4(%arg0: i32, %arg1: i32) -> (i32, i32) {
    %c0_i32 = arith.constant 0 : i32
    %c0_i32_0 = arith.constant 0 : i32
    %c0_i32_1 = arith.constant 0 : i32
    return %c0_i32, %c0_i32_0 : i32, i32
  }
  func.func @transform_5(%arg0: i32, %arg1: i32) -> (i32, i32) {
    %c0_i32 = arith.constant 0 : i32
    %c0_i32_0 = arith.constant 0 : i32
    %c0_i32_1 = arith.constant 0 : i32
    return %c0_i32, %c0_i32_0 : i32, i32
  }
  func.func @transform_6(%arg0: i32, %arg1: i32) -> (i32, i32) {
    %c0_i32 = arith.constant 0 : i32
    %c0_i32_0 = arith.constant 0 : i32
    %c0_i32_1 = arith.constant 0 : i32
    return %c0_i32, %c0_i32_0 : i32, i32
  }
  func.func @transform_7(%arg0: i32, %arg1: i32) -> (i32, i32) {
    %c0_i32 = arith.constant 0 : i32
    %c0_i32_0 = arith.constant 0 : i32
    %c0_i32_1 = arith.constant 0 : i32
    return %c0_i32, %c0_i32_0 : i32, i32
  }
  func.func @transform_8(%arg0: i32, %arg1: i32) -> (i32, i32) {
    %c0_i32 = arith.constant 0 : i32
    %c0_i32_0 = arith.constant 0 : i32
    %c0_i32_1 = arith.constant 0 : i32
    return %c0_i32, %c0_i32_0 : i32, i32
  }
  func.func @transform_9(%arg0: i32, %arg1: i32) -> (i32, i32, i32) {
    %c0_i32 = arith.constant 0 : i32
    %c0_i32_0 = arith.constant 0 : i32
    %c0_i32_1 = arith.constant 0 : i32
    %c0_i32_2 = arith.constant 0 : i32
    return %c0_i32, %c0_i32_0, %c0_i32_1 : i32, i32, i32
  }
  func.func @transform_10(%arg0: i32, %arg1: i32) -> (i32, i32) {
    %c0_i32 = arith.constant 0 : i32
    %c0_i32_0 = arith.constant 0 : i32
    %c0_i32_1 = arith.constant 0 : i32
    return %c0_i32, %c0_i32_0 : i32, i32
  }
  func.func @transform_11(%arg0: i32, %arg1: i32) -> (i32, i32) {
    %c0_i32 = arith.constant 0 : i32
    %c0_i32_0 = arith.constant 0 : i32
    %c0_i32_1 = arith.constant 0 : i32
    return %c0_i32, %c0_i32_0 : i32, i32
  }
  func.func @transform_12(%arg0: i32, %arg1: i32) -> (i32, i32) {
    %c0_i32 = arith.constant 0 : i32
    %c0_i32_0 = arith.constant 0 : i32
    %c0_i32_1 = arith.constant 0 : i32
    return %c0_i32, %c0_i32_0 : i32, i32
  }
  func.func @transform_13(%arg0: i32, %arg1: i32) -> (i32, i32, i32) {
    %c0_i32 = arith.constant 0 : i32
    %c0_i32_0 = arith.constant 0 : i32
    return %arg0, %arg1, %c0_i32 : i32, i32, i32
  }
  func.func @transform_14(%arg0: i32, %arg1: i32) -> (i32, i32, i32) {
    %c0_i32 = arith.constant 0 : i32
    %c0_i32_0 = arith.constant 0 : i32
    return %arg0, %arg1, %c0_i32 : i32, i32, i32
  }
}

module attributes {stable_mosaic.version = 11 : i64} {
  func.func @_fused_sdpa_mem_kernel(%arg0: i32, %arg1: i32, %arg2: memref<1x8x32xf32, #tpu.memory_space<vmem>>, %arg3: memref<1x8x32xf32, #tpu.memory_space<vmem>>, %arg4: memref<1x8x32xf32, #tpu.memory_space<vmem>>, %arg5: memref<32x32xbf16, #tpu.memory_space<vmem>>, %arg6: memref<1x32xf32, #tpu.memory_space<vmem>>, %arg7: memref<32x32xbf16, #tpu.memory_space<vmem>>, %arg8: memref<1x32xf32, #tpu.memory_space<vmem>>, %arg9: memref<32x32xbf16, #tpu.memory_space<vmem>>, %arg10: memref<1x32xf32, #tpu.memory_space<vmem>>, %arg11: memref<4x8x32xbf16, #tpu.memory_space<vmem>>, %arg12: memref<1x32xf32, #tpu.memory_space<vmem>>, %arg13: memref<8x32xbf16, #tpu.memory_space<vmem>>, %arg14: memref<8x32xbf16, #tpu.memory_space<vmem>>, %arg15: memref<1x8x32xf32, #tpu.memory_space<vmem>>, %arg16: memref<1x8x64xf32, #tpu.memory_space<vmem>>, %arg17: memref<16x32xbf16, #tpu.memory_space<vmem>>, %arg18: memref<16x32xbf16, #tpu.memory_space<vmem>>) attributes {dimension_semantics = [#tpu.dimension_semantics<parallel>, #tpu.dimension_semantics<arbitrary>], iteration_bounds = array<i64: 2, 1>, scalar_prefetch = 0 : i64, scratch_operands = 2 : i64, tpu.core_type = #tpu.core_type<tc>, window_params = [{transform_indices = @transform_0, window_bounds = array<i64: 1, 8, 32>}, {transform_indices = @transform_1, window_bounds = array<i64: 1, 8, 32>}, {transform_indices = @transform_2, window_bounds = array<i64: 1, 8, 32>}, {pipeline_mode = #tpu.pipeline_mode<synchronous>, transform_indices = @transform_3, window_bounds = array<i64: 32, 32>}, {pipeline_mode = #tpu.pipeline_mode<synchronous>, transform_indices = @transform_4, window_bounds = array<i64: 1, 32>}, {pipeline_mode = #tpu.pipeline_mode<synchronous>, transform_indices = @transform_5, window_bounds = array<i64: 32, 32>}, {pipeline_mode = #tpu.pipeline_mode<synchronous>, transform_indices = @transform_6, window_bounds = array<i64: 1, 32>}, {pipeline_mode = #tpu.pipeline_mode<synchronous>, transform_indices = @transform_7, window_bounds = array<i64: 32, 32>}, {pipeline_mode = #tpu.pipeline_mode<synchronous>, transform_indices = @transform_8, window_bounds = array<i64: 1, 32>}, {pipeline_mode = #tpu.pipeline_mode<synchronous>, transform_indices = @transform_9, window_bounds = array<i64: 4, 8, 32>}, {pipeline_mode = #tpu.pipeline_mode<synchronous>, transform_indices = @transform_10, window_bounds = array<i64: 1, 32>}, {pipeline_mode = #tpu.pipeline_mode<synchronous>, transform_indices = @transform_11, window_bounds = array<i64: 8, 32>}, {pipeline_mode = #tpu.pipeline_mode<synchronous>, transform_indices = @transform_12, window_bounds = array<i64: 8, 32>}, {transform_indices = @transform_13, window_bounds = array<i64: 1, 8, 32>}, {transform_indices = @transform_14, window_bounds = array<i64: 1, 8, 64>}]} {
    %c0_i32 = arith.constant 0 : i32
    %0 = arith.cmpi eq, %arg1, %c0_i32 : i32
    %1 = arith.extui %0 : i1 to i32
    %c0_i32_0 = arith.constant 0 : i32
    %2 = arith.cmpi ne, %1, %c0_i32_0 : i32
    scf.if %2 {
      %c0_55 = arith.constant 0 : index
      %c0_56 = arith.constant 0 : index
      %c0_57 = arith.constant 0 : index
      %117 = vector.load %arg3[%c0_55, %c0_56, %c0_57] : memref<1x8x32xf32, #tpu.memory_space<vmem>>, vector<1x8x32xf32>
      %118 = vector.shape_cast %117 : vector<1x8x32xf32> to vector<8x32xf32>
      %119 = arith.truncf %118 : vector<8x32xf32> to vector<8x32xbf16>
      %c0_58 = arith.constant 0 : index
      %c0_59 = arith.constant 0 : index
      %c0_60 = arith.constant 0 : index
      %120 = vector.load %arg4[%c0_58, %c0_59, %c0_60] : memref<1x8x32xf32, #tpu.memory_space<vmem>>, vector<1x8x32xf32>
      %121 = vector.shape_cast %120 : vector<1x8x32xf32> to vector<8x32xf32>
      %122 = arith.truncf %121 : vector<8x32xf32> to vector<8x32xbf16>
      %c0_61 = arith.constant 0 : index
      %c0_62 = arith.constant 0 : index
      %123 = vector.load %arg7[%c0_61, %c0_62] : memref<32x32xbf16, #tpu.memory_space<vmem>>, vector<32x32xbf16>
      %cst_63 = arith.constant dense<0.000000e+00> : vector<8x32xf32>
      %124 = tpu.matmul %119, %123, %cst_63 {dimension_numbers = #tpu.dot_dimension_numbers<[1], [0], [0], [1], [0, 0, 1, 1], [], []>} : vector<8x32xbf16>, vector<32x32xbf16>, vector<8x32xf32> -> vector<8x32xf32>
      %c0_64 = arith.constant 0 : index
      %c0_65 = arith.constant 0 : index
      %125 = vector.load %arg8[%c0_64, %c0_65] : memref<1x32xf32, #tpu.memory_space<vmem>>, vector<1x32xf32>
      %126 = vector.broadcast %125 : vector<1x32xf32> to vector<8x32xf32>
      %127 = arith.addf %124, %126 : vector<8x32xf32>
      %c0_66 = arith.constant 0 : index
      %c0_67 = arith.constant 0 : index
      %128 = vector.load %arg9[%c0_66, %c0_67] : memref<32x32xbf16, #tpu.memory_space<vmem>>, vector<32x32xbf16>
      %cst_68 = arith.constant dense<0.000000e+00> : vector<8x32xf32>
      %129 = tpu.matmul %122, %128, %cst_68 {dimension_numbers = #tpu.dot_dimension_numbers<[1], [0], [0], [1], [0, 0, 1, 1], [], []>} : vector<8x32xbf16>, vector<32x32xbf16>, vector<8x32xf32> -> vector<8x32xf32>
      %c0_69 = arith.constant 0 : index
      %c0_70 = arith.constant 0 : index
      %130 = vector.load %arg10[%c0_69, %c0_70] : memref<1x32xf32, #tpu.memory_space<vmem>>, vector<1x32xf32>
      %131 = vector.broadcast %130 : vector<1x32xf32> to vector<8x32xf32>
      %132 = arith.addf %129, %131 : vector<8x32xf32>
      %133 = arith.truncf %127 : vector<8x32xf32> to vector<8x32xbf16>
      %c0_71 = arith.constant 0 : index
      %c0_72 = arith.constant 0 : index
      %134 = vector.load %arg17[%c0_71, %c0_72] : memref<16x32xbf16, #tpu.memory_space<vmem>>, vector<8x32xbf16>
      tpu.vector_store %arg17[%c0_71, %c0_72], %133 {strides = array<i32>} : memref<16x32xbf16, #tpu.memory_space<vmem>>, vector<8x32xbf16>,
      %c0_73 = arith.constant 0 : index
      %c0_74 = arith.constant 0 : index
      %135 = vector.load %arg13[%c0_73, %c0_74] : memref<8x32xbf16, #tpu.memory_space<vmem>>, vector<8x32xbf16>
      %c8 = arith.constant 8 : index
      %c0_75 = arith.constant 0 : index
      %136 = vector.load %arg17[%c8, %c0_75] : memref<16x32xbf16, #tpu.memory_space<vmem>>, vector<8x32xbf16>
      tpu.vector_store %arg17[%c8, %c0_75], %135 {strides = array<i32>} : memref<16x32xbf16, #tpu.memory_space<vmem>>, vector<8x32xbf16>,
      %137 = arith.truncf %132 : vector<8x32xf32> to vector<8x32xbf16>
      %c0_76 = arith.constant 0 : index
      %c0_77 = arith.constant 0 : index
      %138 = vector.load %arg18[%c0_76, %c0_77] : memref<16x32xbf16, #tpu.memory_space<vmem>>, vector<8x32xbf16>
      tpu.vector_store %arg18[%c0_76, %c0_77], %137 {strides = array<i32>} : memref<16x32xbf16, #tpu.memory_space<vmem>>, vector<8x32xbf16>,
      %c0_78 = arith.constant 0 : index
      %c0_79 = arith.constant 0 : index
      %139 = vector.load %arg14[%c0_78, %c0_79] : memref<8x32xbf16, #tpu.memory_space<vmem>>, vector<8x32xbf16>
      %c8_80 = arith.constant 8 : index
      %c0_81 = arith.constant 0 : index
      %140 = vector.load %arg18[%c8_80, %c0_81] : memref<16x32xbf16, #tpu.memory_space<vmem>>, vector<8x32xbf16>
      tpu.vector_store %arg18[%c8_80, %c0_81], %139 {strides = array<i32>} : memref<16x32xbf16, #tpu.memory_space<vmem>>, vector<8x32xbf16>,
    } else {
    }
    %c0 = arith.constant 0 : index
    %c0_1 = arith.constant 0 : index
    %c0_2 = arith.constant 0 : index
    %3 = vector.load %arg2[%c0, %c0_1, %c0_2] : memref<1x8x32xf32, #tpu.memory_space<vmem>>, vector<1x8x32xf32>
    %4 = vector.shape_cast %3 : vector<1x8x32xf32> to vector<8x32xf32>
    %5 = arith.truncf %4 : vector<8x32xf32> to vector<8x32xbf16>
    %c0_3 = arith.constant 0 : index
    %c0_4 = arith.constant 0 : index
    %6 = vector.load %arg5[%c0_3, %c0_4] : memref<32x32xbf16, #tpu.memory_space<vmem>>, vector<32x32xbf16>
    %cst = arith.constant dense<0.000000e+00> : vector<8x32xf32>
    %7 = tpu.matmul %5, %6, %cst {dimension_numbers = #tpu.dot_dimension_numbers<[1], [0], [0], [1], [0, 0, 1, 1], [], []>} : vector<8x32xbf16>, vector<32x32xbf16>, vector<8x32xf32> -> vector<8x32xf32>
    %c0_5 = arith.constant 0 : index
    %c0_6 = arith.constant 0 : index
    %8 = vector.load %arg6[%c0_5, %c0_6] : memref<1x32xf32, #tpu.memory_space<vmem>>, vector<1x32xf32>
    %9 = vector.broadcast %8 : vector<1x32xf32> to vector<8x32xf32>
    %10 = arith.addf %7, %9 : vector<8x32xf32>
    %cst_7 = arith.constant 0.353553385 : f32
    %11 = vector.broadcast %cst_7 : f32 to vector<8x32xf32>
    %12 = arith.mulf %10, %11 : vector<8x32xf32>
    %13 = arith.truncf %12 : vector<8x32xf32> to vector<8x32xbf16>
    %c0_8 = arith.constant 0 : index
    %c0_9 = arith.constant 0 : index
    %14 = vector.load %arg17[%c0_8, %c0_9] : memref<16x32xbf16, #tpu.memory_space<vmem>>, vector<16x32xbf16>
    %c0_10 = arith.constant 0 : index
    %c0_11 = arith.constant 0 : index
    %15 = vector.load %arg18[%c0_10, %c0_11] : memref<16x32xbf16, #tpu.memory_space<vmem>>, vector<16x32xbf16>
    %16 = vector.extract_strided_slice %13 {offsets = [0, 0], sizes = [8, 8], strides = [1, 1]} : vector<8x32xbf16> to vector<8x8xbf16>
    %17 = vector.extract_strided_slice %14 {offsets = [0, 0], sizes = [16, 8], strides = [1, 1]} : vector<16x32xbf16> to vector<16x8xbf16>
    %18 = vector.extract_strided_slice %15 {offsets = [0, 0], sizes = [16, 8], strides = [1, 1]} : vector<16x32xbf16> to vector<16x8xbf16>
    %cst_12 = arith.constant dense<0.000000e+00> : vector<8x16xf32>
    %19 = tpu.matmul %16, %17, %cst_12 {dimension_numbers = #tpu.dot_dimension_numbers<[1], [1], [0], [0], [0, 0, 1, 0], [], []>} : vector<8x8xbf16>, vector<16x8xbf16>, vector<8x16xf32> -> vector<8x16xf32>
    %cst_13 = arith.constant dense<0xFF800000> : vector<8xf32>
    %20 = vector.multi_reduction <maximumf>, %19, %cst_13 [1] : vector<8x16xf32> to vector<8xf32>
    %21 = vector.shape_cast %20 : vector<8xf32> to vector<8x1xf32>
    %22 = vector.broadcast %21 : vector<8x1xf32> to vector<8x16xf32>
    %23 = arith.subf %19, %22 : vector<8x16xf32>
    %24 = math.exp %23 : vector<8x16xf32>
    %cst_14 = arith.constant dense<0.000000e+00> : vector<8xf32>
    %25 = vector.multi_reduction <add>, %24, %cst_14 [1] : vector<8x16xf32> to vector<8xf32>
    %26 = vector.shape_cast %25 : vector<8xf32> to vector<8x1xf32>
    %27 = tpu.reciprocal %26 : vector<8x1xf32> -> vector<8x1xf32>
    %28 = vector.broadcast %27 : vector<8x1xf32> to vector<8x16xf32>
    %29 = arith.mulf %24, %28 : vector<8x16xf32>
    %c0_15 = arith.constant 0 : index
    %c0_16 = arith.constant 0 : index
    %c0_17 = arith.constant 0 : index
    %30 = vector.load %arg16[%c0_15, %c0_16, %c0_17] : memref<1x8x64xf32, #tpu.memory_space<vmem>>, vector<1x8x16xf32>
    %31 = vector.shape_cast %30 : vector<1x8x16xf32> to vector<8x16xf32>
    %32 = vector.shape_cast %29 : vector<8x16xf32> to vector<1x8x16xf32>
    tpu.vector_store %arg16[%c0_15, %c0_16, %c0_17], %32 {strides = array<i32>} : memref<1x8x64xf32, #tpu.memory_space<vmem>>, vector<1x8x16xf32>,
    %33 = arith.truncf %29 : vector<8x16xf32> to vector<8x16xbf16>
    %cst_18 = arith.constant dense<0.000000e+00> : vector<8x8xf32>
    %34 = tpu.matmul %33, %18, %cst_18 {dimension_numbers = #tpu.dot_dimension_numbers<[1], [0], [0], [1], [0, 0, 1, 1], [], []>} : vector<8x16xbf16>, vector<16x8xbf16>, vector<8x8xf32> -> vector<8x8xf32>
    %35 = arith.truncf %34 : vector<8x8xf32> to vector<8x8xbf16>
    %c0_19 = arith.constant 0 : index
    %c0_20 = arith.constant 0 : index
    %c0_21 = arith.constant 0 : index
    %36 = vector.load %arg11[%c0_19, %c0_20, %c0_21] : memref<4x8x32xbf16, #tpu.memory_space<vmem>>, vector<1x8x32xbf16>
    %37 = vector.shape_cast %36 : vector<1x8x32xbf16> to vector<8x32xbf16>
    %cst_22 = arith.constant dense<0.000000e+00> : vector<8x32xf32>
    %38 = tpu.matmul %35, %37, %cst_22 {dimension_numbers = #tpu.dot_dimension_numbers<[1], [0], [0], [1], [0, 0, 1, 1], [], []>} : vector<8x8xbf16>, vector<8x32xbf16>, vector<8x32xf32> -> vector<8x32xf32>
    %39 = vector.extract_strided_slice %13 {offsets = [0, 8], sizes = [8, 8], strides = [1, 1]} : vector<8x32xbf16> to vector<8x8xbf16>
    %40 = vector.extract_strided_slice %14 {offsets = [0, 8], sizes = [16, 8], strides = [1, 1]} : vector<16x32xbf16> to vector<16x8xbf16>
    %41 = vector.extract_strided_slice %15 {offsets = [0, 8], sizes = [16, 8], strides = [1, 1]} : vector<16x32xbf16> to vector<16x8xbf16>
    %cst_23 = arith.constant dense<0.000000e+00> : vector<8x16xf32>
    %42 = tpu.matmul %39, %40, %cst_23 {dimension_numbers = #tpu.dot_dimension_numbers<[1], [1], [0], [0], [0, 0, 1, 0], [], []>} : vector<8x8xbf16>, vector<16x8xbf16>, vector<8x16xf32> -> vector<8x16xf32>
    %cst_24 = arith.constant dense<0xFF800000> : vector<8xf32>
    %43 = vector.multi_reduction <maximumf>, %42, %cst_24 [1] : vector<8x16xf32> to vector<8xf32>
    %44 = vector.shape_cast %43 : vector<8xf32> to vector<8x1xf32>
    %45 = vector.broadcast %44 : vector<8x1xf32> to vector<8x16xf32>
    %46 = arith.subf %42, %45 : vector<8x16xf32>
    %47 = math.exp %46 : vector<8x16xf32>
    %cst_25 = arith.constant dense<0.000000e+00> : vector<8xf32>
    %48 = vector.multi_reduction <add>, %47, %cst_25 [1] : vector<8x16xf32> to vector<8xf32>
    %49 = vector.shape_cast %48 : vector<8xf32> to vector<8x1xf32>
    %50 = tpu.reciprocal %49 : vector<8x1xf32> -> vector<8x1xf32>
    %51 = vector.broadcast %50 : vector<8x1xf32> to vector<8x16xf32>
    %52 = arith.mulf %47, %51 : vector<8x16xf32>
    %c0_26 = arith.constant 0 : index
    %c0_27 = arith.constant 0 : index
    %c16 = arith.constant 16 : index
    %53 = vector.load %arg16[%c0_26, %c0_27, %c16] : memref<1x8x64xf32, #tpu.memory_space<vmem>>, vector<1x8x16xf32>
    %54 = vector.shape_cast %53 : vector<1x8x16xf32> to vector<8x16xf32>
    %55 = vector.shape_cast %52 : vector<8x16xf32> to vector<1x8x16xf32>
    tpu.vector_store %arg16[%c0_26, %c0_27, %c16], %55 {strides = array<i32>} : memref<1x8x64xf32, #tpu.memory_space<vmem>>, vector<1x8x16xf32>,
    %56 = arith.truncf %52 : vector<8x16xf32> to vector<8x16xbf16>
    %cst_28 = arith.constant dense<0.000000e+00> : vector<8x8xf32>
    %57 = tpu.matmul %56, %41, %cst_28 {dimension_numbers = #tpu.dot_dimension_numbers<[1], [0], [0], [1], [0, 0, 1, 1], [], []>} : vector<8x16xbf16>, vector<16x8xbf16>, vector<8x8xf32> -> vector<8x8xf32>
    %58 = arith.truncf %57 : vector<8x8xf32> to vector<8x8xbf16>
    %c1 = arith.constant 1 : index
    %c0_29 = arith.constant 0 : index
    %c0_30 = arith.constant 0 : index
    %59 = vector.load %arg11[%c1, %c0_29, %c0_30] : memref<4x8x32xbf16, #tpu.memory_space<vmem>>, vector<1x8x32xbf16>
    %60 = vector.shape_cast %59 : vector<1x8x32xbf16> to vector<8x32xbf16>
    %cst_31 = arith.constant dense<0.000000e+00> : vector<8x32xf32>
    %61 = tpu.matmul %58, %60, %cst_31 {dimension_numbers = #tpu.dot_dimension_numbers<[1], [0], [0], [1], [0, 0, 1, 1], [], []>} : vector<8x8xbf16>, vector<8x32xbf16>, vector<8x32xf32> -> vector<8x32xf32>
    %62 = arith.addf %38, %61 : vector<8x32xf32>
    %63 = vector.extract_strided_slice %13 {offsets = [0, 16], sizes = [8, 8], strides = [1, 1]} : vector<8x32xbf16> to vector<8x8xbf16>
    %64 = vector.extract_strided_slice %14 {offsets = [0, 16], sizes = [16, 8], strides = [1, 1]} : vector<16x32xbf16> to vector<16x8xbf16>
    %65 = vector.extract_strided_slice %15 {offsets = [0, 16], sizes = [16, 8], strides = [1, 1]} : vector<16x32xbf16> to vector<16x8xbf16>
    %cst_32 = arith.constant dense<0.000000e+00> : vector<8x16xf32>
    %66 = tpu.matmul %63, %64, %cst_32 {dimension_numbers = #tpu.dot_dimension_numbers<[1], [1], [0], [0], [0, 0, 1, 0], [], []>} : vector<8x8xbf16>, vector<16x8xbf16>, vector<8x16xf32> -> vector<8x16xf32>
    %cst_33 = arith.constant dense<0xFF800000> : vector<8xf32>
    %67 = vector.multi_reduction <maximumf>, %66, %cst_33 [1] : vector<8x16xf32> to vector<8xf32>
    %68 = vector.shape_cast %67 : vector<8xf32> to vector<8x1xf32>
    %69 = vector.broadcast %68 : vector<8x1xf32> to vector<8x16xf32>
    %70 = arith.subf %66, %69 : vector<8x16xf32>
    %71 = math.exp %70 : vector<8x16xf32>
    %cst_34 = arith.constant dense<0.000000e+00> : vector<8xf32>
    %72 = vector.multi_reduction <add>, %71, %cst_34 [1] : vector<8x16xf32> to vector<8xf32>
    %73 = vector.shape_cast %72 : vector<8xf32> to vector<8x1xf32>
    %74 = tpu.reciprocal %73 : vector<8x1xf32> -> vector<8x1xf32>
    %75 = vector.broadcast %74 : vector<8x1xf32> to vector<8x16xf32>
    %76 = arith.mulf %71, %75 : vector<8x16xf32>
    %c0_35 = arith.constant 0 : index
    %c0_36 = arith.constant 0 : index
    %c32 = arith.constant 32 : index
    %77 = vector.load %arg16[%c0_35, %c0_36, %c32] : memref<1x8x64xf32, #tpu.memory_space<vmem>>, vector<1x8x16xf32>
    %78 = vector.shape_cast %77 : vector<1x8x16xf32> to vector<8x16xf32>
    %79 = vector.shape_cast %76 : vector<8x16xf32> to vector<1x8x16xf32>
    tpu.vector_store %arg16[%c0_35, %c0_36, %c32], %79 {strides = array<i32>} : memref<1x8x64xf32, #tpu.memory_space<vmem>>, vector<1x8x16xf32>,
    %80 = arith.truncf %76 : vector<8x16xf32> to vector<8x16xbf16>
    %cst_37 = arith.constant dense<0.000000e+00> : vector<8x8xf32>
    %81 = tpu.matmul %80, %65, %cst_37 {dimension_numbers = #tpu.dot_dimension_numbers<[1], [0], [0], [1], [0, 0, 1, 1], [], []>} : vector<8x16xbf16>, vector<16x8xbf16>, vector<8x8xf32> -> vector<8x8xf32>
    %82 = arith.truncf %81 : vector<8x8xf32> to vector<8x8xbf16>
    %c2 = arith.constant 2 : index
    %c0_38 = arith.constant 0 : index
    %c0_39 = arith.constant 0 : index
    %83 = vector.load %arg11[%c2, %c0_38, %c0_39] : memref<4x8x32xbf16, #tpu.memory_space<vmem>>, vector<1x8x32xbf16>
    %84 = vector.shape_cast %83 : vector<1x8x32xbf16> to vector<8x32xbf16>
    %cst_40 = arith.constant dense<0.000000e+00> : vector<8x32xf32>
    %85 = tpu.matmul %82, %84, %cst_40 {dimension_numbers = #tpu.dot_dimension_numbers<[1], [0], [0], [1], [0, 0, 1, 1], [], []>} : vector<8x8xbf16>, vector<8x32xbf16>, vector<8x32xf32> -> vector<8x32xf32>
    %86 = arith.addf %62, %85 : vector<8x32xf32>
    %87 = vector.extract_strided_slice %13 {offsets = [0, 24], sizes = [8, 8], strides = [1, 1]} : vector<8x32xbf16> to vector<8x8xbf16>
    %88 = vector.extract_strided_slice %14 {offsets = [0, 24], sizes = [16, 8], strides = [1, 1]} : vector<16x32xbf16> to vector<16x8xbf16>
    %89 = vector.extract_strided_slice %15 {offsets = [0, 24], sizes = [16, 8], strides = [1, 1]} : vector<16x32xbf16> to vector<16x8xbf16>
    %cst_41 = arith.constant dense<0.000000e+00> : vector<8x16xf32>
    %90 = tpu.matmul %87, %88, %cst_41 {dimension_numbers = #tpu.dot_dimension_numbers<[1], [1], [0], [0], [0, 0, 1, 0], [], []>} : vector<8x8xbf16>, vector<16x8xbf16>, vector<8x16xf32> -> vector<8x16xf32>
    %cst_42 = arith.constant dense<0xFF800000> : vector<8xf32>
    %91 = vector.multi_reduction <maximumf>, %90, %cst_42 [1] : vector<8x16xf32> to vector<8xf32>
    %92 = vector.shape_cast %91 : vector<8xf32> to vector<8x1xf32>
    %93 = vector.broadcast %92 : vector<8x1xf32> to vector<8x16xf32>
    %94 = arith.subf %90, %93 : vector<8x16xf32>
    %95 = math.exp %94 : vector<8x16xf32>
    %cst_43 = arith.constant dense<0.000000e+00> : vector<8xf32>
    %96 = vector.multi_reduction <add>, %95, %cst_43 [1] : vector<8x16xf32> to vector<8xf32>
    %97 = vector.shape_cast %96 : vector<8xf32> to vector<8x1xf32>
    %98 = tpu.reciprocal %97 : vector<8x1xf32> -> vector<8x1xf32>
    %99 = vector.broadcast %98 : vector<8x1xf32> to vector<8x16xf32>
    %100 = arith.mulf %95, %99 : vector<8x16xf32>
    %c0_44 = arith.constant 0 : index
    %c0_45 = arith.constant 0 : index
    %c48 = arith.constant 48 : index
    %101 = vector.load %arg16[%c0_44, %c0_45, %c48] : memref<1x8x64xf32, #tpu.memory_space<vmem>>, vector<1x8x16xf32>
    %102 = vector.shape_cast %101 : vector<1x8x16xf32> to vector<8x16xf32>
    %103 = vector.shape_cast %100 : vector<8x16xf32> to vector<1x8x16xf32>
    tpu.vector_store %arg16[%c0_44, %c0_45, %c48], %103 {strides = array<i32>} : memref<1x8x64xf32, #tpu.memory_space<vmem>>, vector<1x8x16xf32>,
    %104 = arith.truncf %100 : vector<8x16xf32> to vector<8x16xbf16>
    %cst_46 = arith.constant dense<0.000000e+00> : vector<8x8xf32>
    %105 = tpu.matmul %104, %89, %cst_46 {dimension_numbers = #tpu.dot_dimension_numbers<[1], [0], [0], [1], [0, 0, 1, 1], [], []>} : vector<8x16xbf16>, vector<16x8xbf16>, vector<8x8xf32> -> vector<8x8xf32>
    %106 = arith.truncf %105 : vector<8x8xf32> to vector<8x8xbf16>
    %c3 = arith.constant 3 : index
    %c0_47 = arith.constant 0 : index
    %c0_48 = arith.constant 0 : index
    %107 = vector.load %arg11[%c3, %c0_47, %c0_48] : memref<4x8x32xbf16, #tpu.memory_space<vmem>>, vector<1x8x32xbf16>
    %108 = vector.shape_cast %107 : vector<1x8x32xbf16> to vector<8x32xbf16>
    %cst_49 = arith.constant dense<0.000000e+00> : vector<8x32xf32>
    %109 = tpu.matmul %106, %108, %cst_49 {dimension_numbers = #tpu.dot_dimension_numbers<[1], [0], [0], [1], [0, 0, 1, 1], [], []>} : vector<8x8xbf16>, vector<8x32xbf16>, vector<8x32xf32> -> vector<8x32xf32>
    %110 = arith.addf %86, %109 : vector<8x32xf32>
    %c0_50 = arith.constant 0 : index
    %c0_51 = arith.constant 0 : index
    %111 = vector.load %arg12[%c0_50, %c0_51] : memref<1x32xf32, #tpu.memory_space<vmem>>, vector<1x32xf32>
    %112 = vector.broadcast %111 : vector<1x32xf32> to vector<8x32xf32>
    %113 = arith.addf %110, %112 : vector<8x32xf32>
    %c0_52 = arith.constant 0 : index
    %c0_53 = arith.constant 0 : index
    %c0_54 = arith.constant 0 : index
    %114 = vector.load %arg15[%c0_52, %c0_53, %c0_54] : memref<1x8x32xf32, #tpu.memory_space<vmem>>, vector<1x8x32xf32>
    %115 = vector.shape_cast %114 : vector<1x8x32xf32> to vector<8x32xf32>
    %116 = vector.shape_cast %113 : vector<8x32xf32> to vector<1x8x32xf32>
    tpu.vector_store %arg15[%c0_52, %c0_53, %c0_54], %116 {strides = array<i32>} : memref<1x8x32xf32, #tpu.memory_space<vmem>>, vector<1x8x32xf32>,
    return
  }
  func.func @transform_0(%arg0: i32, %arg1: i32) -> (i32, i32, i32) {
    %c0_i32 = arith.constant 0 : i32
    %c0_i32_0 = arith.constant 0 : i32
    return %arg0, %arg1, %c0_i32 : i32, i32, i32
  }
  func.func @transform_1(%arg0: i32, %arg1: i32) -> (i32, i32, i32) {
    %c0_i32 = arith.constant 0 : i32
    %c0_i32_0 = arith.constant 0 : i32
    %c0_i32_1 = arith.constant 0 : i32
    return %arg0, %c0_i32, %c0_i32_0 : i32, i32, i32
  }
  func.func @transform_2(%arg0: i32, %arg1: i32) -> (i32, i32, i32) {
    %c0_i32 = arith.constant 0 : i32
    %c0_i32_0 = arith.constant 0 : i32
    %c0_i32_1 = arith.constant 0 : i32
    return %arg0, %c0_i32, %c0_i32_0 : i32, i32, i32
  }
  func.func @transform_3(%arg0: i32, %arg1: i32) -> (i32, i32) {
    %c0_i32 = arith.constant 0 : i32
    %c0_i32_0 = arith.constant 0 : i32
    %c0_i32_1 = arith.constant 0 : i32
    return %c0_i32, %c0_i32_0 : i32, i32
  }
  func.func @transform_4(%arg0: i32, %arg1: i32) -> (i32, i32) {
    %c0_i32 = arith.constant 0 : i32
    %c0_i32_0 = arith.constant 0 : i32
    %c0_i32_1 = arith.constant 0 : i32
    return %c0_i32, %c0_i32_0 : i32, i32
  }
  func.func @transform_5(%arg0: i32, %arg1: i32) -> (i32, i32) {
    %c0_i32 = arith.constant 0 : i32
    %c0_i32_0 = arith.constant 0 : i32
    %c0_i32_1 = arith.constant 0 : i32
    return %c0_i32, %c0_i32_0 : i32, i32
  }
  func.func @transform_6(%arg0: i32, %arg1: i32) -> (i32, i32) {
    %c0_i32 = arith.constant 0 : i32
    %c0_i32_0 = arith.constant 0 : i32
    %c0_i32_1 = arith.constant 0 : i32
    return %c0_i32, %c0_i32_0 : i32, i32
  }
  func.func @transform_7(%arg0: i32, %arg1: i32) -> (i32, i32) {
    %c0_i32 = arith.constant 0 : i32
    %c0_i32_0 = arith.constant 0 : i32
    %c0_i32_1 = arith.constant 0 : i32
    return %c0_i32, %c0_i32_0 : i32, i32
  }
  func.func @transform_8(%arg0: i32, %arg1: i32) -> (i32, i32) {
    %c0_i32 = arith.constant 0 : i32
    %c0_i32_0 = arith.constant 0 : i32
    %c0_i32_1 = arith.constant 0 : i32
    return %c0_i32, %c0_i32_0 : i32, i32
  }
  func.func @transform_9(%arg0: i32, %arg1: i32) -> (i32, i32, i32) {
    %c0_i32 = arith.constant 0 : i32
    %c0_i32_0 = arith.constant 0 : i32
    %c0_i32_1 = arith.constant 0 : i32
    %c0_i32_2 = arith.constant 0 : i32
    return %c0_i32, %c0_i32_0, %c0_i32_1 : i32, i32, i32
  }
  func.func @transform_10(%arg0: i32, %arg1: i32) -> (i32, i32) {
    %c0_i32 = arith.constant 0 : i32
    %c0_i32_0 = arith.constant 0 : i32
    %c0_i32_1 = arith.constant 0 : i32
    return %c0_i32, %c0_i32_0 : i32, i32
  }
  func.func @transform_11(%arg0: i32, %arg1: i32) -> (i32, i32) {
    %c0_i32 = arith.constant 0 : i32
    %c0_i32_0 = arith.constant 0 : i32
    %c0_i32_1 = arith.constant 0 : i32
    return %c0_i32, %c0_i32_0 : i32, i32
  }
  func.func @transform_12(%arg0: i32, %arg1: i32) -> (i32, i32) {
    %c0_i32 = arith.constant 0 : i32
    %c0_i32_0 = arith.constant 0 : i32
    %c0_i32_1 = arith.constant 0 : i32
    return %c0_i32, %c0_i32_0 : i32, i32
  }
  func.func @transform_13(%arg0: i32, %arg1: i32) -> (i32, i32, i32) {
    %c0_i32 = arith.constant 0 : i32
    %c0_i32_0 = arith.constant 0 : i32
    return %arg0, %arg1, %c0_i32 : i32, i32, i32
  }
  func.func @transform_14(%arg0: i32, %arg1: i32) -> (i32, i32, i32) {
    %c0_i32 = arith.constant 0 : i32
    %c0_i32_0 = arith.constant 0 : i32
    return %arg0, %arg1, %c0_i32 : i32, i32, i32
  }
}

</mosaic_0001>

<llo_original>
// kernel: tpu_custom_call.1
$region0: #{tpu_custom_call.1}
  #allocation0 [shape = 'u32[]', space=smem, size = 0x4, offset = 0x4, fixed_abs, tag = 'smem constant byte address 0x4 - core index']
  #allocation1 [shape = 'u32[144,128]{1,0:T(1,128)}', space=vmem, size = 0x12000, scoped, tag = 'internal scratch']
  #allocation2 [shape = 'bf16[16,32]{1,0:T(16,128)(2,1)}', space=vmem, size = 0x1000, scoped, tag = 'scratch operand']
  #allocation3 [shape = 'bf16[16,32]{1,0:T(16,128)(2,1)}', space=vmem, size = 0x1000, scoped, tag = 'scratch operand']
  %s0 = inlined_call_operand.hbm [shape: f32[2,8,32], index: 0, kind: input, shape index: {}]
  %s1 = inlined_call_operand.hbm [shape: f32[2,8,32], index: 1, kind: input, shape index: {}]
  %s2 = inlined_call_operand.hbm [shape: f32[2,8,32], index: 2, kind: input, shape index: {}]
  %s3 = inlined_call_operand.hbm [shape: bf16[32,32], index: 3, kind: input, shape index: {}]
  %s4 = inlined_call_operand.vmem [shape: f32[1,32], index: 4, kind: input, shape index: {}]
  %s5 = inlined_call_operand.vmem [shape: bf16[32,32], index: 5, kind: input, shape index: {}]
  %s6 = inlined_call_operand.hbm [shape: f32[1,32], index: 6, kind: input, shape index: {}]
  %s7 = inlined_call_operand.hbm [shape: bf16[32,32], index: 7, kind: input, shape index: {}]
  %s8 = inlined_call_operand.hbm [shape: f32[1,32], index: 8, kind: input, shape index: {}]
  %s9 = inlined_call_operand.vmem [shape: bf16[4,8,32], index: 9, kind: input, shape index: {}]
  %s10 = inlined_call_operand.hbm [shape: f32[1,32], index: 10, kind: input, shape index: {}]
  %s11 = inlined_call_operand.vmem [shape: bf16[8,32], index: 11, kind: input, shape index: {}]
  %s12 = inlined_call_operand.vmem [shape: bf16[8,32], index: 12, kind: input, shape index: {}]
  %s13 = inlined_call_operand.hbm [shape: f32[2,8,32], index: 13, kind: output, shape index: {0}]
  %s14 = inlined_call_operand.hbm [shape: f32[2,8,64], index: 14, kind: output, shape index: {1}]
  %15 = xla_tuple %s13, %s14
  %s16 = sld [smem:[#allocation0]]
  $region129: #{tpu_custom_call.1} parent=0
    _
  %s18 = ssub.s32 1, %s16
  %s19 = scalar_select 0, %s18, %s16
  $region1: #{tpu_custom_call.1} parent=0
    #allocation4 [shape = 'u8[8192]{0}', space=vmem, size = 0x2000, scoped, tag = 'input window, operand 0']
    #allocation5 [shape = 's32[2]{0}', space=sflag, size = 0x8, scoped, tag = 'scoped memory for tpu_custom_call.1']
    #allocation6 [shape = 's32[2]{0}', space=sflag, size = 0x8, scoped, tag = 'scoped memory for tpu_custom_call.1']
    #allocation7 [shape = 'u8[8192]{0}', space=vmem, size = 0x2000, scoped, tag = 'input window, operand 1']
    #allocation8 [shape = 's32[2]{0}', space=sflag, size = 0x8, scoped, tag = 'scoped memory for tpu_custom_call.1']
    #allocation9 [shape = 'u8[8192]{0}', space=vmem, size = 0x2000, scoped, tag = 'input window, operand 2']
    #allocation10 [shape = 'u8[8192]{0}', space=vmem, size = 0x2000, scoped, tag = 'input window, operand 3, single buffered']
    #allocation11 [shape = 's32[1]{0}', space=sflag, size = 0x4, scoped, tag = 'scoped memory for tpu_custom_call.1']
    #allocation12 [shape = 'u8[512]{0}', space=vmem, size = 0x400, scoped, tag = 'input window, operand 6, single buffered']
    #allocation13 [shape = 'u8[8192]{0}', space=vmem, size = 0x2000, scoped, tag = 'input window, operand 7, single buffered']
    #allocation14 [shape = 's32[1]{0}', space=sflag, size = 0x4, scoped, tag = 'scoped memory for tpu_custom_call.1']
    #allocation15 [shape = 'u8[512]{0}', space=vmem, size = 0x400, scoped, tag = 'input window, operand 8, single buffered']
    #allocation16 [shape = 'u8[512]{0}', space=vmem, size = 0x400, scoped, tag = 'input window, operand 10, single buffered']
    #allocation17 [shape = 's32[1]{0}', space=sflag, size = 0x4, scoped, tag = 'scoped memory for tpu_custom_call.1']
    #allocation18 [shape = 'u8[8192]{0}', space=vmem, size = 0x2000, scoped, tag = 'output window, operand 0']
    #allocation19 [shape = 'u8[8192]{0}', space=vmem, size = 0x2000, scoped, tag = 'output window, operand 1']
    #allocation20 [shape = 's32[2]{0}', space=sflag, size = 0x8, scoped, tag = 'scoped memory for tpu_custom_call.1']
    %20 = vsyncpa [#allocation5], 0
    %s21 = scalar_lea.sflag [#allocation5], 1
    %22 = vsyncpa %s21, 0
    %23 = vsyncpa [#allocation8], 0
    %s24 = scalar_lea.sflag [#allocation8], 1
    %25 = vsyncpa %s24, 0
    %26 = vsyncpa [#allocation11], 0
    %27 = vsyncpa [#allocation14], 0
    %28 = vsyncpa [#allocation17], 0
    %29 = vsyncpa [#allocation6], 0
    %s30 = scalar_lea.sflag [#allocation6], 1
    %31 = vsyncpa %s30, 0
    %32 = vsyncpa [#allocation20], 0
    %s33 = scalar_lea.sflag [#allocation20], 1
    %34 = vsyncpa %s33, 0
    loop: start=0, step=1, limit=4
    $region2: #{tpu_custom_call.1} parent=1 // loop_pre_header
      _
    $region3: #{tpu_custom_call.1} parent=1 // loop_header
      %s36 = sphi 0, %s40
      %p37 = scmp.ge.s32.totalorder %s36, 4
      %s43 = sphi 0, %s55
      %s44 = sphi 0, %s51
      %s45 = sphi 0, %s43
      %s46 = sphi 0, %s44
      %s47 = sphi 0, %s45
      %s48 = sphi 0, %s46
      %s60 = sphi 0, %s62
      %s63 = sphi 0, %s60
      %s64 = sphi 0, %s63
      %s80 = sphi 0, %s64
      %s86 = sphi 0, %s88
      %s89 = sphi 0, %s86
      %s90 = sphi 0, %s89
      %s106 = sphi 0, %s90
      %s112 = sphi 0, %s114
      %s115 = sphi 0, %s112
      %s116 = sphi 0, %s115
      %s132 = sphi 0, %s116
      %s136 = sphi 0, %s136
      %s138 = sphi 0, %s136
      %s139 = sphi 0, %s138
      %s153 = sphi 0, %s139
      %s157 = sphi 0, %s157
      %s159 = sphi 0, %s157
      %s160 = sphi 0, %s159
      %s174 = sphi 0, %s160
      %s178 = sphi 0, %s178
      %s180 = sphi 0, %s178
      %s181 = sphi 0, %s180
      %s195 = sphi 0, %s181
      %s199 = sphi 0, %s199
      %s201 = sphi 0, %s199
      %s202 = sphi 0, %s201
      %s216 = sphi 0, %s202
      %s220 = sphi 0, %s220
      %s222 = sphi 0, %s220
      %s223 = sphi 0, %s222
      %s237 = sphi 0, %s223
      %s241 = sphi 0, %s241
      %s243 = sphi 0, %s241
      %s244 = sphi 0, %s243
      %s258 = sphi 0, %s244
      %s262 = sphi 0, %s262
      %s264 = sphi 0, %s262
      %s265 = sphi 0, %s264
      %s279 = sphi 0, %s265
      %s283 = sphi 0, %s283
      %s285 = sphi 0, %s283
      %s286 = sphi 0, %s285
      %s300 = sphi 0, %s286
      %s304 = sphi 0, %s304
      %s306 = sphi 0, %s304
      %s307 = sphi 0, %s306
      %s321 = sphi 0, %s307
      %s325 = sphi 0, %s325
      %s327 = sphi 0, %s325
      %s328 = sphi 0, %s327
      %s342 = sphi 0, %s328
      %s350 = sphi 0, %s352
      %s353 = sphi 0, %s350
      %s354 = sphi 0, %s353
      %s370 = sphi 0, %s354
      %s378 = sphi 0, %s380
      %s381 = sphi 0, %s378
      %s382 = sphi 0, %s381
      %s398 = sphi 0, %s382
    $region4: #{tpu_custom_call.1} parent=1 // loop_header_branch
      %39 = sbr.rel (%p37) target = $region8
    $region5: #{tpu_custom_call.1} parent=1 // loop_body
      %s41 = ssub.s32 %s36, 1
      %s42 = ssub.s32 %s36, 2
      %s49 = sadd.s32 1, %s44
      %p50 = scmp.ge.s32.totalorder %s49, 1
      %s51 = scalar_select %p50, 0, %s49
      %s52 = sadd.s32 1, %s43
      %s53 = scalar_select %p50, %s52, %s43
      %p54 = scmp.ge.s32.totalorder %s53, 2
      %s55 = scalar_select %p54, 0, %s53
      %s56 = ssub.s32 %s43, %s55
      %s57 = ssub.s32 %s44, %s51
      %s58 = sor.u32 %s56, %s57
      %p59 = scmp.eq.s32.totalorder %s58, 0
      %s61 = sadd.s32 %s60, 1
      %s62 = scalar_select %p59, %s60, %s61
      %p65 = pneg %p59
      %p66 = scmp.eq.s32.totalorder %s36, 1
      %p67 = por %p65, %p66
      %p68 = scmp.ne.s32.totalorder %s60, %s63
      %p69 = scmp.eq.s32.totalorder %s36, 0
      %p70 = por %p68, %p69
      %p71 = scmp.ne.s32.totalorder %s60, %s63
      %p72 = scmp.eq.s32.totalorder %s41, 1
      %p73 = por %p71, %p72
      %p74 = scmp.ne.s32.totalorder %s63, %s64
      %p75 = scmp.eq.s32.totalorder %s41, 0
      %p76 = por %p74, %p75
      %p77 = scmp.ne.s32.totalorder %s63, %s64
      %p78 = scmp.eq.s32.totalorder %s42, 1
      %p79 = por %p77, %p78
      %p81 = scmp.ne.s32.totalorder %s64, %s80
      %p82 = scmp.eq.s32.totalorder %s42, 0
      %p83 = por %p81, %p82
      %s84 = ssub.s32 %s43, %s55
      %p85 = scmp.eq.s32.totalorder %s84, 0
      %s87 = sadd.s32 %s86, 1
      %s88 = scalar_select %p85, %s86, %s87
      %p91 = pneg %p85
      %p92 = scmp.eq.s32.totalorder %s36, 1
      %p93 = por %p91, %p92
      %p94 = scmp.ne.s32.totalorder %s86, %s89
      %p95 = scmp.eq.s32.totalorder %s36, 0
      %p96 = por %p94, %p95
      %p97 = scmp.ne.s32.totalorder %s86, %s89
      %p98 = scmp.eq.s32.totalorder %s41, 1
      %p99 = por %p97, %p98
      %p100 = scmp.ne.s32.totalorder %s89, %s90
      %p101 = scmp.eq.s32.totalorder %s41, 0
      %p102 = por %p100, %p101
      %p103 = scmp.ne.s32.totalorder %s89, %s90
      %p104 = scmp.eq.s32.totalorder %s42, 1
      %p105 = por %p103, %p104
      %p107 = scmp.ne.s32.totalorder %s90, %s106
      %p108 = scmp.eq.s32.totalorder %s42, 0
      %p109 = por %p107, %p108
      %s110 = ssub.s32 %s43, %s55
      %p111 = scmp.eq.s32.totalorder %s110, 0
      %s113 = sadd.s32 %s112, 1
      %s114 = scalar_select %p111, %s112, %s113
      %p117 = pneg %p111
      %p118 = scmp.eq.s32.totalorder %s36, 1
      %p119 = por %p117, %p118
      %p120 = scmp.ne.s32.totalorder %s112, %s115
      %p121 = scmp.eq.s32.totalorder %s36, 0
      %p122 = por %p120, %p121
      %p123 = scmp.ne.s32.totalorder %s112, %s115
      %p124 = scmp.eq.s32.totalorder %s41, 1
      %p125 = por %p123, %p124
      %p126 = scmp.ne.s32.totalorder %s115, %s116
      %p127 = scmp.eq.s32.totalorder %s41, 0
      %p128 = por %p126, %p127
      %p129 = scmp.ne.s32.totalorder %s115, %s116
      %p130 = scmp.eq.s32.totalorder %s42, 1
      %p131 = por %p129, %p130
      %p133 = scmp.ne.s32.totalorder %s116, %s132
      %p134 = scmp.eq.s32.totalorder %s42, 0
      %p135 = por %p133, %p134
      %s137 = sadd.s32 %s136, 1
      %p140 = scmp.eq.s32.totalorder %s36, 1
      %p141 = scmp.ne.s32.totalorder %s136, %s138
      %p142 = scmp.eq.s32.totalorder %s36, 0
      %p143 = por %p141, %p142
      %p144 = scmp.ne.s32.totalorder %s136, %s138
      %p145 = scmp.eq.s32.totalorder %s41, 1
      %p146 = por %p144, %p145
      %p147 = scmp.ne.s32.totalorder %s138, %s139
      %p148 = scmp.eq.s32.totalorder %s41, 0
      %p149 = por %p147, %p148
      %p150 = scmp.ne.s32.totalorder %s138, %s139
      %p151 = scmp.eq.s32.totalorder %s42, 1
      %p152 = por %p150, %p151
      %p154 = scmp.ne.s32.totalorder %s139, %s153
      %p155 = scmp.eq.s32.totalorder %s42, 0
      %p156 = por %p154, %p155
      %s158 = sadd.s32 %s157, 1
      %p161 = scmp.eq.s32.totalorder %s36, 1
      %p162 = scmp.ne.s32.totalorder %s157, %s159
      %p163 = scmp.eq.s32.totalorder %s36, 0
      %p164 = por %p162, %p163
      %p165 = scmp.ne.s32.totalorder %s157, %s159
      %p166 = scmp.eq.s32.totalorder %s41, 1
      %p167 = por %p165, %p166
      %p168 = scmp.ne.s32.totalorder %s159, %s160
      %p169 = scmp.eq.s32.totalorder %s41, 0
      %p170 = por %p168, %p169
      %p171 = scmp.ne.s32.totalorder %s159, %s160
      %p172 = scmp.eq.s32.totalorder %s42, 1
      %p173 = por %p171, %p172
      %p175 = scmp.ne.s32.totalorder %s160, %s174
      %p176 = scmp.eq.s32.totalorder %s42, 0
      %p177 = por %p175, %p176
      %s179 = sadd.s32 %s178, 1
      %p182 = scmp.eq.s32.totalorder %s36, 1
      %p183 = scmp.ne.s32.totalorder %s178, %s180
      %p184 = scmp.eq.s32.totalorder %s36, 0
      %p185 = por %p183, %p184
      %p186 = scmp.ne.s32.totalorder %s178, %s180
      %p187 = scmp.eq.s32.totalorder %s41, 1
      %p188 = por %p186, %p187
      %p189 = scmp.ne.s32.totalorder %s180, %s181
      %p190 = scmp.eq.s32.totalorder %s41, 0
      %p191 = por %p189, %p190
      %p192 = scmp.ne.s32.totalorder %s180, %s181
      %p193 = scmp.eq.s32.totalorder %s42, 1
      %p194 = por %p192, %p193
      %p196 = scmp.ne.s32.totalorder %s181, %s195
      %p197 = scmp.eq.s32.totalorder %s42, 0
      %p198 = por %p196, %p197
      %s200 = sadd.s32 %s199, 1
      %p203 = scmp.eq.s32.totalorder %s36, 1
      %p204 = scmp.ne.s32.totalorder %s199, %s201
      %p205 = scmp.eq.s32.totalorder %s36, 0
      %p206 = por %p204, %p205
      %p207 = scmp.ne.s32.totalorder %s199, %s201
      %p208 = scmp.eq.s32.totalorder %s41, 1
      %p209 = por %p207, %p208
      %p210 = scmp.ne.s32.totalorder %s201, %s202
      %p211 = scmp.eq.s32.totalorder %s41, 0
      %p212 = por %p210, %p211
      %p213 = scmp.ne.s32.totalorder %s201, %s202
      %p214 = scmp.eq.s32.totalorder %s42, 1
      %p215 = por %p213, %p214
      %p217 = scmp.ne.s32.totalorder %s202, %s216
      %p218 = scmp.eq.s32.totalorder %s42, 0
      %p219 = por %p217, %p218
      %s221 = sadd.s32 %s220, 1
      %p224 = scmp.eq.s32.totalorder %s36, 1
      %p225 = scmp.ne.s32.totalorder %s220, %s222
      %p226 = scmp.eq.s32.totalorder %s36, 0
      %p227 = por %p225, %p226
      %p228 = scmp.ne.s32.totalorder %s220, %s222
      %p229 = scmp.eq.s32.totalorder %s41, 1
      %p230 = por %p228, %p229
      %p231 = scmp.ne.s32.totalorder %s222, %s223
      %p232 = scmp.eq.s32.totalorder %s41, 0
      %p233 = por %p231, %p232
      %p234 = scmp.ne.s32.totalorder %s222, %s223
      %p235 = scmp.eq.s32.totalorder %s42, 1
      %p236 = por %p234, %p235
      %p238 = scmp.ne.s32.totalorder %s223, %s237
      %p239 = scmp.eq.s32.totalorder %s42, 0
      %p240 = por %p238, %p239
      %s242 = sadd.s32 %s241, 1
      %p245 = scmp.eq.s32.totalorder %s36, 1
      %p246 = scmp.ne.s32.totalorder %s241, %s243
      %p247 = scmp.eq.s32.totalorder %s36, 0
      %p248 = por %p246, %p247
      %p249 = scmp.ne.s32.totalorder %s241, %s243
      %p250 = scmp.eq.s32.totalorder %s41, 1
      %p251 = por %p249, %p250
      %p252 = scmp.ne.s32.totalorder %s243, %s244
      %p253 = scmp.eq.s32.totalorder %s41, 0
      %p254 = por %p252, %p253
      %p255 = scmp.ne.s32.totalorder %s243, %s244
      %p256 = scmp.eq.s32.totalorder %s42, 1
      %p257 = por %p255, %p256
      %p259 = scmp.ne.s32.totalorder %s244, %s258
      %p260 = scmp.eq.s32.totalorder %s42, 0
      %p261 = por %p259, %p260
      %s263 = sadd.s32 %s262, 1
      %p266 = scmp.eq.s32.totalorder %s36, 1
      %p267 = scmp.ne.s32.totalorder %s262, %s264
      %p268 = scmp.eq.s32.totalorder %s36, 0
      %p269 = por %p267, %p268
      %p270 = scmp.ne.s32.totalorder %s262, %s264
      %p271 = scmp.eq.s32.totalorder %s41, 1
      %p272 = por %p270, %p271
      %p273 = scmp.ne.s32.totalorder %s264, %s265
      %p274 = scmp.eq.s32.totalorder %s41, 0
      %p275 = por %p273, %p274
      %p276 = scmp.ne.s32.totalorder %s264, %s265
      %p277 = scmp.eq.s32.totalorder %s42, 1
      %p278 = por %p276, %p277
      %p280 = scmp.ne.s32.totalorder %s265, %s279
      %p281 = scmp.eq.s32.totalorder %s42, 0
      %p282 = por %p280, %p281
      %s284 = sadd.s32 %s283, 1
      %p287 = scmp.eq.s32.totalorder %s36, 1
      %p288 = scmp.ne.s32.totalorder %s283, %s285
      %p289 = scmp.eq.s32.totalorder %s36, 0
      %p290 = por %p288, %p289
      %p291 = scmp.ne.s32.totalorder %s283, %s285
      %p292 = scmp.eq.s32.totalorder %s41, 1
      %p293 = por %p291, %p292
      %p294 = scmp.ne.s32.totalorder %s285, %s286
      %p295 = scmp.eq.s32.totalorder %s41, 0
      %p296 = por %p294, %p295
      %p297 = scmp.ne.s32.totalorder %s285, %s286
      %p298 = scmp.eq.s32.totalorder %s42, 1
      %p299 = por %p297, %p298
      %p301 = scmp.ne.s32.totalorder %s286, %s300
      %p302 = scmp.eq.s32.totalorder %s42, 0
      %p303 = por %p301, %p302
      %s305 = sadd.s32 %s304, 1
      %p308 = scmp.eq.s32.totalorder %s36, 1
      %p309 = scmp.ne.s32.totalorder %s304, %s306
      %p310 = scmp.eq.s32.totalorder %s36, 0
      %p311 = por %p309, %p310
      %p312 = scmp.ne.s32.totalorder %s304, %s306
      %p313 = scmp.eq.s32.totalorder %s41, 1
      %p314 = por %p312, %p313
      %p315 = scmp.ne.s32.totalorder %s306, %s307
      %p316 = scmp.eq.s32.totalorder %s41, 0
      %p317 = por %p315, %p316
      %p318 = scmp.ne.s32.totalorder %s306, %s307
      %p319 = scmp.eq.s32.totalorder %s42, 1
      %p320 = por %p318, %p319
      %p322 = scmp.ne.s32.totalorder %s307, %s321
      %p323 = scmp.eq.s32.totalorder %s42, 0
      %p324 = por %p322, %p323
      %s326 = sadd.s32 %s325, 1
      %p329 = scmp.eq.s32.totalorder %s36, 1
      %p330 = scmp.ne.s32.totalorder %s325, %s327
      %p331 = scmp.eq.s32.totalorder %s36, 0
      %p332 = por %p330, %p331
      %p333 = scmp.ne.s32.totalorder %s325, %s327
      %p334 = scmp.eq.s32.totalorder %s41, 1
      %p335 = por %p333, %p334
      %p336 = scmp.ne.s32.totalorder %s327, %s328
      %p337 = scmp.eq.s32.totalorder %s41, 0
      %p338 = por %p336, %p337
      %p339 = scmp.ne.s32.totalorder %s327, %s328
      %p340 = scmp.eq.s32.totalorder %s42, 1
      %p341 = por %p339, %p340
      %p343 = scmp.ne.s32.totalorder %s328, %s342
      %p344 = scmp.eq.s32.totalorder %s42, 0
      %p345 = por %p343, %p344
      %s346 = ssub.s32 %s43, %s55
      %s347 = ssub.s32 %s44, %s51
      %s348 = sor.u32 %s346, %s347
      %p349 = scmp.eq.s32.totalorder %s348, 0
      %s351 = sadd.s32 %s350, 1
      %s352 = scalar_select %p349, %s350, %s351
      %p355 = pneg %p349
      %p356 = scmp.eq.s32.totalorder %s36, 1
      %p357 = por %p355, %p356
      %p358 = scmp.ne.s32.totalorder %s350, %s353
      %p359 = scmp.eq.s32.totalorder %s36, 0
      %p360 = por %p358, %p359
      %p361 = scmp.ne.s32.totalorder %s350, %s353
      %p362 = scmp.eq.s32.totalorder %s41, 1
      %p363 = por %p361, %p362
      %p364 = scmp.ne.s32.totalorder %s353, %s354
      %p365 = scmp.eq.s32.totalorder %s41, 0
      %p366 = por %p364, %p365
      %p367 = scmp.ne.s32.totalorder %s353, %s354
      %p368 = scmp.eq.s32.totalorder %s42, 1
      %p369 = por %p367, %p368
      %p371 = scmp.ne.s32.totalorder %s354, %s370
      %p372 = scmp.eq.s32.totalorder %s42, 0
      %p373 = por %p371, %p372
      %s374 = ssub.s32 %s43, %s55
      %s375 = ssub.s32 %s44, %s51
      %s376 = sor.u32 %s374, %s375
      %p377 = scmp.eq.s32.totalorder %s376, 0
      %s379 = sadd.s32 %s378, 1
      %s380 = scalar_select %p377, %s378, %s379
      %p383 = pneg %p377
      %p384 = scmp.eq.s32.totalorder %s36, 1
      %p385 = por %p383, %p384
      %p386 = scmp.ne.s32.totalorder %s378, %s381
      %p387 = scmp.eq.s32.totalorder %s36, 0
      %p388 = por %p386, %p387
      %p389 = scmp.ne.s32.totalorder %s378, %s381
      %p390 = scmp.eq.s32.totalorder %s41, 1
      %p391 = por %p389, %p390
      %p392 = scmp.ne.s32.totalorder %s381, %s382
      %p393 = scmp.eq.s32.totalorder %s41, 0
      %p394 = por %p392, %p393
      %p395 = scmp.ne.s32.totalorder %s381, %s382
      %p396 = scmp.eq.s32.totalorder %s42, 1
      %p397 = por %p395, %p396
      %p399 = scmp.ne.s32.totalorder %s382, %s398
      %p400 = scmp.eq.s32.totalorder %s42, 0
      %p401 = por %p399, %p400
      %p402 = scmp.le.s32.totalorder 1, %s36
      %p403 = scmp.lt.s32.totalorder %s36, 3
      %p404 = pnand %p402, %p403
      %p405 = pneg %p404
      // Predicated region
      $region9: #{tpu_custom_call.1} parent=5 // pred_check
        _
      $region10: #{tpu_custom_call.1} parent=5 // pred_check_branch
        %407 = sbr.rel (%p404) target = $region12
      $region11: #{tpu_custom_call.1} parent=5 // pred_region
        %s408 = ssub.s32 %s36, 1
        // Predicated region
        $region13: #{tpu_custom_call.1} parent=11 // pred_check
          %p409 = pneg %p149
        $region14: #{tpu_custom_call.1} parent=11 // pred_check_branch
          %411 = sbr.rel (%p409) target = $region16
        $region15: #{tpu_custom_call.1} parent=11 // pred_region
          %s413 = ssub.s32 256, 256
          %414 = vsyncadd [#allocation11], %s413
          %s415 = sshll.u32 [#allocation10], 4
          %s416 = int_to_ptr.vmem [resolvable:$true] %s415
          %421 = dma.hbm_to_vmem [thread:$0]  %s3, 256, %s416, [#allocation11], 64, 64, 4
        $region16: #{tpu_custom_call.1} parent=11 // pred_fallthru
          _
        // Predicated region
        $region17: #{tpu_custom_call.1} parent=11 // pred_check
          %p422 = pneg %p170
        $region18: #{tpu_custom_call.1} parent=11 // pred_check_branch
          %424 = sbr.rel (%p422) target = $region20
        $region19: #{tpu_custom_call.1} parent=11 // pred_region
          _
        $region20: #{tpu_custom_call.1} parent=11 // pred_fallthru
          _
        // Predicated region
        $region21: #{tpu_custom_call.1} parent=11 // pred_check
          %p425 = pneg %p191
        $region22: #{tpu_custom_call.1} parent=11 // pred_check_branch
          %427 = sbr.rel (%p425) target = $region24
        $region23: #{tpu_custom_call.1} parent=11 // pred_region
          _
        $region24: #{tpu_custom_call.1} parent=11 // pred_fallthru
          _
        // Predicated region
        $region25: #{tpu_custom_call.1} parent=11 // pred_check
          %p428 = pneg %p212
        $region26: #{tpu_custom_call.1} parent=11 // pred_check_branch
          %430 = sbr.rel (%p428) target = $region28
        $region27: #{tpu_custom_call.1} parent=11 // pred_region
          %s432 = ssub.s32 16, 16
          %433 = vsyncadd [#allocation11], %s432
          %s435 = sshll.u32 [#allocation12], 4
          %s436 = int_to_ptr.vmem [resolvable:$true] %s435
          %438 = dma.hbm_to_vmem [thread:$0]  %s6, 16, %s436, [#allocation11]
        $region28: #{tpu_custom_call.1} parent=11 // pred_fallthru
          _
        // Predicated region
        $region29: #{tpu_custom_call.1} parent=11 // pred_check
          %p439 = pneg %p233
        $region30: #{tpu_custom_call.1} parent=11 // pred_check_branch
          %441 = sbr.rel (%p439) target = $region32
        $region31: #{tpu_custom_call.1} parent=11 // pred_region
          %s443 = ssub.s32 256, 256
          %444 = vsyncadd [#allocation14], %s443
          %s445 = sshll.u32 [#allocation13], 4
          %s446 = int_to_ptr.vmem [resolvable:$true] %s445
          %451 = dma.hbm_to_vmem [thread:$0]  %s7, 256, %s446, [#allocation14], 64, 64, 4
        $region32: #{tpu_custom_call.1} parent=11 // pred_fallthru
          _
        // Predicated region
        $region33: #{tpu_custom_call.1} parent=11 // pred_check
          %p452 = pneg %p254
        $region34: #{tpu_custom_call.1} parent=11 // pred_check_branch
          %454 = sbr.rel (%p452) target = $region36
        $region35: #{tpu_custom_call.1} parent=11 // pred_region
          %s456 = ssub.s32 16, 16
          %457 = vsyncadd [#allocation14], %s456
          %s459 = sshll.u32 [#allocation15], 4
          %s460 = int_to_ptr.vmem [resolvable:$true] %s459
          %462 = dma.hbm_to_vmem [thread:$0]  %s8, 16, %s460, [#allocation14]
        $region36: #{tpu_custom_call.1} parent=11 // pred_fallthru
          _
        // Predicated region
        $region37: #{tpu_custom_call.1} parent=11 // pred_check
          %p463 = pneg %p275
        $region38: #{tpu_custom_call.1} parent=11 // pred_check_branch
          %465 = sbr.rel (%p463) target = $region40
        $region39: #{tpu_custom_call.1} parent=11 // pred_region
          _
        $region40: #{tpu_custom_call.1} parent=11 // pred_fallthru
          _
        // Predicated region
        $region41: #{tpu_custom_call.1} parent=11 // pred_check
          %p466 = pneg %p296
        $region42: #{tpu_custom_call.1} parent=11 // pred_check_branch
          %468 = sbr.rel (%p466) target = $region44
        $region43: #{tpu_custom_call.1} parent=11 // pred_region
          %s470 = ssub.s32 16, 16
          %471 = vsyncadd [#allocation17], %s470
          %s473 = sshll.u32 [#allocation16], 4
          %s474 = int_to_ptr.vmem [resolvable:$true] %s473
          %476 = dma.hbm_to_vmem [thread:$0]  %s10, 16, %s474, [#allocation17]
        $region44: #{tpu_custom_call.1} parent=11 // pred_fallthru
          _
        // Predicated region
        $region45: #{tpu_custom_call.1} parent=11 // pred_check
          %p477 = pneg %p317
        $region46: #{tpu_custom_call.1} parent=11 // pred_check_branch
          %479 = sbr.rel (%p477) target = $region48
        $region47: #{tpu_custom_call.1} parent=11 // pred_region
          _
        $region48: #{tpu_custom_call.1} parent=11 // pred_fallthru
          _
        // Predicated region
        $region49: #{tpu_custom_call.1} parent=11 // pred_check
          %p480 = pneg %p338
        $region50: #{tpu_custom_call.1} parent=11 // pred_check_branch
          %482 = sbr.rel (%p480) target = $region52
        $region51: #{tpu_custom_call.1} parent=11 // pred_region
          _
        $region52: #{tpu_custom_call.1} parent=11 // pred_fallthru
          _
      $region12: #{tpu_custom_call.1} parent=5 // pred_fallthru
        _
      %p483 = scmp.lt.s32.totalorder %s36, 2
      // Predicated region
      $region53: #{tpu_custom_call.1} parent=5 // pred_check
        %p484 = pneg %p483
      $region54: #{tpu_custom_call.1} parent=5 // pred_check_branch
        %486 = sbr.rel (%p484) target = $region56
      $region55: #{tpu_custom_call.1} parent=5 // pred_region
        // Predicated region
        $region57: #{tpu_custom_call.1} parent=55 // pred_check
          %p487 = pneg %p70
        $region58: #{tpu_custom_call.1} parent=55 // pred_check_branch
          %489 = sbr.rel (%p487) target = $region60
        $region59: #{tpu_custom_call.1} parent=55 // pred_region
          %s490 = sand.u32 %s60, 1
          %s491 = scalar_lea.sflag [#allocation5], %s490
          %s492 = sand.u32 %s60, 1
          %s493 = smul.addr %s492, 8
          %s494 = scalar_lea.vmem [#allocation4], %s493
          %s496 = ssub.s32 128, 128
          %497 = vsyncadd %s491, %s496
          %s498 = sadd.s32 %s44, %s43
          %s499 = smul.addr %s498, 128
          %s500 = scalar_lea.hbm %s0, %s499
          %s502 = sshll.u32 %s494, 4
          %s503 = int_to_ptr.vmem [resolvable:$true] %s502
          %505 = dma.hbm_to_vmem [thread:$0]  %s500, 128, %s503, %s491
        $region60: #{tpu_custom_call.1} parent=55 // pred_fallthru
          _
        // Predicated region
        $region61: #{tpu_custom_call.1} parent=55 // pred_check
          %p506 = pneg %p96
        $region62: #{tpu_custom_call.1} parent=55 // pred_check_branch
          %508 = sbr.rel (%p506) target = $region64
        $region63: #{tpu_custom_call.1} parent=55 // pred_region
          %s509 = sand.u32 %s36, 1
          %s510 = scalar_lea.sflag [#allocation8], %s509
          %s511 = sand.u32 %s86, 1
          %s512 = smul.addr %s511, 8
          %s513 = scalar_lea.vmem [#allocation7], %s512
          %s515 = ssub.s32 128, 128
          %516 = vsyncadd %s510, %s515
          %s517 = smul.addr %s43, 128
          %s518 = scalar_lea.hbm %s1, %s517
          %s520 = sshll.u32 %s513, 4
          %s521 = int_to_ptr.vmem [resolvable:$true] %s520
          %523 = dma.hbm_to_vmem [thread:$0]  %s518, 128, %s521, %s510
        $region64: #{tpu_custom_call.1} parent=55 // pred_fallthru
          _
        // Predicated region
        $region65: #{tpu_custom_call.1} parent=55 // pred_check
          %p524 = pneg %p122
        $region66: #{tpu_custom_call.1} parent=55 // pred_check_branch
          %526 = sbr.rel (%p524) target = $region68
        $region67: #{tpu_custom_call.1} parent=55 // pred_region
          %s527 = sand.u32 %s36, 1
          %s528 = scalar_lea.sflag [#allocation8], %s527
          %s529 = sand.u32 %s112, 1
          %s530 = smul.addr %s529, 8
          %s531 = scalar_lea.vmem [#allocation9], %s530
          %s533 = ssub.s32 128, 128
          %534 = vsyncadd %s528, %s533
          %s535 = smul.addr %s43, 128
          %s536 = scalar_lea.hbm %s2, %s535
          %s538 = sshll.u32 %s531, 4
          %s539 = int_to_ptr.vmem [resolvable:$true] %s538
          %541 = dma.hbm_to_vmem [thread:$0]  %s536, 128, %s539, %s528
        $region68: #{tpu_custom_call.1} parent=55 // pred_fallthru
          _
      $region56: #{tpu_custom_call.1} parent=5 // pred_fallthru
        _
      %p542 = scmp.le.s32.totalorder 1, %s36
      %p543 = scmp.lt.s32.totalorder %s36, 3
      %p544 = pnand %p542, %p543
      %p545 = pneg %p544
      // Predicated region
      $region69: #{tpu_custom_call.1} parent=5 // pred_check
        _
      $region70: #{tpu_custom_call.1} parent=5 // pred_check_branch
        %547 = sbr.rel (%p544) target = $region72
      $region71: #{tpu_custom_call.1} parent=5 // pred_region
        %s548 = ssub.s32 %s36, 1
        %s549 = sand.u32 %s63, 1
        %s550 = scalar_lea.sflag [#allocation5], %s549
        %s551 = sand.u32 %s63, 1
        %s552 = smul.addr %s551, 8
        %s553 = scalar_lea.vmem [#allocation4], %s552
        // Predicated region
        $region73: #{tpu_custom_call.1} parent=71 // pred_check
          %p554 = pneg %p76
        $region74: #{tpu_custom_call.1} parent=71 // pred_check_branch
          %556 = sbr.rel (%p554) target = $region76
        $region75: #{tpu_custom_call.1} parent=71 // pred_region
          %557 = dma.done %s550, 128
        $region76: #{tpu_custom_call.1} parent=71 // pred_fallthru
          _
        %s558 = sand.u32 %s41, 1
        %s559 = scalar_lea.sflag [#allocation8], %s558
        %s560 = sand.u32 %s89, 1
        %s561 = smul.addr %s560, 8
        %s562 = scalar_lea.vmem [#allocation7], %s561
        // Predicated region
        $region77: #{tpu_custom_call.1} parent=71 // pred_check
          %p563 = pneg %p102
        $region78: #{tpu_custom_call.1} parent=71 // pred_check_branch
          %565 = sbr.rel (%p563) target = $region80
        $region79: #{tpu_custom_call.1} parent=71 // pred_region
          %566 = dma.done %s559, 128
        $region80: #{tpu_custom_call.1} parent=71 // pred_fallthru
          _
        %s567 = sand.u32 %s41, 1
        %s568 = scalar_lea.sflag [#allocation8], %s567
        %s569 = sand.u32 %s115, 1
        %s570 = smul.addr %s569, 8
        %s571 = scalar_lea.vmem [#allocation9], %s570
        // Predicated region
        $region81: #{tpu_custom_call.1} parent=71 // pred_check
          %p572 = pneg %p128
        $region82: #{tpu_custom_call.1} parent=71 // pred_check_branch
          %574 = sbr.rel (%p572) target = $region84
        $region83: #{tpu_custom_call.1} parent=71 // pred_region
          %575 = dma.done %s568, 128
        $region84: #{tpu_custom_call.1} parent=71 // pred_fallthru
          _
        // Predicated region
        $region85: #{tpu_custom_call.1} parent=71 // pred_check
          %p576 = pneg %p149
        $region86: #{tpu_custom_call.1} parent=71 // pred_check_branch
          %578 = sbr.rel (%p576) target = $region88
        $region87: #{tpu_custom_call.1} parent=71 // pred_region
          %579 = dma.done [#allocation11], 256
        $region88: #{tpu_custom_call.1} parent=71 // pred_fallthru
          _
        // Predicated region
        $region89: #{tpu_custom_call.1} parent=71 // pred_check
          %p580 = pneg %p212
        $region90: #{tpu_custom_call.1} parent=71 // pred_check_branch
          %582 = sbr.rel (%p580) target = $region92
        $region91: #{tpu_custom_call.1} parent=71 // pred_region
          %583 = dma.done [#allocation11], 16
        $region92: #{tpu_custom_call.1} parent=71 // pred_fallthru
          _
        // Predicated region
        $region93: #{tpu_custom_call.1} parent=71 // pred_check
          %p584 = pneg %p233
        $region94: #{tpu_custom_call.1} parent=71 // pred_check_branch
          %586 = sbr.rel (%p584) target = $region96
        $region95: #{tpu_custom_call.1} parent=71 // pred_region
          %587 = dma.done [#allocation14], 256
        $region96: #{tpu_custom_call.1} parent=71 // pred_fallthru
          _
        // Predicated region
        $region97: #{tpu_custom_call.1} parent=71 // pred_check
          %p588 = pneg %p254
        $region98: #{tpu_custom_call.1} parent=71 // pred_check_branch
          %590 = sbr.rel (%p588) target = $region100
        $region99: #{tpu_custom_call.1} parent=71 // pred_region
          %591 = dma.done [#allocation14], 16
        $region100: #{tpu_custom_call.1} parent=71 // pred_fallthru
          _
        // Predicated region
        $region101: #{tpu_custom_call.1} parent=71 // pred_check
          %p592 = pneg %p296
        $region102: #{tpu_custom_call.1} parent=71 // pred_check_branch
          %594 = sbr.rel (%p592) target = $region104
        $region103: #{tpu_custom_call.1} parent=71 // pred_region
          %595 = dma.done [#allocation17], 16
        $region104: #{tpu_custom_call.1} parent=71 // pred_fallthru
          _
        %s596 = sand.u32 %s63, 1
        %s597 = scalar_lea.sflag [#allocation5], %s596
        %s598 = sand.u32 %s63, 1
        %s599 = smul.addr %s598, 8
        %s600 = scalar_lea.vmem [#allocation4], %s599
        %p601 = pneg %p76
        %p602 = pneg %p73
        %s603 = sand.u32 %s41, 1
        %s604 = scalar_lea.sflag [#allocation8], %s603
        %s605 = sand.u32 %s89, 1
        %s606 = smul.addr %s605, 8
        %s607 = scalar_lea.vmem [#allocation7], %s606
        %p608 = pneg %p102
        %p609 = pneg %p99
        %s610 = sand.u32 %s41, 1
        %s611 = scalar_lea.sflag [#allocation8], %s610
        %s612 = sand.u32 %s115, 1
        %s613 = smul.addr %s612, 8
        %s614 = scalar_lea.vmem [#allocation9], %s613
        %p615 = pneg %p128
        %p616 = pneg %p125
        %p617 = pneg %p149
        %p618 = pneg %p146
        %p619 = pneg %p170
        %p620 = pneg %p167
        %p621 = pneg %p191
        %p622 = pneg %p188
        %p623 = pneg %p212
        %p624 = pneg %p209
        %p625 = pneg %p233
        %p626 = pneg %p230
        %p627 = pneg %p254
        %p628 = pneg %p251
        %p629 = pneg %p275
        %p630 = pneg %p272
        %p631 = pneg %p296
        %p632 = pneg %p293
        %p633 = pneg %p317
        %p634 = pneg %p314
        %p635 = pneg %p338
        %p636 = pneg %p335
        %p637 = pneg %p366
        %p638 = pneg %p363
        %s639 = sand.u32 %s353, 1
        %s640 = scalar_lea.sflag [#allocation6], %s639
        %s641 = sand.u32 %s353, 1
        %s642 = smul.addr %s641, 8
        %s643 = scalar_lea.vmem [#allocation18], %s642
        %p644 = pneg %p394
        %p645 = pneg %p391
        %s646 = sand.u32 %s381, 1
        %s647 = scalar_lea.sflag [#allocation20], %s646
        %s648 = sand.u32 %s381, 1
        %s649 = smul.addr %s648, 8
        %s650 = scalar_lea.vmem [#allocation19], %s649
        %p652 = scmp.eq.s32.totalorder %s46, 0
        // Predicated region
        $region105: #{tpu_custom_call.1} parent=71 // pred_check
          %p653 = pneg %p652
        $region106: #{tpu_custom_call.1} parent=71 // pred_check_branch
          %655 = sbr.rel (%p653) target = $region108
        $region107: #{tpu_custom_call.1} parent=71 // pred_region
          %v656 = vld [vmem:[%s562] sm:$0xff]
          %v657 = vpack.c.bf16 %v656, %v656
          %v658 = vld [vmem:[%s571] sm:$0xff]
          %v659 = vpack.c.bf16 %v658, %v658
          %v660 = vld [vmem:[%s5] sm:$0xf]
          %v661 = vld [vmem:[%s5 + $0x4] sm:$0xf]
          %v662 = vld [vmem:[%s5 + $0x8] sm:$0xf]
          %v663 = vld [vmem:[%s5 + $0xc] sm:$0xf]
          %v664 = vld [vmem:[#allocation12] sm:$0x1]
          %v666 = vlaneseq
          %v667 = vshrl.u32 %v666, 7
          %v668 = vsub.s32 0, %v667
          %v669 = vrot.slane %v664, %v668
          %v675 = vunpack.c.l.b16 %v660
          %v676 = vunpack.c.l.b16 %v661
          %v677 = vunpack.c.l.b16 %v662
          %v678 = vunpack.c.l.b16 %v663
          %v679 = vpack.c.b16 %v676, %v675
          %v680 = vpack.c.b16 %v678, %v677
          %vm683 = vcmask 261120
          %v685 = vsel %vm683, %v657, 0
          %687 = vmatprep.subr.bf16.mxu0 0
          %688 = vmatpush1.bf16.msra.mxu0 %v679
          %689 = vmatprep.subr.bf16.mxu0 0
          %690 = vmatpush1.bf16.msra.mxu0 %v680
          %691 = vmatprep.subr.bf16.mxu0 0
          %692 = vmatpush1.bf16.msra.mxu0 0
          %693 = vmatprep.subr.bf16.mxu0 0
          %694 = vmatpush1.bf16.msra.mxu0 0
          %695 = vmatprep.subr.bf16.mxu0 0
          %696 = vmatpush1.bf16.msra.mxu0 0
          %697 = vmatprep.subr.bf16.mxu0 0
          %698 = vmatpush1.bf16.msra.mxu0 0
          %699 = vmatprep.subr.bf16.mxu0 0
          %700 = vmatpush1.bf16.msra.mxu0 0
          %701 = vmatprep.subr.bf16.mxu0 0
          %702 = vmatpush1.bf16.msra.mxu0 0
          %703 = vmatprep.subr.bf16.mxu0 0
          %704 = vmatpush1.bf16.msra.mxu0 0
          %705 = vmatprep.subr.bf16.mxu0 0
          %706 = vmatpush1.bf16.msra.mxu0 0
          %707 = vmatprep.subr.bf16.mxu0 0
          %708 = vmatpush1.bf16.msra.mxu0 0
          %709 = vmatprep.subr.bf16.mxu0 0
          %710 = vmatpush1.bf16.msra.mxu0 0
          %711 = vmatprep.subr.bf16.mxu0 0
          %712 = vmatpush1.bf16.msra.mxu0 0
          %713 = vmatprep.subr.bf16.mxu0 0
          %714 = vmatpush1.bf16.msra.mxu0 0
          %715 = vmatprep.subr.bf16.mxu0 0
          %716 = vmatpush1.bf16.msra.mxu0 0
          %717 = vmatprep.subr.bf16.mxu0 0
          %718 = vmatpush1.bf16.msra.mxu0 0
          %719 = vmatprep.mubr.bf16.mxu0 0
          %720 = vmatmul.mubr.bf16.gmra.mrb[0].mxu0 %v685
          %v721 = vpop.f32.mrb[0].mxu0
          %v722 = vadd.f32 %v669, %v721
          %v723 = vpop.f32.mrb[0].mxu0
          %v724 = vpop.f32.mrb[0].mxu0
          %v725 = vpop.f32.mrb[0].mxu0
          %726 = vdwg.mxu0
          %v727 = vld [vmem:[#allocation13] sm:$0xf]
          %v728 = vld [vmem:[#allocation13 + $0x4] sm:$0xf]
          %v729 = vld [vmem:[#allocation13 + $0x8] sm:$0xf]
          %v730 = vld [vmem:[#allocation13 + $0xc] sm:$0xf]
          %v731 = vld [vmem:[#allocation15] sm:$0x1]
          %v733 = vlaneseq
          %v734 = vshrl.u32 %v733, 7
          %v735 = vsub.s32 0, %v734
          %v736 = vrot.slane %v731, %v735
          %v742 = vunpack.c.l.b16 %v727
          %v743 = vunpack.c.l.b16 %v728
          %v744 = vunpack.c.l.b16 %v729
          %v745 = vunpack.c.l.b16 %v730
          %v746 = vpack.c.b16 %v743, %v742
          %v747 = vpack.c.b16 %v745, %v744
          %v751 = vsel %vm683, %v659, 0
          %753 = vmatprep.subr.bf16.mxu0 0
          %754 = vmatpush1.bf16.msra.mxu0 %v746
          %755 = vmatprep.subr.bf16.mxu0 0
          %756 = vmatpush1.bf16.msra.mxu0 %v747
          %757 = vmatprep.subr.bf16.mxu0 0
          %758 = vmatpush1.bf16.msra.mxu0 0
          %759 = vmatprep.subr.bf16.mxu0 0
          %760 = vmatpush1.bf16.msra.mxu0 0
          %761 = vmatprep.subr.bf16.mxu0 0
          %762 = vmatpush1.bf16.msra.mxu0 0
          %763 = vmatprep.subr.bf16.mxu0 0
          %764 = vmatpush1.bf16.msra.mxu0 0
          %765 = vmatprep.subr.bf16.mxu0 0
          %766 = vmatpush1.bf16.msra.mxu0 0
          %767 = vmatprep.subr.bf16.mxu0 0
          %768 = vmatpush1.bf16.msra.mxu0 0
          %769 = vmatprep.subr.bf16.mxu0 0
          %770 = vmatpush1.bf16.msra.mxu0 0
          %771 = vmatprep.subr.bf16.mxu0 0
          %772 = vmatpush1.bf16.msra.mxu0 0
          %773 = vmatprep.subr.bf16.mxu0 0
          %774 = vmatpush1.bf16.msra.mxu0 0
          %775 = vmatprep.subr.bf16.mxu0 0
          %776 = vmatpush1.bf16.msra.mxu0 0
          %777 = vmatprep.subr.bf16.mxu0 0
          %778 = vmatpush1.bf16.msra.mxu0 0
          %779 = vmatprep.subr.bf16.mxu0 0
          %780 = vmatpush1.bf16.msra.mxu0 0
          %781 = vmatprep.subr.bf16.mxu0 0
          %782 = vmatpush1.bf16.msra.mxu0 0
          %783 = vmatprep.subr.bf16.mxu0 0
          %784 = vmatpush1.bf16.msra.mxu0 0
          %785 = vmatprep.mubr.bf16.mxu0 0
          %786 = vmatmul.mubr.bf16.gmra.mrb[0].mxu0 %v751
          %v787 = vpop.f32.mrb[0].mxu0
          %v788 = vadd.f32 %v736, %v787
          %v789 = vpop.f32.mrb[0].mxu0
          %v790 = vpop.f32.mrb[0].mxu0
          %v791 = vpop.f32.mrb[0].mxu0
          %792 = vdwg.mxu0
          %v793 = vpack.c.bf16 %v722, %v722
          %vm794 = vcmask 257024
          %795 = vst.msk [vmem:[#allocation2] sm:$0xf] %vm794, %v793
          %v796 = vld [vmem:[%s11] sm:$0xf]
          %v798 = vunpack.c.l.b16 %v796
          %v799 = vpack.c.b16 %v798, %v798
          %vm801 = vcmask 261124
          %802 = vst.msk [vmem:[#allocation2] sm:$0xf0] %vm801, %v799
          %v803 = vpack.c.bf16 %v788, %v788
          %804 = vst.msk [vmem:[#allocation3] sm:$0xf] %vm794, %v803
          %v805 = vld [vmem:[%s12] sm:$0xf]
          %v807 = vunpack.c.l.b16 %v805
          %v808 = vpack.c.b16 %v807, %v807
          %810 = vst.msk [vmem:[#allocation3] sm:$0xf0] %vm801, %v808
        $region108: #{tpu_custom_call.1} parent=71 // pred_fallthru
          _
        %v811 = vld [vmem:[%s553] sm:$0xff]
        %v812 = vpack.c.bf16 %v811, %v811
        %v813 = vld [vmem:[#allocation10] sm:$0xf]
        %v814 = vld [vmem:[#allocation10 + $0x4] sm:$0xf]
        %v815 = vld [vmem:[#allocation10 + $0x8] sm:$0xf]
        %v816 = vld [vmem:[#allocation10 + $0xc] sm:$0xf]
        %v817 = vld [vmem:[%s4] sm:$0x1]
        %v819 = vlaneseq
        %v820 = vshrl.u32 %v819, 7
        %v821 = vsub.s32 0, %v820
        %v822 = vrot.slane %v817, %v821
        %v828 = vunpack.c.l.b16 %v813
        %v829 = vunpack.c.l.b16 %v814
        %v830 = vunpack.c.l.b16 %v815
        %v831 = vunpack.c.l.b16 %v816
        %v832 = vpack.c.b16 %v829, %v828
        %v833 = vpack.c.b16 %v831, %v830
        %vm836 = vcmask 261120
        %v838 = vsel %vm836, %v812, 0
        %840 = vmatprep.subr.bf16.mxu0 0
        %841 = vmatpush1.bf16.msra.mxu0 %v832
        %842 = vmatprep.subr.bf16.mxu0 0
        %843 = vmatpush1.bf16.msra.mxu0 %v833
        %844 = vmatprep.subr.bf16.mxu0 0
        %845 = vmatpush1.bf16.msra.mxu0 0
        %846 = vmatprep.subr.bf16.mxu0 0
        %847 = vmatpush1.bf16.msra.mxu0 0
        %848 = vmatprep.subr.bf16.mxu0 0
        %849 = vmatpush1.bf16.msra.mxu0 0
        %850 = vmatprep.subr.bf16.mxu0 0
        %851 = vmatpush1.bf16.msra.mxu0 0
        %852 = vmatprep.subr.bf16.mxu0 0
        %853 = vmatpush1.bf16.msra.mxu0 0
        %854 = vmatprep.subr.bf16.mxu0 0
        %855 = vmatpush1.bf16.msra.mxu0 0
        %856 = vmatprep.subr.bf16.mxu0 0
        %857 = vmatpush1.bf16.msra.mxu0 0
        %858 = vmatprep.subr.bf16.mxu0 0
        %859 = vmatpush1.bf16.msra.mxu0 0
        %860 = vmatprep.subr.bf16.mxu0 0
        %861 = vmatpush1.bf16.msra.mxu0 0
        %862 = vmatprep.subr.bf16.mxu0 0
        %863 = vmatpush1.bf16.msra.mxu0 0
        %864 = vmatprep.subr.bf16.mxu0 0
        %865 = vmatpush1.bf16.msra.mxu0 0
        %866 = vmatprep.subr.bf16.mxu0 0
        %867 = vmatpush1.bf16.msra.mxu0 0
        %868 = vmatprep.subr.bf16.mxu0 0
        %869 = vmatpush1.bf16.msra.mxu0 0
        %870 = vmatprep.subr.bf16.mxu0 0
        %871 = vmatpush1.bf16.msra.mxu0 0
        %872 = vmatprep.mubr.bf16.mxu0 0
        %873 = vmatmul.mubr.bf16.gmra.mrb[0].mxu0 %v838
        %v874 = vpop.f32.mrb[0].mxu0
        %v875 = vadd.f32 %v822, %v874
        %v876 = vpop.f32.mrb[0].mxu0
        %v877 = vpop.f32.mrb[0].mxu0
        %v878 = vpop.f32.mrb[0].mxu0
        %879 = vdwg.mxu0
        %v880 = vmul.f32 %v875, 0.35355338
        %v881 = vpack.c.bf16 %v880, %v880
        %v882 = vld [vmem:[#allocation2] sm:$0xff]
        %v883 = vld [vmem:[#allocation3] sm:$0xff]
        %vm884 = vcmask 64512
        %v886 = vsel %vm884, %v881, 0
        %v889 = vsel %vm884, %v882, 0
        %891 = vmatprep.subr.bf16.mxu0 0
        %892 = vmatpush1.bf16.xpose.msra.mxu0 %v889
        %893 = vmatprep.subr.bf16.mxu0 0
        %894 = vmatpush1.bf16.xpose.msra.mxu0 0
        %895 = vmatprep.subr.bf16.mxu0 0
        %896 = vmatpush1.bf16.xpose.msra.mxu0 0
        %897 = vmatprep.subr.bf16.mxu0 0
        %898 = vmatpush1.bf16.xpose.msra.mxu0 0
        %899 = vmatprep.subr.bf16.mxu0 0
        %900 = vmatpush1.bf16.xpose.msra.mxu0 0
        %901 = vmatprep.subr.bf16.mxu0 0
        %902 = vmatpush1.bf16.xpose.msra.mxu0 0
        %903 = vmatprep.subr.bf16.mxu0 0
        %904 = vmatpush1.bf16.xpose.msra.mxu0 0
        %905 = vmatprep.subr.bf16.mxu0 0
        %906 = vmatpush1.bf16.xpose.msra.mxu0 0
        %907 = vmatprep.subr.bf16.mxu0 0
        %908 = vmatpush1.bf16.xpose.msra.mxu0 0
        %909 = vmatprep.subr.bf16.mxu0 0
        %910 = vmatpush1.bf16.xpose.msra.mxu0 0
        %911 = vmatprep.subr.bf16.mxu0 0
        %912 = vmatpush1.bf16.xpose.msra.mxu0 0
        %913 = vmatprep.subr.bf16.mxu0 0
        %914 = vmatpush1.bf16.xpose.msra.mxu0 0
        %915 = vmatprep.subr.bf16.mxu0 0
        %916 = vmatpush1.bf16.xpose.msra.mxu0 0
        %917 = vmatprep.subr.bf16.mxu0 0
        %918 = vmatpush1.bf16.xpose.msra.mxu0 0
        %919 = vmatprep.subr.bf16.mxu0 0
        %920 = vmatpush1.bf16.xpose.msra.mxu0 0
        %921 = vmatprep.subr.bf16.mxu0 0
        %922 = vmatpush1.bf16.xpose.msra.mxu0 0
        %923 = vmatprep.mubr.bf16.mxu0 0
        %924 = vmatmul.mubr.bf16.gmra.mrb[0].mxu0 %v886
        %v925 = vpop.f32.mrb[0].mxu0
        %v926 = vadd.f32 0.0, %v925
        %v927 = vpop.f32.mrb[0].mxu0
        %v928 = vpop.f32.mrb[0].mxu0
        %v929 = vpop.f32.mrb[0].mxu0
        %930 = vdwg.mxu0
        %vm931 = vcmask 130048
        %v932 = vsel %vm931, %v926, -inf
        %933 = vmax.xlane.f32.xlu0 %v932
        %v934 = vpop.xlane.xlu0 %933
        %v935 = vsub.f32 %v926, %v934
        %v936 = vmul.f32 %v935, 1.442695
        %v937 = vpow.pop %v936
        %v938 = vsel %vm931, %v937, 0.0
        %939 = vadd.xlane.f32.xlu0 %v938
        %v940 = vpop.xlane.xlu0 %939
        %v941 = vrcp.pop %v940
        %v942 = vmul.f32 %v937, %v941
        %943 = vst.msk [vmem:[%s650] sm:$0xff] %vm931, %v942
        %v944 = vpack.c.bf16 %v942, %v942
        %v946 = vsel %vm931, %v944, 0
        %948 = vmatprep.subr.bf16.mxu0 0
        %949 = vmatpush1.bf16.msra.mxu0 %v883
        %950 = vmatprep.subr.bf16.mxu0 0
        %951 = vmatpush1.bf16.msra.mxu0 0
        %952 = vmatprep.subr.bf16.mxu0 0
        %953 = vmatpush1.bf16.msra.mxu0 0
        %954 = vmatprep.subr.bf16.mxu0 0
        %955 = vmatpush1.bf16.msra.mxu0 0
        %956 = vmatprep.subr.bf16.mxu0 0
        %957 = vmatpush1.bf16.msra.mxu0 0
        %958 = vmatprep.subr.bf16.mxu0 0
        %959 = vmatpush1.bf16.msra.mxu0 0
        %960 = vmatprep.subr.bf16.mxu0 0
        %961 = vmatpush1.bf16.msra.mxu0 0
        %962 = vmatprep.subr.bf16.mxu0 0
        %963 = vmatpush1.bf16.msra.mxu0 0
        %964 = vmatprep.subr.bf16.mxu0 0
        %965 = vmatpush1.bf16.msra.mxu0 0
        %966 = vmatprep.subr.bf16.mxu0 0
        %967 = vmatpush1.bf16.msra.mxu0 0
        %968 = vmatprep.subr.bf16.mxu0 0
        %969 = vmatpush1.bf16.msra.mxu0 0
        %970 = vmatprep.subr.bf16.mxu0 0
        %971 = vmatpush1.bf16.msra.mxu0 0
        %972 = vmatprep.subr.bf16.mxu0 0
        %973 = vmatpush1.bf16.msra.mxu0 0
        %974 = vmatprep.subr.bf16.mxu0 0
        %975 = vmatpush1.bf16.msra.mxu0 0
        %976 = vmatprep.subr.bf16.mxu0 0
        %977 = vmatpush1.bf16.msra.mxu0 0
        %978 = vmatprep.subr.bf16.mxu0 0
        %979 = vmatpush1.bf16.msra.mxu0 0
        %980 = vmatprep.mubr.bf16.mxu0 0
        %981 = vmatmul.mubr.bf16.gmra.mrb[0].mxu0 %v946
        %v982 = vpop.f32.mrb[0].mxu0
        %v983 = vadd.f32 0.0, %v982
        %v984 = vpop.f32.mrb[0].mxu0
        %v985 = vpop.f32.mrb[0].mxu0
        %v986 = vpop.f32.mrb[0].mxu0
        %987 = vdwg.mxu0
        %v988 = vpack.c.bf16 %v983, %v983
        %v989 = vld [vmem:[%s9] sm:$0xf]
        %991 = vrot.lane.b32.xlu0 %v881, 120
        %v992 = vpop.permute.xlu0 %991
        %994 = vrot.lane.b32.xlu0 %v882, 120
        %v995 = vpop.permute.xlu0 %994
        %v997 = vsel %vm884, %v992, 0
        %v1000 = vsel %vm884, %v995, 0
        %1002 = vmatprep.subr.bf16.mxu0 0
        %1003 = vmatpush1.bf16.xpose.msra.mxu0 %v1000
        %1004 = vmatprep.subr.bf16.mxu0 0
        %1005 = vmatpush1.bf16.xpose.msra.mxu0 0
        %1006 = vmatprep.subr.bf16.mxu0 0
        %1007 = vmatpush1.bf16.xpose.msra.mxu0 0
        %1008 = vmatprep.subr.bf16.mxu0 0
        %1009 = vmatpush1.bf16.xpose.msra.mxu0 0
        %1010 = vmatprep.subr.bf16.mxu0 0
        %1011 = vmatpush1.bf16.xpose.msra.mxu0 0
        %1012 = vmatprep.subr.bf16.mxu0 0
        %1013 = vmatpush1.bf16.xpose.msra.mxu0 0
        %1014 = vmatprep.subr.bf16.mxu0 0
        %1015 = vmatpush1.bf16.xpose.msra.mxu0 0
        %1016 = vmatprep.subr.bf16.mxu0 0
        %1017 = vmatpush1.bf16.xpose.msra.mxu0 0
        %1018 = vmatprep.subr.bf16.mxu0 0
        %1019 = vmatpush1.bf16.xpose.msra.mxu0 0
        %1020 = vmatprep.subr.bf16.mxu0 0
        %1021 = vmatpush1.bf16.xpose.msra.mxu0 0
        %1022 = vmatprep.subr.bf16.mxu0 0
        %1023 = vmatpush1.bf16.xpose.msra.mxu0 0
        %1024 = vmatprep.subr.bf16.mxu0 0
        %1025 = vmatpush1.bf16.xpose.msra.mxu0 0
        %1026 = vmatprep.subr.bf16.mxu0 0
        %1027 = vmatpush1.bf16.xpose.msra.mxu0 0
        %1028 = vmatprep.subr.bf16.mxu0 0
        %1029 = vmatpush1.bf16.xpose.msra.mxu0 0
        %1030 = vmatprep.subr.bf16.mxu0 0
        %1031 = vmatpush1.bf16.xpose.msra.mxu0 0
        %1032 = vmatprep.subr.bf16.mxu0 0
        %1033 = vmatpush1.bf16.xpose.msra.mxu0 0
        %1034 = vmatprep.mubr.bf16.mxu0 0
        %1035 = vmatmul.mubr.bf16.gmra.mrb[0].mxu0 %v997
        %v1036 = vpop.f32.mrb[0].mxu0
        %v1037 = vadd.f32 0.0, %v1036
        %v1038 = vpop.f32.mrb[0].mxu0
        %v1039 = vpop.f32.mrb[0].mxu0
        %v1040 = vpop.f32.mrb[0].mxu0
        %1041 = vdwg.mxu0
        %v1042 = vsel %vm931, %v1037, -inf
        %1043 = vmax.xlane.f32.xlu0 %v1042
        %v1044 = vpop.xlane.xlu0 %1043
        %v1045 = vsub.f32 %v1037, %v1044
        %v1046 = vmul.f32 %v1045, 1.442695
        %v1047 = vpow.pop %v1046
        %v1048 = vsel %vm931, %v1047, 0.0
        %1049 = vadd.xlane.f32.xlu0 %v1048
        %v1050 = vpop.xlane.xlu0 %1049
        %v1051 = vrcp.pop %v1050
        %v1052 = vmul.f32 %v1047, %v1051
        %1054 = vrot.lane.b32.xlu0 %v1052, 16
        %v1055 = vpop.permute.xlu0 %1054
        %vm1057 = vcmask 261248
        %1058 = vst.msk [vmem:[%s650] sm:$0xff] %vm1057, %v1055
        %v1059 = vpack.c.bf16 %v1052, %v1052
        %1061 = vrot.lane.b32.xlu0 %v883, 120
        %v1062 = vpop.permute.xlu0 %1061
        %v1065 = vsel %vm931, %v1059, 0
        %1067 = vmatprep.subr.bf16.mxu0 0
        %1068 = vmatpush1.bf16.msra.mxu0 %v1062
        %1069 = vmatprep.subr.bf16.mxu0 0
        %1070 = vmatpush1.bf16.msra.mxu0 0
        %1071 = vmatprep.subr.bf16.mxu0 0
        %1072 = vmatpush1.bf16.msra.mxu0 0
        %1073 = vmatprep.subr.bf16.mxu0 0
        %1074 = vmatpush1.bf16.msra.mxu0 0
        %1075 = vmatprep.subr.bf16.mxu0 0
        %1076 = vmatpush1.bf16.msra.mxu0 0
        %1077 = vmatprep.subr.bf16.mxu0 0
        %1078 = vmatpush1.bf16.msra.mxu0 0
        %1079 = vmatprep.subr.bf16.mxu0 0
        %1080 = vmatpush1.bf16.msra.mxu0 0
        %1081 = vmatprep.subr.bf16.mxu0 0
        %1082 = vmatpush1.bf16.msra.mxu0 0
        %1083 = vmatprep.subr.bf16.mxu0 0
        %1084 = vmatpush1.bf16.msra.mxu0 0
        %1085 = vmatprep.subr.bf16.mxu0 0
        %1086 = vmatpush1.bf16.msra.mxu0 0
        %1087 = vmatprep.subr.bf16.mxu0 0
        %1088 = vmatpush1.bf16.msra.mxu0 0
        %1089 = vmatprep.subr.bf16.mxu0 0
        %1090 = vmatpush1.bf16.msra.mxu0 0
        %1091 = vmatprep.subr.bf16.mxu0 0
        %1092 = vmatpush1.bf16.msra.mxu0 0
        %1093 = vmatprep.subr.bf16.mxu0 0
        %1094 = vmatpush1.bf16.msra.mxu0 0
        %1095 = vmatprep.subr.bf16.mxu0 0
        %1096 = vmatpush1.bf16.msra.mxu0 0
        %1097 = vmatprep.subr.bf16.mxu0 0
        %1098 = vmatpush1.bf16.msra.mxu0 0
        %1099 = vmatprep.mubr.bf16.mxu0 0
        %1100 = vmatmul.mubr.bf16.gmra.mrb[0].mxu0 %v1065
        %v1101 = vpop.f32.mrb[0].mxu0
        %v1102 = vadd.f32 0.0, %v1101
        %v1103 = vpop.f32.mrb[0].mxu0
        %v1104 = vpop.f32.mrb[0].mxu0
        %v1105 = vpop.f32.mrb[0].mxu0
        %1106 = vdwg.mxu0
        %v1107 = vpack.c.bf16 %v1102, %v1102
        %s1108 = scalar_lea.vmem %s9, 4
        %v1109 = vld [vmem:[%s1108] sm:$0xf]
        %v1111 = vsel %vm884, %v1107, 0
        %vm1113 = vcmask 1043456
        %v1115 = vsel %vm1113, %v1109, 0
        %1117 = vmatprep.subr.bf16.mxu0 0
        %1118 = vmatpush1.bf16.msra.mxu0 %v1115
        %1119 = vmatprep.subr.bf16.mxu0 0
        %1120 = vmatpush1.bf16.msra.mxu0 0
        %1121 = vmatprep.subr.bf16.mxu0 0
        %1122 = vmatpush1.bf16.msra.mxu0 0
        %1123 = vmatprep.subr.bf16.mxu0 0
        %1124 = vmatpush1.bf16.msra.mxu0 0
        %1125 = vmatprep.subr.bf16.mxu0 0
        %1126 = vmatpush1.bf16.msra.mxu0 0
        %1127 = vmatprep.subr.bf16.mxu0 0
        %1128 = vmatpush1.bf16.msra.mxu0 0
        %1129 = vmatprep.subr.bf16.mxu0 0
        %1130 = vmatpush1.bf16.msra.mxu0 0
        %1131 = vmatprep.subr.bf16.mxu0 0
        %1132 = vmatpush1.bf16.msra.mxu0 0
        %1133 = vmatprep.subr.bf16.mxu0 0
        %1134 = vmatpush1.bf16.msra.mxu0 0
        %1135 = vmatprep.subr.bf16.mxu0 0
        %1136 = vmatpush1.bf16.msra.mxu0 0
        %1137 = vmatprep.subr.bf16.mxu0 0
        %1138 = vmatpush1.bf16.msra.mxu0 0
        %1139 = vmatprep.subr.bf16.mxu0 0
        %1140 = vmatpush1.bf16.msra.mxu0 0
        %1141 = vmatprep.subr.bf16.mxu0 0
        %1142 = vmatpush1.bf16.msra.mxu0 0
        %1143 = vmatprep.subr.bf16.mxu0 0
        %1144 = vmatpush1.bf16.msra.mxu0 0
        %1145 = vmatprep.subr.bf16.mxu0 0
        %1146 = vmatpush1.bf16.msra.mxu0 0
        %1147 = vmatprep.subr.bf16.mxu0 0
        %1148 = vmatpush1.bf16.msra.mxu0 0
        %1149 = vmatprep.mubr.bf16.mxu0 0
        %1150 = vmatmul.mubr.bf16.gmra.mrb[0].mxu0 %v1111
        %v1151 = vpop.f32.mrb[0].mxu0
        %v1152 = vadd.f32 0.0, %v1151
        %v1153 = vpop.f32.mrb[0].mxu0
        %v1154 = vpop.f32.mrb[0].mxu0
        %v1155 = vpop.f32.mrb[0].mxu0
        %1156 = vdwg.mxu0
        %v1158 = vsel %vm884, %v988, 0
        %v1161 = vsel %vm1113, %v989, 0
        %1163 = vmatprep.subr.bf16.mxu0 0
        %1164 = vmatpush1.bf16.msra.mxu0 %v1161
        %1165 = vmatprep.subr.bf16.mxu0 0
        %1166 = vmatpush1.bf16.msra.mxu0 0
        %1167 = vmatprep.subr.bf16.mxu0 0
        %1168 = vmatpush1.bf16.msra.mxu0 0
        %1169 = vmatprep.subr.bf16.mxu0 0
        %1170 = vmatpush1.bf16.msra.mxu0 0
        %1171 = vmatprep.subr.bf16.mxu0 0
        %1172 = vmatpush1.bf16.msra.mxu0 0
        %1173 = vmatprep.subr.bf16.mxu0 0
        %1174 = vmatpush1.bf16.msra.mxu0 0
        %1175 = vmatprep.subr.bf16.mxu0 0
        %1176 = vmatpush1.bf16.msra.mxu0 0
        %1177 = vmatprep.subr.bf16.mxu0 0
        %1178 = vmatpush1.bf16.msra.mxu0 0
        %1179 = vmatprep.subr.bf16.mxu0 0
        %1180 = vmatpush1.bf16.msra.mxu0 0
        %1181 = vmatprep.subr.bf16.mxu0 0
        %1182 = vmatpush1.bf16.msra.mxu0 0
        %1183 = vmatprep.subr.bf16.mxu0 0
        %1184 = vmatpush1.bf16.msra.mxu0 0
        %1185 = vmatprep.subr.bf16.mxu0 0
        %1186 = vmatpush1.bf16.msra.mxu0 0
        %1187 = vmatprep.subr.bf16.mxu0 0
        %1188 = vmatpush1.bf16.msra.mxu0 0
        %1189 = vmatprep.subr.bf16.mxu0 0
        %1190 = vmatpush1.bf16.msra.mxu0 0
        %1191 = vmatprep.subr.bf16.mxu0 0
        %1192 = vmatpush1.bf16.msra.mxu0 0
        %1193 = vmatprep.subr.bf16.mxu0 0
        %1194 = vmatpush1.bf16.msra.mxu0 0
        %1195 = vmatprep.mubr.bf16.mxu0 0
        %1196 = vmatmul.mubr.bf16.gmra.mrb[0].mxu0 %v1158
        %v1197 = vpop.f32.mrb[0].mxu0
        %v1198 = vadd.f32 %v1152, %v1197
        %v1199 = vpop.f32.mrb[0].mxu0
        %v1200 = vpop.f32.mrb[0].mxu0
        %v1201 = vpop.f32.mrb[0].mxu0
        %1202 = vdwg.mxu0
        %1203 = vrot.lane.b32.xlu0 %v881, 112
        %v1204 = vpop.permute.xlu0 %1203
        %1205 = vrot.lane.b32.xlu0 %v882, 112
        %v1206 = vpop.permute.xlu0 %1205
        %v1208 = vsel %vm884, %v1204, 0
        %v1211 = vsel %vm884, %v1206, 0
        %1213 = vmatprep.subr.bf16.mxu0 0
        %1214 = vmatpush1.bf16.xpose.msra.mxu0 %v1211
        %1215 = vmatprep.subr.bf16.mxu0 0
        %1216 = vmatpush1.bf16.xpose.msra.mxu0 0
        %1217 = vmatprep.subr.bf16.mxu0 0
        %1218 = vmatpush1.bf16.xpose.msra.mxu0 0
        %1219 = vmatprep.subr.bf16.mxu0 0
        %1220 = vmatpush1.bf16.xpose.msra.mxu0 0
        %1221 = vmatprep.subr.bf16.mxu0 0
        %1222 = vmatpush1.bf16.xpose.msra.mxu0 0
        %1223 = vmatprep.subr.bf16.mxu0 0
        %1224 = vmatpush1.bf16.xpose.msra.mxu0 0
        %1225 = vmatprep.subr.bf16.mxu0 0
        %1226 = vmatpush1.bf16.xpose.msra.mxu0 0
        %1227 = vmatprep.subr.bf16.mxu0 0
        %1228 = vmatpush1.bf16.xpose.msra.mxu0 0
        %1229 = vmatprep.subr.bf16.mxu0 0
        %1230 = vmatpush1.bf16.xpose.msra.mxu0 0
        %1231 = vmatprep.subr.bf16.mxu0 0
        %1232 = vmatpush1.bf16.xpose.msra.mxu0 0
        %1233 = vmatprep.subr.bf16.mxu0 0
        %1234 = vmatpush1.bf16.xpose.msra.mxu0 0
        %1235 = vmatprep.subr.bf16.mxu0 0
        %1236 = vmatpush1.bf16.xpose.msra.mxu0 0
        %1237 = vmatprep.subr.bf16.mxu0 0
        %1238 = vmatpush1.bf16.xpose.msra.mxu0 0
        %1239 = vmatprep.subr.bf16.mxu0 0
        %1240 = vmatpush1.bf16.xpose.msra.mxu0 0
        %1241 = vmatprep.subr.bf16.mxu0 0
        %1242 = vmatpush1.bf16.xpose.msra.mxu0 0
        %1243 = vmatprep.subr.bf16.mxu0 0
        %1244 = vmatpush1.bf16.xpose.msra.mxu0 0
        %1245 = vmatprep.mubr.bf16.mxu0 0
        %1246 = vmatmul.mubr.bf16.gmra.mrb[0].mxu0 %v1208
        %v1247 = vpop.f32.mrb[0].mxu0
        %v1248 = vadd.f32 0.0, %v1247
        %v1249 = vpop.f32.mrb[0].mxu0
        %v1250 = vpop.f32.mrb[0].mxu0
        %v1251 = vpop.f32.mrb[0].mxu0
        %1252 = vdwg.mxu0
        %v1253 = vsel %vm931, %v1248, -inf
        %1254 = vmax.xlane.f32.xlu0 %v1253
        %v1255 = vpop.xlane.xlu0 %1254
        %v1256 = vsub.f32 %v1248, %v1255
        %v1257 = vmul.f32 %v1256, 1.442695
        %v1258 = vpow.pop %v1257
        %v1259 = vsel %vm931, %v1258, 0.0
        %1260 = vadd.xlane.f32.xlu0 %v1259
        %v1261 = vpop.xlane.xlu0 %1260
        %v1262 = vrcp.pop %v1261
        %v1263 = vmul.f32 %v1258, %v1262
        %1265 = vrot.lane.b32.xlu0 %v1263, 32
        %v1266 = vpop.permute.xlu0 %1265
        %vm1268 = vcmask 392448
        %1269 = vst.msk [vmem:[%s650] sm:$0xff] %vm1268, %v1266
        %v1270 = vpack.c.bf16 %v1263, %v1263
        %1271 = vrot.lane.b32.xlu0 %v883, 112
        %v1272 = vpop.permute.xlu0 %1271
        %v1275 = vsel %vm931, %v1270, 0
        %1277 = vmatprep.subr.bf16.mxu0 0
        %1278 = vmatpush1.bf16.msra.mxu0 %v1272
        %1279 = vmatprep.subr.bf16.mxu0 0
        %1280 = vmatpush1.bf16.msra.mxu0 0
        %1281 = vmatprep.subr.bf16.mxu0 0
        %1282 = vmatpush1.bf16.msra.mxu0 0
        %1283 = vmatprep.subr.bf16.mxu0 0
        %1284 = vmatpush1.bf16.msra.mxu0 0
        %1285 = vmatprep.subr.bf16.mxu0 0
        %1286 = vmatpush1.bf16.msra.mxu0 0
        %1287 = vmatprep.subr.bf16.mxu0 0
        %1288 = vmatpush1.bf16.msra.mxu0 0
        %1289 = vmatprep.subr.bf16.mxu0 0
        %1290 = vmatpush1.bf16.msra.mxu0 0
        %1291 = vmatprep.subr.bf16.mxu0 0
        %1292 = vmatpush1.bf16.msra.mxu0 0
        %1293 = vmatprep.subr.bf16.mxu0 0
        %1294 = vmatpush1.bf16.msra.mxu0 0
        %1295 = vmatprep.subr.bf16.mxu0 0
        %1296 = vmatpush1.bf16.msra.mxu0 0
        %1297 = vmatprep.subr.bf16.mxu0 0
        %1298 = vmatpush1.bf16.msra.mxu0 0
        %1299 = vmatprep.subr.bf16.mxu0 0
        %1300 = vmatpush1.bf16.msra.mxu0 0
        %1301 = vmatprep.subr.bf16.mxu0 0
        %1302 = vmatpush1.bf16.msra.mxu0 0
        %1303 = vmatprep.subr.bf16.mxu0 0
        %1304 = vmatpush1.bf16.msra.mxu0 0
        %1305 = vmatprep.subr.bf16.mxu0 0
        %1306 = vmatpush1.bf16.msra.mxu0 0
        %1307 = vmatprep.subr.bf16.mxu0 0
        %1308 = vmatpush1.bf16.msra.mxu0 0
        %1309 = vmatprep.mubr.bf16.mxu0 0
        %1310 = vmatmul.mubr.bf16.gmra.mrb[0].mxu0 %v1275
        %v1311 = vpop.f32.mrb[0].mxu0
        %v1312 = vadd.f32 0.0, %v1311
        %v1313 = vpop.f32.mrb[0].mxu0
        %v1314 = vpop.f32.mrb[0].mxu0
        %v1315 = vpop.f32.mrb[0].mxu0
        %1316 = vdwg.mxu0
        %v1317 = vpack.c.bf16 %v1312, %v1312
        %s1318 = scalar_lea.vmem %s9, 8
        %v1319 = vld [vmem:[%s1318] sm:$0xf]
        %v1321 = vsel %vm884, %v1317, 0
        %v1324 = vsel %vm1113, %v1319, 0
        %1326 = vmatprep.subr.bf16.mxu0 0
        %1327 = vmatpush1.bf16.msra.mxu0 %v1324
        %1328 = vmatprep.subr.bf16.mxu0 0
        %1329 = vmatpush1.bf16.msra.mxu0 0
        %1330 = vmatprep.subr.bf16.mxu0 0
        %1331 = vmatpush1.bf16.msra.mxu0 0
        %1332 = vmatprep.subr.bf16.mxu0 0
        %1333 = vmatpush1.bf16.msra.mxu0 0
        %1334 = vmatprep.subr.bf16.mxu0 0
        %1335 = vmatpush1.bf16.msra.mxu0 0
        %1336 = vmatprep.subr.bf16.mxu0 0
        %1337 = vmatpush1.bf16.msra.mxu0 0
        %1338 = vmatprep.subr.bf16.mxu0 0
        %1339 = vmatpush1.bf16.msra.mxu0 0
        %1340 = vmatprep.subr.bf16.mxu0 0
        %1341 = vmatpush1.bf16.msra.mxu0 0
        %1342 = vmatprep.subr.bf16.mxu0 0
        %1343 = vmatpush1.bf16.msra.mxu0 0
        %1344 = vmatprep.subr.bf16.mxu0 0
        %1345 = vmatpush1.bf16.msra.mxu0 0
        %1346 = vmatprep.subr.bf16.mxu0 0
        %1347 = vmatpush1.bf16.msra.mxu0 0
        %1348 = vmatprep.subr.bf16.mxu0 0
        %1349 = vmatpush1.bf16.msra.mxu0 0
        %1350 = vmatprep.subr.bf16.mxu0 0
        %1351 = vmatpush1.bf16.msra.mxu0 0
        %1352 = vmatprep.subr.bf16.mxu0 0
        %1353 = vmatpush1.bf16.msra.mxu0 0
        %1354 = vmatprep.subr.bf16.mxu0 0
        %1355 = vmatpush1.bf16.msra.mxu0 0
        %1356 = vmatprep.subr.bf16.mxu0 0
        %1357 = vmatpush1.bf16.msra.mxu0 0
        %1358 = vmatprep.mubr.bf16.mxu0 0
        %1359 = vmatmul.mubr.bf16.gmra.mrb[0].mxu0 %v1321
        %v1360 = vpop.f32.mrb[0].mxu0
        %v1361 = vadd.f32 0.0, %v1360
        %v1362 = vpop.f32.mrb[0].mxu0
        %v1363 = vpop.f32.mrb[0].mxu0
        %v1364 = vpop.f32.mrb[0].mxu0
        %1365 = vdwg.mxu0
        %v1366 = vadd.f32 %v1198, %v1361
        %1367 = vrot.lane.b32.xlu0 %v881, 104
        %v1368 = vpop.permute.xlu0 %1367
        %1369 = vrot.lane.b32.xlu0 %v882, 104
        %v1370 = vpop.permute.xlu0 %1369
        %v1372 = vsel %vm884, %v1368, 0
        %v1375 = vsel %vm884, %v1370, 0
        %1377 = vmatprep.subr.bf16.mxu0 0
        %1378 = vmatpush1.bf16.xpose.msra.mxu0 %v1375
        %1379 = vmatprep.subr.bf16.mxu0 0
        %1380 = vmatpush1.bf16.xpose.msra.mxu0 0
        %1381 = vmatprep.subr.bf16.mxu0 0
        %1382 = vmatpush1.bf16.xpose.msra.mxu0 0
        %1383 = vmatprep.subr.bf16.mxu0 0
        %1384 = vmatpush1.bf16.xpose.msra.mxu0 0
        %1385 = vmatprep.subr.bf16.mxu0 0
        %1386 = vmatpush1.bf16.xpose.msra.mxu0 0
        %1387 = vmatprep.subr.bf16.mxu0 0
        %1388 = vmatpush1.bf16.xpose.msra.mxu0 0
        %1389 = vmatprep.subr.bf16.mxu0 0
        %1390 = vmatpush1.bf16.xpose.msra.mxu0 0
        %1391 = vmatprep.subr.bf16.mxu0 0
        %1392 = vmatpush1.bf16.xpose.msra.mxu0 0
        %1393 = vmatprep.subr.bf16.mxu0 0
        %1394 = vmatpush1.bf16.xpose.msra.mxu0 0
        %1395 = vmatprep.subr.bf16.mxu0 0
        %1396 = vmatpush1.bf16.xpose.msra.mxu0 0
        %1397 = vmatprep.subr.bf16.mxu0 0
        %1398 = vmatpush1.bf16.xpose.msra.mxu0 0
        %1399 = vmatprep.subr.bf16.mxu0 0
        %1400 = vmatpush1.bf16.xpose.msra.mxu0 0
        %1401 = vmatprep.subr.bf16.mxu0 0
        %1402 = vmatpush1.bf16.xpose.msra.mxu0 0
        %1403 = vmatprep.subr.bf16.mxu0 0
        %1404 = vmatpush1.bf16.xpose.msra.mxu0 0
        %1405 = vmatprep.subr.bf16.mxu0 0
        %1406 = vmatpush1.bf16.xpose.msra.mxu0 0
        %1407 = vmatprep.subr.bf16.mxu0 0
        %1408 = vmatpush1.bf16.xpose.msra.mxu0 0
        %1409 = vmatprep.mubr.bf16.mxu0 0
        %1410 = vmatmul.mubr.bf16.gmra.mrb[0].mxu0 %v1372
        %v1411 = vpop.f32.mrb[0].mxu0
        %v1412 = vadd.f32 0.0, %v1411
        %v1413 = vpop.f32.mrb[0].mxu0
        %v1414 = vpop.f32.mrb[0].mxu0
        %v1415 = vpop.f32.mrb[0].mxu0
        %1416 = vdwg.mxu0
        %v1417 = vsel %vm931, %v1412, -inf
        %1418 = vmax.xlane.f32.xlu0 %v1417
        %v1419 = vpop.xlane.xlu0 %1418
        %v1420 = vsub.f32 %v1412, %v1419
        %v1421 = vmul.f32 %v1420, 1.442695
        %v1422 = vpow.pop %v1421
        %v1423 = vsel %vm931, %v1422, 0.0
        %1424 = vadd.xlane.f32.xlu0 %v1423
        %v1425 = vpop.xlane.xlu0 %1424
        %v1426 = vrcp.pop %v1425
        %v1427 = vmul.f32 %v1422, %v1426
        %1429 = vrot.lane.b32.xlu0 %v1427, 48
        %v1430 = vpop.permute.xlu0 %1429
        %vm1432 = vcmask 523648
        %1433 = vst.msk [vmem:[%s650] sm:$0xff] %vm1432, %v1430
        %v1434 = vpack.c.bf16 %v1427, %v1427
        %1435 = vrot.lane.b32.xlu0 %v883, 104
        %v1436 = vpop.permute.xlu0 %1435
        %v1439 = vsel %vm931, %v1434, 0
        %1441 = vmatprep.subr.bf16.mxu0 0
        %1442 = vmatpush1.bf16.msra.mxu0 %v1436
        %1443 = vmatprep.subr.bf16.mxu0 0
        %1444 = vmatpush1.bf16.msra.mxu0 0
        %1445 = vmatprep.subr.bf16.mxu0 0
        %1446 = vmatpush1.bf16.msra.mxu0 0
        %1447 = vmatprep.subr.bf16.mxu0 0
        %1448 = vmatpush1.bf16.msra.mxu0 0
        %1449 = vmatprep.subr.bf16.mxu0 0
        %1450 = vmatpush1.bf16.msra.mxu0 0
        %1451 = vmatprep.subr.bf16.mxu0 0
        %1452 = vmatpush1.bf16.msra.mxu0 0
        %1453 = vmatprep.subr.bf16.mxu0 0
        %1454 = vmatpush1.bf16.msra.mxu0 0
        %1455 = vmatprep.subr.bf16.mxu0 0
        %1456 = vmatpush1.bf16.msra.mxu0 0
        %1457 = vmatprep.subr.bf16.mxu0 0
        %1458 = vmatpush1.bf16.msra.mxu0 0
        %1459 = vmatprep.subr.bf16.mxu0 0
        %1460 = vmatpush1.bf16.msra.mxu0 0
        %1461 = vmatprep.subr.bf16.mxu0 0
        %1462 = vmatpush1.bf16.msra.mxu0 0
        %1463 = vmatprep.subr.bf16.mxu0 0
        %1464 = vmatpush1.bf16.msra.mxu0 0
        %1465 = vmatprep.subr.bf16.mxu0 0
        %1466 = vmatpush1.bf16.msra.mxu0 0
        %1467 = vmatprep.subr.bf16.mxu0 0
        %1468 = vmatpush1.bf16.msra.mxu0 0
        %1469 = vmatprep.subr.bf16.mxu0 0
        %1470 = vmatpush1.bf16.msra.mxu0 0
        %1471 = vmatprep.subr.bf16.mxu0 0
        %1472 = vmatpush1.bf16.msra.mxu0 0
        %1473 = vmatprep.mubr.bf16.mxu0 0
        %1474 = vmatmul.mubr.bf16.gmra.mrb[0].mxu0 %v1439
        %v1475 = vpop.f32.mrb[0].mxu0
        %v1476 = vadd.f32 0.0, %v1475
        %v1477 = vpop.f32.mrb[0].mxu0
        %v1478 = vpop.f32.mrb[0].mxu0
        %v1479 = vpop.f32.mrb[0].mxu0
        %1480 = vdwg.mxu0
        %v1481 = vpack.c.bf16 %v1476, %v1476
        %s1482 = scalar_lea.vmem %s9, 12
        %v1483 = vld [vmem:[%s1482] sm:$0xf]
        %v1485 = vsel %vm884, %v1481, 0
        %v1488 = vsel %vm1113, %v1483, 0
        %1490 = vmatprep.subr.bf16.mxu0 0
        %1491 = vmatpush1.bf16.msra.mxu0 %v1488
        %1492 = vmatprep.subr.bf16.mxu0 0
        %1493 = vmatpush1.bf16.msra.mxu0 0
        %1494 = vmatprep.subr.bf16.mxu0 0
        %1495 = vmatpush1.bf16.msra.mxu0 0
        %1496 = vmatprep.subr.bf16.mxu0 0
        %1497 = vmatpush1.bf16.msra.mxu0 0
        %1498 = vmatprep.subr.bf16.mxu0 0
        %1499 = vmatpush1.bf16.msra.mxu0 0
        %1500 = vmatprep.subr.bf16.mxu0 0
        %1501 = vmatpush1.bf16.msra.mxu0 0
        %1502 = vmatprep.subr.bf16.mxu0 0
        %1503 = vmatpush1.bf16.msra.mxu0 0
        %1504 = vmatprep.subr.bf16.mxu0 0
        %1505 = vmatpush1.bf16.msra.mxu0 0
        %1506 = vmatprep.subr.bf16.mxu0 0
        %1507 = vmatpush1.bf16.msra.mxu0 0
        %1508 = vmatprep.subr.bf16.mxu0 0
        %1509 = vmatpush1.bf16.msra.mxu0 0
        %1510 = vmatprep.subr.bf16.mxu0 0
        %1511 = vmatpush1.bf16.msra.mxu0 0
        %1512 = vmatprep.subr.bf16.mxu0 0
        %1513 = vmatpush1.bf16.msra.mxu0 0
        %1514 = vmatprep.subr.bf16.mxu0 0
        %1515 = vmatpush1.bf16.msra.mxu0 0
        %1516 = vmatprep.subr.bf16.mxu0 0
        %1517 = vmatpush1.bf16.msra.mxu0 0
        %1518 = vmatprep.subr.bf16.mxu0 0
        %1519 = vmatpush1.bf16.msra.mxu0 0
        %1520 = vmatprep.subr.bf16.mxu0 0
        %1521 = vmatpush1.bf16.msra.mxu0 0
        %1522 = vmatprep.mubr.bf16.mxu0 0
        %1523 = vmatmul.mubr.bf16.gmra.mrb[0].mxu0 %v1485
        %v1524 = vpop.f32.mrb[0].mxu0
        %v1525 = vadd.f32 0.0, %v1524
        %v1526 = vpop.f32.mrb[0].mxu0
        %v1527 = vpop.f32.mrb[0].mxu0
        %v1528 = vpop.f32.mrb[0].mxu0
        %1529 = vdwg.mxu0
        %v1530 = vadd.f32 %v1366, %v1525
        %v1531 = vld [vmem:[#allocation16] sm:$0x1]
        %v1533 = vlaneseq
        %v1534 = vshrl.u32 %v1533, 7
        %v1535 = vsub.s32 0, %v1534
        %v1536 = vrot.slane %v1531, %v1535
        %v1538 = vadd.f32 %v1530, %v1536
        %1539 = vst.msk [vmem:[%s643] sm:$0xff] %vm836, %v1538
        %s1540 = sand.u32 %s353, 1
        %s1541 = scalar_lea.sflag [#allocation6], %s1540
        %s1542 = sand.u32 %s353, 1
        %s1543 = smul.addr %s1542, 8
        %s1544 = scalar_lea.vmem [#allocation18], %s1543
        %s1545 = sand.u32 %s381, 1
        %s1546 = scalar_lea.sflag [#allocation20], %s1545
        %s1547 = sand.u32 %s381, 1
        %s1548 = smul.addr %s1547, 8
        %s1549 = scalar_lea.vmem [#allocation19], %s1548
        // Predicated region
        $region109: #{tpu_custom_call.1} parent=71 // pred_check
          %p1550 = pneg %p363
        $region110: #{tpu_custom_call.1} parent=71 // pred_check_branch
          %1552 = sbr.rel (%p1550) target = $region112
        $region111: #{tpu_custom_call.1} parent=71 // pred_region
          %s1554 = ssub.s32 128, 128
          %1555 = vsyncadd %s1541, %s1554
          %s1556 = sadd.s32 %s46, %s45
          %s1557 = smul.addr %s1556, 128
          %s1558 = scalar_lea.hbm %s13, %s1557
          %s1560 = sshll.u32 %s1544, 4
          %s1561 = int_to_ptr.vmem [resolvable:$true] %s1560
          %1563 = dma.vmem_to_hbm [thread:$0]  %s1561, 128, %s1558, %s1541
        $region112: #{tpu_custom_call.1} parent=71 // pred_fallthru
          _
        // Predicated region
        $region113: #{tpu_custom_call.1} parent=71 // pred_check
          %p1564 = pneg %p391
        $region114: #{tpu_custom_call.1} parent=71 // pred_check_branch
          %1566 = sbr.rel (%p1564) target = $region116
        $region115: #{tpu_custom_call.1} parent=71 // pred_region
          %s1568 = ssub.s32 128, 128
          %1569 = vsyncadd %s1546, %s1568
          %s1570 = sadd.s32 %s46, %s45
          %s1571 = smul.addr %s1570, 128
          %s1572 = scalar_lea.hbm %s14, %s1571
          %s1574 = sshll.u32 %s1549, 4
          %s1575 = int_to_ptr.vmem [resolvable:$true] %s1574
          %1577 = dma.vmem_to_hbm [thread:$0]  %s1575, 128, %s1572, %s1546
        $region116: #{tpu_custom_call.1} parent=71 // pred_fallthru
          _
      $region72: #{tpu_custom_call.1} parent=5 // pred_fallthru
        _
      %p1578 = scmp.le.s32.totalorder 2, %s36
      // Predicated region
      $region117: #{tpu_custom_call.1} parent=5 // pred_check
        %p1579 = pneg %p1578
      $region118: #{tpu_custom_call.1} parent=5 // pred_check_branch
        %1581 = sbr.rel (%p1579) target = $region120
      $region119: #{tpu_custom_call.1} parent=5 // pred_region
        %s1582 = ssub.s32 %s36, 2
        // Predicated region
        $region121: #{tpu_custom_call.1} parent=119 // pred_check
          %p1583 = pneg %p369
        $region122: #{tpu_custom_call.1} parent=119 // pred_check_branch
          %1585 = sbr.rel (%p1583) target = $region124
        $region123: #{tpu_custom_call.1} parent=119 // pred_region
          %s1586 = sand.u32 %s354, 1
          %s1587 = scalar_lea.sflag [#allocation6], %s1586
          %s1588 = sand.u32 %s354, 1
          %s1589 = smul.addr %s1588, 8
          %s1590 = scalar_lea.vmem [#allocation18], %s1589
          %1591 = dma.done %s1587, 128
        $region124: #{tpu_custom_call.1} parent=119 // pred_fallthru
          _
        // Predicated region
        $region125: #{tpu_custom_call.1} parent=119 // pred_check
          %p1592 = pneg %p397
        $region126: #{tpu_custom_call.1} parent=119 // pred_check_branch
          %1594 = sbr.rel (%p1592) target = $region128
        $region127: #{tpu_custom_call.1} parent=119 // pred_region
          %s1595 = sand.u32 %s382, 1
          %s1596 = scalar_lea.sflag [#allocation20], %s1595
          %s1597 = sand.u32 %s382, 1
          %s1598 = smul.addr %s1597, 8
          %s1599 = scalar_lea.vmem [#allocation19], %s1598
          %1600 = dma.done %s1596, 128
        $region128: #{tpu_custom_call.1} parent=119 // pred_fallthru
          _
      $region120: #{tpu_custom_call.1} parent=5 // pred_fallthru
        _
    $region6: #{tpu_custom_call.1} parent=1 // loop_footer
      %s40 = sadd.s32 1, %s36
    $region7: #{tpu_custom_call.1} parent=1 // loop_footer_branch
      %35 = sbr.rel target = $region3
    $region8: #{tpu_custom_call.1} parent=1 // loop_exit
      _
    %1601 = vsyncpa [#allocation5], 1
    %s1602 = scalar_lea.sflag [#allocation5], 1
    %1603 = vsyncpa %s1602, 1
    %1604 = vsyncpa [#allocation8], 1
    %s1605 = scalar_lea.sflag [#allocation8], 1
    %1606 = vsyncpa %s1605, 1
    %1607 = vsyncpa [#allocation11], 1
    %1608 = vsyncpa [#allocation14], 1
    %1609 = vsyncpa [#allocation17], 1
    %1610 = vsyncpa [#allocation6], 1
    %s1611 = scalar_lea.sflag [#allocation6], 1
    %1612 = vsyncpa %s1611, 1
    %1613 = vsyncpa [#allocation20], 1
    %s1614 = scalar_lea.sflag [#allocation20], 1
    %1615 = vsyncpa %s1614, 1

// kernel: tpu_custom_call.1
$region0: #{tpu_custom_call.1}
  #allocation0 [shape = 'u32[]', space=smem, size = 0x4, offset = 0x4, fixed_abs, tag = 'smem constant byte address 0x4 - core index']
  #allocation1 [shape = 'u32[144,128]{1,0:T(1,128)}', space=vmem, size = 0x12000, scoped, tag = 'internal scratch']
  #allocation2 [shape = 'bf16[16,32]{1,0:T(16,128)(2,1)}', space=vmem, size = 0x1000, scoped, tag = 'scratch operand']
  #allocation3 [shape = 'bf16[16,32]{1,0:T(16,128)(2,1)}', space=vmem, size = 0x1000, scoped, tag = 'scratch operand']
  %s0 = inlined_call_operand.hbm [shape: f32[2,8,32], index: 0, kind: input, shape index: {}]
  %s1 = inlined_call_operand.hbm [shape: f32[2,8,32], index: 1, kind: input, shape index: {}]
  %s2 = inlined_call_operand.hbm [shape: f32[2,8,32], index: 2, kind: input, shape index: {}]
  %s3 = inlined_call_operand.hbm [shape: bf16[32,32], index: 3, kind: input, shape index: {}]
  %s4 = inlined_call_operand.vmem [shape: f32[1,32], index: 4, kind: input, shape index: {}]
  %s5 = inlined_call_operand.vmem [shape: bf16[32,32], index: 5, kind: input, shape index: {}]
  %s6 = inlined_call_operand.hbm [shape: f32[1,32], index: 6, kind: input, shape index: {}]
  %s7 = inlined_call_operand.hbm [shape: bf16[32,32], index: 7, kind: input, shape index: {}]
  %s8 = inlined_call_operand.hbm [shape: f32[1,32], index: 8, kind: input, shape index: {}]
  %s9 = inlined_call_operand.vmem [shape: bf16[4,8,32], index: 9, kind: input, shape index: {}]
  %s10 = inlined_call_operand.hbm [shape: f32[1,32], index: 10, kind: input, shape index: {}]
  %s11 = inlined_call_operand.vmem [shape: bf16[8,32], index: 11, kind: input, shape index: {}]
  %s12 = inlined_call_operand.vmem [shape: bf16[8,32], index: 12, kind: input, shape index: {}]
  %s13 = inlined_call_operand.hbm [shape: f32[2,8,32], index: 13, kind: output, shape index: {0}]
  %s14 = inlined_call_operand.hbm [shape: f32[2,8,64], index: 14, kind: output, shape index: {1}]
  %15 = xla_tuple %s13, %s14
  %s16 = sld [smem:[#allocation0]]
  $region129: #{tpu_custom_call.1} parent=0
    _
  %s18 = ssub.s32 1, %s16
  %s19 = scalar_select 0, %s18, %s16
  $region1: #{tpu_custom_call.1} parent=0
    #allocation4 [shape = 'u8[8192]{0}', space=vmem, size = 0x2000, scoped, tag = 'input window, operand 0']
    #allocation5 [shape = 's32[2]{0}', space=sflag, size = 0x8, scoped, tag = 'scoped memory for tpu_custom_call.1']
    #allocation6 [shape = 's32[2]{0}', space=sflag, size = 0x8, scoped, tag = 'scoped memory for tpu_custom_call.1']
    #allocation7 [shape = 'u8[8192]{0}', space=vmem, size = 0x2000, scoped, tag = 'input window, operand 1']
    #allocation8 [shape = 's32[2]{0}', space=sflag, size = 0x8, scoped, tag = 'scoped memory for tpu_custom_call.1']
    #allocation9 [shape = 'u8[8192]{0}', space=vmem, size = 0x2000, scoped, tag = 'input window, operand 2']
    #allocation10 [shape = 'u8[8192]{0}', space=vmem, size = 0x2000, scoped, tag = 'input window, operand 3, single buffered']
    #allocation11 [shape = 's32[1]{0}', space=sflag, size = 0x4, scoped, tag = 'scoped memory for tpu_custom_call.1']
    #allocation12 [shape = 'u8[512]{0}', space=vmem, size = 0x400, scoped, tag = 'input window, operand 6, single buffered']
    #allocation13 [shape = 'u8[8192]{0}', space=vmem, size = 0x2000, scoped, tag = 'input window, operand 7, single buffered']
    #allocation14 [shape = 's32[1]{0}', space=sflag, size = 0x4, scoped, tag = 'scoped memory for tpu_custom_call.1']
    #allocation15 [shape = 'u8[512]{0}', space=vmem, size = 0x400, scoped, tag = 'input window, operand 8, single buffered']
    #allocation16 [shape = 'u8[512]{0}', space=vmem, size = 0x400, scoped, tag = 'input window, operand 10, single buffered']
    #allocation17 [shape = 's32[1]{0}', space=sflag, size = 0x4, scoped, tag = 'scoped memory for tpu_custom_call.1']
    #allocation18 [shape = 'u8[8192]{0}', space=vmem, size = 0x2000, scoped, tag = 'output window, operand 0']
    #allocation19 [shape = 'u8[8192]{0}', space=vmem, size = 0x2000, scoped, tag = 'output window, operand 1']
    #allocation20 [shape = 's32[2]{0}', space=sflag, size = 0x8, scoped, tag = 'scoped memory for tpu_custom_call.1']
    %20 = vsyncpa [#allocation5], 0
    %s21 = scalar_lea.sflag [#allocation5], 1
    %22 = vsyncpa %s21, 0
    %23 = vsyncpa [#allocation8], 0
    %s24 = scalar_lea.sflag [#allocation8], 1
    %25 = vsyncpa %s24, 0
    %26 = vsyncpa [#allocation11], 0
    %27 = vsyncpa [#allocation14], 0
    %28 = vsyncpa [#allocation17], 0
    %29 = vsyncpa [#allocation6], 0
    %s30 = scalar_lea.sflag [#allocation6], 1
    %31 = vsyncpa %s30, 0
    %32 = vsyncpa [#allocation20], 0
    %s33 = scalar_lea.sflag [#allocation20], 1
    %34 = vsyncpa %s33, 0
    loop: start=0, step=1, limit=4
    $region2: #{tpu_custom_call.1} parent=1 // loop_pre_header
      _
    $region3: #{tpu_custom_call.1} parent=1 // loop_header
      %s36 = sphi 0, %s40
      %p37 = scmp.ge.s32.totalorder %s36, 4
      %s43 = sphi 0, %s55
      %s44 = sphi 0, %s51
      %s45 = sphi 0, %s43
      %s46 = sphi 0, %s44
      %s47 = sphi 0, %s45
      %s48 = sphi 0, %s46
      %s60 = sphi 0, %s62
      %s63 = sphi 0, %s60
      %s64 = sphi 0, %s63
      %s80 = sphi 0, %s64
      %s86 = sphi 0, %s88
      %s89 = sphi 0, %s86
      %s90 = sphi 0, %s89
      %s106 = sphi 0, %s90
      %s112 = sphi 0, %s114
      %s115 = sphi 0, %s112
      %s116 = sphi 0, %s115
      %s132 = sphi 0, %s116
      %s136 = sphi 0, %s136
      %s138 = sphi 0, %s136
      %s139 = sphi 0, %s138
      %s153 = sphi 0, %s139
      %s157 = sphi 0, %s157
      %s159 = sphi 0, %s157
      %s160 = sphi 0, %s159
      %s174 = sphi 0, %s160
      %s178 = sphi 0, %s178
      %s180 = sphi 0, %s178
      %s181 = sphi 0, %s180
      %s195 = sphi 0, %s181
      %s199 = sphi 0, %s199
      %s201 = sphi 0, %s199
      %s202 = sphi 0, %s201
      %s216 = sphi 0, %s202
      %s220 = sphi 0, %s220
      %s222 = sphi 0, %s220
      %s223 = sphi 0, %s222
      %s237 = sphi 0, %s223
      %s241 = sphi 0, %s241
      %s243 = sphi 0, %s241
      %s244 = sphi 0, %s243
      %s258 = sphi 0, %s244
      %s262 = sphi 0, %s262
      %s264 = sphi 0, %s262
      %s265 = sphi 0, %s264
      %s279 = sphi 0, %s265
      %s283 = sphi 0, %s283
      %s285 = sphi 0, %s283
      %s286 = sphi 0, %s285
      %s300 = sphi 0, %s286
      %s304 = sphi 0, %s304
      %s306 = sphi 0, %s304
      %s307 = sphi 0, %s306
      %s321 = sphi 0, %s307
      %s325 = sphi 0, %s325
      %s327 = sphi 0, %s325
      %s328 = sphi 0, %s327
      %s342 = sphi 0, %s328
      %s350 = sphi 0, %s352
      %s353 = sphi 0, %s350
      %s354 = sphi 0, %s353
      %s370 = sphi 0, %s354
      %s378 = sphi 0, %s380
      %s381 = sphi 0, %s378
      %s382 = sphi 0, %s381
      %s398 = sphi 0, %s382
    $region4: #{tpu_custom_call.1} parent=1 // loop_header_branch
      %39 = sbr.rel (%p37) target = $region8
    $region5: #{tpu_custom_call.1} parent=1 // loop_body
      %s41 = ssub.s32 %s36, 1
      %s42 = ssub.s32 %s36, 2
      %s49 = sadd.s32 1, %s44
      %p50 = scmp.ge.s32.totalorder %s49, 1
      %s51 = scalar_select %p50, 0, %s49
      %s52 = sadd.s32 1, %s43
      %s53 = scalar_select %p50, %s52, %s43
      %p54 = scmp.ge.s32.totalorder %s53, 2
      %s55 = scalar_select %p54, 0, %s53
      %s56 = ssub.s32 %s43, %s55
      %s57 = ssub.s32 %s44, %s51
      %s58 = sor.u32 %s56, %s57
      %p59 = scmp.eq.s32.totalorder %s58, 0
      %s61 = sadd.s32 %s60, 1
      %s62 = scalar_select %p59, %s60, %s61
      %p65 = pneg %p59
      %p66 = scmp.eq.s32.totalorder %s36, 1
      %p67 = por %p65, %p66
      %p68 = scmp.ne.s32.totalorder %s60, %s63
      %p69 = scmp.eq.s32.totalorder %s36, 0
      %p70 = por %p68, %p69
      %p71 = scmp.ne.s32.totalorder %s60, %s63
      %p72 = scmp.eq.s32.totalorder %s41, 1
      %p73 = por %p71, %p72
      %p74 = scmp.ne.s32.totalorder %s63, %s64
      %p75 = scmp.eq.s32.totalorder %s41, 0
      %p76 = por %p74, %p75
      %p77 = scmp.ne.s32.totalorder %s63, %s64
      %p78 = scmp.eq.s32.totalorder %s42, 1
      %p79 = por %p77, %p78
      %p81 = scmp.ne.s32.totalorder %s64, %s80
      %p82 = scmp.eq.s32.totalorder %s42, 0
      %p83 = por %p81, %p82
      %s84 = ssub.s32 %s43, %s55
      %p85 = scmp.eq.s32.totalorder %s84, 0
      %s87 = sadd.s32 %s86, 1
      %s88 = scalar_select %p85, %s86, %s87
      %p91 = pneg %p85
      %p92 = scmp.eq.s32.totalorder %s36, 1
      %p93 = por %p91, %p92
      %p94 = scmp.ne.s32.totalorder %s86, %s89
      %p95 = scmp.eq.s32.totalorder %s36, 0
      %p96 = por %p94, %p95
      %p97 = scmp.ne.s32.totalorder %s86, %s89
      %p98 = scmp.eq.s32.totalorder %s41, 1
      %p99 = por %p97, %p98
      %p100 = scmp.ne.s32.totalorder %s89, %s90
      %p101 = scmp.eq.s32.totalorder %s41, 0
      %p102 = por %p100, %p101
      %p103 = scmp.ne.s32.totalorder %s89, %s90
      %p104 = scmp.eq.s32.totalorder %s42, 1
      %p105 = por %p103, %p104
      %p107 = scmp.ne.s32.totalorder %s90, %s106
      %p108 = scmp.eq.s32.totalorder %s42, 0
      %p109 = por %p107, %p108
      %s110 = ssub.s32 %s43, %s55
      %p111 = scmp.eq.s32.totalorder %s110, 0
      %s113 = sadd.s32 %s112, 1
      %s114 = scalar_select %p111, %s112, %s113
      %p117 = pneg %p111
      %p118 = scmp.eq.s32.totalorder %s36, 1
      %p119 = por %p117, %p118
      %p120 = scmp.ne.s32.totalorder %s112, %s115
      %p121 = scmp.eq.s32.totalorder %s36, 0
      %p122 = por %p120, %p121
      %p123 = scmp.ne.s32.totalorder %s112, %s115
      %p124 = scmp.eq.s32.totalorder %s41, 1
      %p125 = por %p123, %p124
      %p126 = scmp.ne.s32.totalorder %s115, %s116
      %p127 = scmp.eq.s32.totalorder %s41, 0
      %p128 = por %p126, %p127
      %p129 = scmp.ne.s32.totalorder %s115, %s116
      %p130 = scmp.eq.s32.totalorder %s42, 1
      %p131 = por %p129, %p130
      %p133 = scmp.ne.s32.totalorder %s116, %s132
      %p134 = scmp.eq.s32.totalorder %s42, 0
      %p135 = por %p133, %p134
      %s137 = sadd.s32 %s136, 1
      %p140 = scmp.eq.s32.totalorder %s36, 1
      %p141 = scmp.ne.s32.totalorder %s136, %s138
      %p142 = scmp.eq.s32.totalorder %s36, 0
      %p143 = por %p141, %p142
      %p144 = scmp.ne.s32.totalorder %s136, %s138
      %p145 = scmp.eq.s32.totalorder %s41, 1
      %p146 = por %p144, %p145
      %p147 = scmp.ne.s32.totalorder %s138, %s139
      %p148 = scmp.eq.s32.totalorder %s41, 0
      %p149 = por %p147, %p148
      %p150 = scmp.ne.s32.totalorder %s138, %s139
      %p151 = scmp.eq.s32.totalorder %s42, 1
      %p152 = por %p150, %p151
      %p154 = scmp.ne.s32.totalorder %s139, %s153
      %p155 = scmp.eq.s32.totalorder %s42, 0
      %p156 = por %p154, %p155
      %s158 = sadd.s32 %s157, 1
      %p161 = scmp.eq.s32.totalorder %s36, 1
      %p162 = scmp.ne.s32.totalorder %s157, %s159
      %p163 = scmp.eq.s32.totalorder %s36, 0
      %p164 = por %p162, %p163
      %p165 = scmp.ne.s32.totalorder %s157, %s159
      %p166 = scmp.eq.s32.totalorder %s41, 1
      %p167 = por %p165, %p166
      %p168 = scmp.ne.s32.totalorder %s159, %s160
      %p169 = scmp.eq.s32.totalorder %s41, 0
      %p170 = por %p168, %p169
      %p171 = scmp.ne.s32.totalorder %s159, %s160
      %p172 = scmp.eq.s32.totalorder %s42, 1
      %p173 = por %p171, %p172
      %p175 = scmp.ne.s32.totalorder %s160, %s174
      %p176 = scmp.eq.s32.totalorder %s42, 0
      %p177 = por %p175, %p176
      %s179 = sadd.s32 %s178, 1
      %p182 = scmp.eq.s32.totalorder %s36, 1
      %p183 = scmp.ne.s32.totalorder %s178, %s180
      %p184 = scmp.eq.s32.totalorder %s36, 0
      %p185 = por %p183, %p184
      %p186 = scmp.ne.s32.totalorder %s178, %s180
      %p187 = scmp.eq.s32.totalorder %s41, 1
      %p188 = por %p186, %p187
      %p189 = scmp.ne.s32.totalorder %s180, %s181
      %p190 = scmp.eq.s32.totalorder %s41, 0
      %p191 = por %p189, %p190
      %p192 = scmp.ne.s32.totalorder %s180, %s181
      %p193 = scmp.eq.s32.totalorder %s42, 1
      %p194 = por %p192, %p193
      %p196 = scmp.ne.s32.totalorder %s181, %s195
      %p197 = scmp.eq.s32.totalorder %s42, 0
      %p198 = por %p196, %p197
      %s200 = sadd.s32 %s199, 1
      %p203 = scmp.eq.s32.totalorder %s36, 1
      %p204 = scmp.ne.s32.totalorder %s199, %s201
      %p205 = scmp.eq.s32.totalorder %s36, 0
      %p206 = por %p204, %p205
      %p207 = scmp.ne.s32.totalorder %s199, %s201
      %p208 = scmp.eq.s32.totalorder %s41, 1
      %p209 = por %p207, %p208
      %p210 = scmp.ne.s32.totalorder %s201, %s202
      %p211 = scmp.eq.s32.totalorder %s41, 0
      %p212 = por %p210, %p211
      %p213 = scmp.ne.s32.totalorder %s201, %s202
      %p214 = scmp.eq.s32.totalorder %s42, 1
      %p215 = por %p213, %p214
      %p217 = scmp.ne.s32.totalorder %s202, %s216
      %p218 = scmp.eq.s32.totalorder %s42, 0
      %p219 = por %p217, %p218
      %s221 = sadd.s32 %s220, 1
      %p224 = scmp.eq.s32.totalorder %s36, 1
      %p225 = scmp.ne.s32.totalorder %s220, %s222
      %p226 = scmp.eq.s32.totalorder %s36, 0
      %p227 = por %p225, %p226
      %p228 = scmp.ne.s32.totalorder %s220, %s222
      %p229 = scmp.eq.s32.totalorder %s41, 1
      %p230 = por %p228, %p229
      %p231 = scmp.ne.s32.totalorder %s222, %s223
      %p232 = scmp.eq.s32.totalorder %s41, 0
      %p233 = por %p231, %p232
      %p234 = scmp.ne.s32.totalorder %s222, %s223
      %p235 = scmp.eq.s32.totalorder %s42, 1
      %p236 = por %p234, %p235
      %p238 = scmp.ne.s32.totalorder %s223, %s237
      %p239 = scmp.eq.s32.totalorder %s42, 0
      %p240 = por %p238, %p239
      %s242 = sadd.s32 %s241, 1
      %p245 = scmp.eq.s32.totalorder %s36, 1
      %p246 = scmp.ne.s32.totalorder %s241, %s243
      %p247 = scmp.eq.s32.totalorder %s36, 0
      %p248 = por %p246, %p247
      %p249 = scmp.ne.s32.totalorder %s241, %s243
      %p250 = scmp.eq.s32.totalorder %s41, 1
      %p251 = por %p249, %p250
      %p252 = scmp.ne.s32.totalorder %s243, %s244
      %p253 = scmp.eq.s32.totalorder %s41, 0
      %p254 = por %p252, %p253
      %p255 = scmp.ne.s32.totalorder %s243, %s244
      %p256 = scmp.eq.s32.totalorder %s42, 1
      %p257 = por %p255, %p256
      %p259 = scmp.ne.s32.totalorder %s244, %s258
      %p260 = scmp.eq.s32.totalorder %s42, 0
      %p261 = por %p259, %p260
      %s263 = sadd.s32 %s262, 1
      %p266 = scmp.eq.s32.totalorder %s36, 1
      %p267 = scmp.ne.s32.totalorder %s262, %s264
      %p268 = scmp.eq.s32.totalorder %s36, 0
      %p269 = por %p267, %p268
      %p270 = scmp.ne.s32.totalorder %s262, %s264
      %p271 = scmp.eq.s32.totalorder %s41, 1
      %p272 = por %p270, %p271
      %p273 = scmp.ne.s32.totalorder %s264, %s265
      %p274 = scmp.eq.s32.totalorder %s41, 0
      %p275 = por %p273, %p274
      %p276 = scmp.ne.s32.totalorder %s264, %s265
      %p277 = scmp.eq.s32.totalorder %s42, 1
      %p278 = por %p276, %p277
      %p280 = scmp.ne.s32.totalorder %s265, %s279
      %p281 = scmp.eq.s32.totalorder %s42, 0
      %p282 = por %p280, %p281
      %s284 = sadd.s32 %s283, 1
      %p287 = scmp.eq.s32.totalorder %s36, 1
      %p288 = scmp.ne.s32.totalorder %s283, %s285
      %p289 = scmp.eq.s32.totalorder %s36, 0
      %p290 = por %p288, %p289
      %p291 = scmp.ne.s32.totalorder %s283, %s285
      %p292 = scmp.eq.s32.totalorder %s41, 1
      %p293 = por %p291, %p292
      %p294 = scmp.ne.s32.totalorder %s285, %s286
      %p295 = scmp.eq.s32.totalorder %s41, 0
      %p296 = por %p294, %p295
      %p297 = scmp.ne.s32.totalorder %s285, %s286
      %p298 = scmp.eq.s32.totalorder %s42, 1
      %p299 = por %p297, %p298
      %p301 = scmp.ne.s32.totalorder %s286, %s300
      %p302 = scmp.eq.s32.totalorder %s42, 0
      %p303 = por %p301, %p302
      %s305 = sadd.s32 %s304, 1
      %p308 = scmp.eq.s32.totalorder %s36, 1
      %p309 = scmp.ne.s32.totalorder %s304, %s306
      %p310 = scmp.eq.s32.totalorder %s36, 0
      %p311 = por %p309, %p310
      %p312 = scmp.ne.s32.totalorder %s304, %s306
      %p313 = scmp.eq.s32.totalorder %s41, 1
      %p314 = por %p312, %p313
      %p315 = scmp.ne.s32.totalorder %s306, %s307
      %p316 = scmp.eq.s32.totalorder %s41, 0
      %p317 = por %p315, %p316
      %p318 = scmp.ne.s32.totalorder %s306, %s307
      %p319 = scmp.eq.s32.totalorder %s42, 1
      %p320 = por %p318, %p319
      %p322 = scmp.ne.s32.totalorder %s307, %s321
      %p323 = scmp.eq.s32.totalorder %s42, 0
      %p324 = por %p322, %p323
      %s326 = sadd.s32 %s325, 1
      %p329 = scmp.eq.s32.totalorder %s36, 1
      %p330 = scmp.ne.s32.totalorder %s325, %s327
      %p331 = scmp.eq.s32.totalorder %s36, 0
      %p332 = por %p330, %p331
      %p333 = scmp.ne.s32.totalorder %s325, %s327
      %p334 = scmp.eq.s32.totalorder %s41, 1
      %p335 = por %p333, %p334
      %p336 = scmp.ne.s32.totalorder %s327, %s328
      %p337 = scmp.eq.s32.totalorder %s41, 0
      %p338 = por %p336, %p337
      %p339 = scmp.ne.s32.totalorder %s327, %s328
      %p340 = scmp.eq.s32.totalorder %s42, 1
      %p341 = por %p339, %p340
      %p343 = scmp.ne.s32.totalorder %s328, %s342
      %p344 = scmp.eq.s32.totalorder %s42, 0
      %p345 = por %p343, %p344
      %s346 = ssub.s32 %s43, %s55
      %s347 = ssub.s32 %s44, %s51
      %s348 = sor.u32 %s346, %s347
      %p349 = scmp.eq.s32.totalorder %s348, 0
      %s351 = sadd.s32 %s350, 1
      %s352 = scalar_select %p349, %s350, %s351
      %p355 = pneg %p349
      %p356 = scmp.eq.s32.totalorder %s36, 1
      %p357 = por %p355, %p356
      %p358 = scmp.ne.s32.totalorder %s350, %s353
      %p359 = scmp.eq.s32.totalorder %s36, 0
      %p360 = por %p358, %p359
      %p361 = scmp.ne.s32.totalorder %s350, %s353
      %p362 = scmp.eq.s32.totalorder %s41, 1
      %p363 = por %p361, %p362
      %p364 = scmp.ne.s32.totalorder %s353, %s354
      %p365 = scmp.eq.s32.totalorder %s41, 0
      %p366 = por %p364, %p365
      %p367 = scmp.ne.s32.totalorder %s353, %s354
      %p368 = scmp.eq.s32.totalorder %s42, 1
      %p369 = por %p367, %p368
      %p371 = scmp.ne.s32.totalorder %s354, %s370
      %p372 = scmp.eq.s32.totalorder %s42, 0
      %p373 = por %p371, %p372
      %s374 = ssub.s32 %s43, %s55
      %s375 = ssub.s32 %s44, %s51
      %s376 = sor.u32 %s374, %s375
      %p377 = scmp.eq.s32.totalorder %s376, 0
      %s379 = sadd.s32 %s378, 1
      %s380 = scalar_select %p377, %s378, %s379
      %p383 = pneg %p377
      %p384 = scmp.eq.s32.totalorder %s36, 1
      %p385 = por %p383, %p384
      %p386 = scmp.ne.s32.totalorder %s378, %s381
      %p387 = scmp.eq.s32.totalorder %s36, 0
      %p388 = por %p386, %p387
      %p389 = scmp.ne.s32.totalorder %s378, %s381
      %p390 = scmp.eq.s32.totalorder %s41, 1
      %p391 = por %p389, %p390
      %p392 = scmp.ne.s32.totalorder %s381, %s382
      %p393 = scmp.eq.s32.totalorder %s41, 0
      %p394 = por %p392, %p393
      %p395 = scmp.ne.s32.totalorder %s381, %s382
      %p396 = scmp.eq.s32.totalorder %s42, 1
      %p397 = por %p395, %p396
      %p399 = scmp.ne.s32.totalorder %s382, %s398
      %p400 = scmp.eq.s32.totalorder %s42, 0
      %p401 = por %p399, %p400
      %p402 = scmp.le.s32.totalorder 1, %s36
      %p403 = scmp.lt.s32.totalorder %s36, 3
      %p404 = pnand %p402, %p403
      %p405 = pneg %p404
      // Predicated region
      $region9: #{tpu_custom_call.1} parent=5 // pred_check
        _
      $region10: #{tpu_custom_call.1} parent=5 // pred_check_branch
        %407 = sbr.rel (%p404) target = $region12
      $region11: #{tpu_custom_call.1} parent=5 // pred_region
        %s408 = ssub.s32 %s36, 1
        // Predicated region
        $region13: #{tpu_custom_call.1} parent=11 // pred_check
          %p409 = pneg %p149
        $region14: #{tpu_custom_call.1} parent=11 // pred_check_branch
          %411 = sbr.rel (%p409) target = $region16
        $region15: #{tpu_custom_call.1} parent=11 // pred_region
          %s413 = ssub.s32 256, 256
          %414 = vsyncadd [#allocation11], %s413
          %s415 = sshll.u32 [#allocation10], 4
          %s416 = int_to_ptr.vmem [resolvable:$true] %s415
          %421 = dma.hbm_to_vmem [thread:$0]  %s3, 256, %s416, [#allocation11], 64, 64, 4
        $region16: #{tpu_custom_call.1} parent=11 // pred_fallthru
          _
        // Predicated region
        $region17: #{tpu_custom_call.1} parent=11 // pred_check
          %p422 = pneg %p170
        $region18: #{tpu_custom_call.1} parent=11 // pred_check_branch
          %424 = sbr.rel (%p422) target = $region20
        $region19: #{tpu_custom_call.1} parent=11 // pred_region
          _
        $region20: #{tpu_custom_call.1} parent=11 // pred_fallthru
          _
        // Predicated region
        $region21: #{tpu_custom_call.1} parent=11 // pred_check
          %p425 = pneg %p191
        $region22: #{tpu_custom_call.1} parent=11 // pred_check_branch
          %427 = sbr.rel (%p425) target = $region24
        $region23: #{tpu_custom_call.1} parent=11 // pred_region
          _
        $region24: #{tpu_custom_call.1} parent=11 // pred_fallthru
          _
        // Predicated region
        $region25: #{tpu_custom_call.1} parent=11 // pred_check
          %p428 = pneg %p212
        $region26: #{tpu_custom_call.1} parent=11 // pred_check_branch
          %430 = sbr.rel (%p428) target = $region28
        $region27: #{tpu_custom_call.1} parent=11 // pred_region
          %s432 = ssub.s32 16, 16
          %433 = vsyncadd [#allocation11], %s432
          %s435 = sshll.u32 [#allocation12], 4
          %s436 = int_to_ptr.vmem [resolvable:$true] %s435
          %438 = dma.hbm_to_vmem [thread:$0]  %s6, 16, %s436, [#allocation11]
        $region28: #{tpu_custom_call.1} parent=11 // pred_fallthru
          _
        // Predicated region
        $region29: #{tpu_custom_call.1} parent=11 // pred_check
          %p439 = pneg %p233
        $region30: #{tpu_custom_call.1} parent=11 // pred_check_branch
          %441 = sbr.rel (%p439) target = $region32
        $region31: #{tpu_custom_call.1} parent=11 // pred_region
          %s443 = ssub.s32 256, 256
          %444 = vsyncadd [#allocation14], %s443
          %s445 = sshll.u32 [#allocation13], 4
          %s446 = int_to_ptr.vmem [resolvable:$true] %s445
          %451 = dma.hbm_to_vmem [thread:$0]  %s7, 256, %s446, [#allocation14], 64, 64, 4
        $region32: #{tpu_custom_call.1} parent=11 // pred_fallthru
          _
        // Predicated region
        $region33: #{tpu_custom_call.1} parent=11 // pred_check
          %p452 = pneg %p254
        $region34: #{tpu_custom_call.1} parent=11 // pred_check_branch
          %454 = sbr.rel (%p452) target = $region36
        $region35: #{tpu_custom_call.1} parent=11 // pred_region
          %s456 = ssub.s32 16, 16
          %457 = vsyncadd [#allocation14], %s456
          %s459 = sshll.u32 [#allocation15], 4
          %s460 = int_to_ptr.vmem [resolvable:$true] %s459
          %462 = dma.hbm_to_vmem [thread:$0]  %s8, 16, %s460, [#allocation14]
        $region36: #{tpu_custom_call.1} parent=11 // pred_fallthru
          _
        // Predicated region
        $region37: #{tpu_custom_call.1} parent=11 // pred_check
          %p463 = pneg %p275
        $region38: #{tpu_custom_call.1} parent=11 // pred_check_branch
          %465 = sbr.rel (%p463) target = $region40
        $region39: #{tpu_custom_call.1} parent=11 // pred_region
          _
        $region40: #{tpu_custom_call.1} parent=11 // pred_fallthru
          _
        // Predicated region
        $region41: #{tpu_custom_call.1} parent=11 // pred_check
          %p466 = pneg %p296
        $region42: #{tpu_custom_call.1} parent=11 // pred_check_branch
          %468 = sbr.rel (%p466) target = $region44
        $region43: #{tpu_custom_call.1} parent=11 // pred_region
          %s470 = ssub.s32 16, 16
          %471 = vsyncadd [#allocation17], %s470
          %s473 = sshll.u32 [#allocation16], 4
          %s474 = int_to_ptr.vmem [resolvable:$true] %s473
          %476 = dma.hbm_to_vmem [thread:$0]  %s10, 16, %s474, [#allocation17]
        $region44: #{tpu_custom_call.1} parent=11 // pred_fallthru
          _
        // Predicated region
        $region45: #{tpu_custom_call.1} parent=11 // pred_check
          %p477 = pneg %p317
        $region46: #{tpu_custom_call.1} parent=11 // pred_check_branch
          %479 = sbr.rel (%p477) target = $region48
        $region47: #{tpu_custom_call.1} parent=11 // pred_region
          _
        $region48: #{tpu_custom_call.1} parent=11 // pred_fallthru
          _
        // Predicated region
        $region49: #{tpu_custom_call.1} parent=11 // pred_check
          %p480 = pneg %p338
        $region50: #{tpu_custom_call.1} parent=11 // pred_check_branch
          %482 = sbr.rel (%p480) target = $region52
        $region51: #{tpu_custom_call.1} parent=11 // pred_region
          _
        $region52: #{tpu_custom_call.1} parent=11 // pred_fallthru
          _
      $region12: #{tpu_custom_call.1} parent=5 // pred_fallthru
        _
      %p483 = scmp.lt.s32.totalorder %s36, 2
      // Predicated region
      $region53: #{tpu_custom_call.1} parent=5 // pred_check
        %p484 = pneg %p483
      $region54: #{tpu_custom_call.1} parent=5 // pred_check_branch
        %486 = sbr.rel (%p484) target = $region56
      $region55: #{tpu_custom_call.1} parent=5 // pred_region
        // Predicated region
        $region57: #{tpu_custom_call.1} parent=55 // pred_check
          %p487 = pneg %p70
        $region58: #{tpu_custom_call.1} parent=55 // pred_check_branch
          %489 = sbr.rel (%p487) target = $region60
        $region59: #{tpu_custom_call.1} parent=55 // pred_region
          %s490 = sand.u32 %s60, 1
          %s491 = scalar_lea.sflag [#allocation5], %s490
          %s492 = sand.u32 %s60, 1
          %s493 = smul.addr %s492, 8
          %s494 = scalar_lea.vmem [#allocation4], %s493
          %s496 = ssub.s32 128, 128
          %497 = vsyncadd %s491, %s496
          %s498 = sadd.s32 %s44, %s43
          %s499 = smul.addr %s498, 128
          %s500 = scalar_lea.hbm %s0, %s499
          %s502 = sshll.u32 %s494, 4
          %s503 = int_to_ptr.vmem [resolvable:$true] %s502
          %505 = dma.hbm_to_vmem [thread:$0]  %s500, 128, %s503, %s491
        $region60: #{tpu_custom_call.1} parent=55 // pred_fallthru
          _
        // Predicated region
        $region61: #{tpu_custom_call.1} parent=55 // pred_check
          %p506 = pneg %p96
        $region62: #{tpu_custom_call.1} parent=55 // pred_check_branch
          %508 = sbr.rel (%p506) target = $region64
        $region63: #{tpu_custom_call.1} parent=55 // pred_region
          %s509 = sand.u32 %s36, 1
          %s510 = scalar_lea.sflag [#allocation8], %s509
          %s511 = sand.u32 %s86, 1
          %s512 = smul.addr %s511, 8
          %s513 = scalar_lea.vmem [#allocation7], %s512
          %s515 = ssub.s32 128, 128
          %516 = vsyncadd %s510, %s515
          %s517 = smul.addr %s43, 128
          %s518 = scalar_lea.hbm %s1, %s517
          %s520 = sshll.u32 %s513, 4
          %s521 = int_to_ptr.vmem [resolvable:$true] %s520
          %523 = dma.hbm_to_vmem [thread:$0]  %s518, 128, %s521, %s510
        $region64: #{tpu_custom_call.1} parent=55 // pred_fallthru
          _
        // Predicated region
        $region65: #{tpu_custom_call.1} parent=55 // pred_check
          %p524 = pneg %p122
        $region66: #{tpu_custom_call.1} parent=55 // pred_check_branch
          %526 = sbr.rel (%p524) target = $region68
        $region67: #{tpu_custom_call.1} parent=55 // pred_region
          %s527 = sand.u32 %s36, 1
          %s528 = scalar_lea.sflag [#allocation8], %s527
          %s529 = sand.u32 %s112, 1
          %s530 = smul.addr %s529, 8
          %s531 = scalar_lea.vmem [#allocation9], %s530
          %s533 = ssub.s32 128, 128
          %534 = vsyncadd %s528, %s533
          %s535 = smul.addr %s43, 128
          %s536 = scalar_lea.hbm %s2, %s535
          %s538 = sshll.u32 %s531, 4
          %s539 = int_to_ptr.vmem [resolvable:$true] %s538
          %541 = dma.hbm_to_vmem [thread:$0]  %s536, 128, %s539, %s528
        $region68: #{tpu_custom_call.1} parent=55 // pred_fallthru
          _
      $region56: #{tpu_custom_call.1} parent=5 // pred_fallthru
        _
      %p542 = scmp.le.s32.totalorder 1, %s36
      %p543 = scmp.lt.s32.totalorder %s36, 3
      %p544 = pnand %p542, %p543
      %p545 = pneg %p544
      // Predicated region
      $region69: #{tpu_custom_call.1} parent=5 // pred_check
        _
      $region70: #{tpu_custom_call.1} parent=5 // pred_check_branch
        %547 = sbr.rel (%p544) target = $region72
      $region71: #{tpu_custom_call.1} parent=5 // pred_region
        %s548 = ssub.s32 %s36, 1
        %s549 = sand.u32 %s63, 1
        %s550 = scalar_lea.sflag [#allocation5], %s549
        %s551 = sand.u32 %s63, 1
        %s552 = smul.addr %s551, 8
        %s553 = scalar_lea.vmem [#allocation4], %s552
        // Predicated region
        $region73: #{tpu_custom_call.1} parent=71 // pred_check
          %p554 = pneg %p76
        $region74: #{tpu_custom_call.1} parent=71 // pred_check_branch
          %556 = sbr.rel (%p554) target = $region76
        $region75: #{tpu_custom_call.1} parent=71 // pred_region
          %557 = dma.done %s550, 128
        $region76: #{tpu_custom_call.1} parent=71 // pred_fallthru
          _
        %s558 = sand.u32 %s41, 1
        %s559 = scalar_lea.sflag [#allocation8], %s558
        %s560 = sand.u32 %s89, 1
        %s561 = smul.addr %s560, 8
        %s562 = scalar_lea.vmem [#allocation7], %s561
        // Predicated region
        $region77: #{tpu_custom_call.1} parent=71 // pred_check
          %p563 = pneg %p102
        $region78: #{tpu_custom_call.1} parent=71 // pred_check_branch
          %565 = sbr.rel (%p563) target = $region80
        $region79: #{tpu_custom_call.1} parent=71 // pred_region
          %566 = dma.done %s559, 128
        $region80: #{tpu_custom_call.1} parent=71 // pred_fallthru
          _
        %s567 = sand.u32 %s41, 1
        %s568 = scalar_lea.sflag [#allocation8], %s567
        %s569 = sand.u32 %s115, 1
        %s570 = smul.addr %s569, 8
        %s571 = scalar_lea.vmem [#allocation9], %s570
        // Predicated region
        $region81: #{tpu_custom_call.1} parent=71 // pred_check
          %p572 = pneg %p128
        $region82: #{tpu_custom_call.1} parent=71 // pred_check_branch
          %574 = sbr.rel (%p572) target = $region84
        $region83: #{tpu_custom_call.1} parent=71 // pred_region
          %575 = dma.done %s568, 128
        $region84: #{tpu_custom_call.1} parent=71 // pred_fallthru
          _
        // Predicated region
        $region85: #{tpu_custom_call.1} parent=71 // pred_check
          %p576 = pneg %p149
        $region86: #{tpu_custom_call.1} parent=71 // pred_check_branch
          %578 = sbr.rel (%p576) target = $region88
        $region87: #{tpu_custom_call.1} parent=71 // pred_region
          %579 = dma.done [#allocation11], 256
        $region88: #{tpu_custom_call.1} parent=71 // pred_fallthru
          _
        // Predicated region
        $region89: #{tpu_custom_call.1} parent=71 // pred_check
          %p580 = pneg %p212
        $region90: #{tpu_custom_call.1} parent=71 // pred_check_branch
          %582 = sbr.rel (%p580) target = $region92
        $region91: #{tpu_custom_call.1} parent=71 // pred_region
          %583 = dma.done [#allocation11], 16
        $region92: #{tpu_custom_call.1} parent=71 // pred_fallthru
          _
        // Predicated region
        $region93: #{tpu_custom_call.1} parent=71 // pred_check
          %p584 = pneg %p233
        $region94: #{tpu_custom_call.1} parent=71 // pred_check_branch
          %586 = sbr.rel (%p584) target = $region96
        $region95: #{tpu_custom_call.1} parent=71 // pred_region
          %587 = dma.done [#allocation14], 256
        $region96: #{tpu_custom_call.1} parent=71 // pred_fallthru
          _
        // Predicated region
        $region97: #{tpu_custom_call.1} parent=71 // pred_check
          %p588 = pneg %p254
        $region98: #{tpu_custom_call.1} parent=71 // pred_check_branch
          %590 = sbr.rel (%p588) target = $region100
        $region99: #{tpu_custom_call.1} parent=71 // pred_region
          %591 = dma.done [#allocation14], 16
        $region100: #{tpu_custom_call.1} parent=71 // pred_fallthru
          _
        // Predicated region
        $region101: #{tpu_custom_call.1} parent=71 // pred_check
          %p592 = pneg %p296
        $region102: #{tpu_custom_call.1} parent=71 // pred_check_branch
          %594 = sbr.rel (%p592) target = $region104
        $region103: #{tpu_custom_call.1} parent=71 // pred_region
          %595 = dma.done [#allocation17], 16
        $region104: #{tpu_custom_call.1} parent=71 // pred_fallthru
          _
        %s596 = sand.u32 %s63, 1
        %s597 = scalar_lea.sflag [#allocation5], %s596
        %s598 = sand.u32 %s63, 1
        %s599 = smul.addr %s598, 8
        %s600 = scalar_lea.vmem [#allocation4], %s599
        %p601 = pneg %p76
        %p602 = pneg %p73
        %s603 = sand.u32 %s41, 1
        %s604 = scalar_lea.sflag [#allocation8], %s603
        %s605 = sand.u32 %s89, 1
        %s606 = smul.addr %s605, 8
        %s607 = scalar_lea.vmem [#allocation7], %s606
        %p608 = pneg %p102
        %p609 = pneg %p99
        %s610 = sand.u32 %s41, 1
        %s611 = scalar_lea.sflag [#allocation8], %s610
        %s612 = sand.u32 %s115, 1
        %s613 = smul.addr %s612, 8
        %s614 = scalar_lea.vmem [#allocation9], %s613
        %p615 = pneg %p128
        %p616 = pneg %p125
        %p617 = pneg %p149
        %p618 = pneg %p146
        %p619 = pneg %p170
        %p620 = pneg %p167
        %p621 = pneg %p191
        %p622 = pneg %p188
        %p623 = pneg %p212
        %p624 = pneg %p209
        %p625 = pneg %p233
        %p626 = pneg %p230
        %p627 = pneg %p254
        %p628 = pneg %p251
        %p629 = pneg %p275
        %p630 = pneg %p272
        %p631 = pneg %p296
        %p632 = pneg %p293
        %p633 = pneg %p317
        %p634 = pneg %p314
        %p635 = pneg %p338
        %p636 = pneg %p335
        %p637 = pneg %p366
        %p638 = pneg %p363
        %s639 = sand.u32 %s353, 1
        %s640 = scalar_lea.sflag [#allocation6], %s639
        %s641 = sand.u32 %s353, 1
        %s642 = smul.addr %s641, 8
        %s643 = scalar_lea.vmem [#allocation18], %s642
        %p644 = pneg %p394
        %p645 = pneg %p391
        %s646 = sand.u32 %s381, 1
        %s647 = scalar_lea.sflag [#allocation20], %s646
        %s648 = sand.u32 %s381, 1
        %s649 = smul.addr %s648, 8
        %s650 = scalar_lea.vmem [#allocation19], %s649
        %p652 = scmp.eq.s32.totalorder %s46, 0
        // Predicated region
        $region105: #{tpu_custom_call.1} parent=71 // pred_check
          %p653 = pneg %p652
        $region106: #{tpu_custom_call.1} parent=71 // pred_check_branch
          %655 = sbr.rel (%p653) target = $region108
        $region107: #{tpu_custom_call.1} parent=71 // pred_region
          %v656 = vld [vmem:[%s562] sm:$0xff]
          %v657 = vpack.c.bf16 %v656, %v656
          %v658 = vld [vmem:[%s571] sm:$0xff]
          %v659 = vpack.c.bf16 %v658, %v658
          %v660 = vld [vmem:[%s5] sm:$0xf]
          %v661 = vld [vmem:[%s5 + $0x4] sm:$0xf]
          %v662 = vld [vmem:[%s5 + $0x8] sm:$0xf]
          %v663 = vld [vmem:[%s5 + $0xc] sm:$0xf]
          %v664 = vld [vmem:[#allocation12] sm:$0x1]
          %v666 = vlaneseq
          %v667 = vshrl.u32 %v666, 7
          %v668 = vsub.s32 0, %v667
          %v669 = vrot.slane %v664, %v668
          %v675 = vunpack.c.l.b16 %v660
          %v676 = vunpack.c.l.b16 %v661
          %v677 = vunpack.c.l.b16 %v662
          %v678 = vunpack.c.l.b16 %v663
          %v679 = vpack.c.b16 %v676, %v675
          %v680 = vpack.c.b16 %v678, %v677
          %vm683 = vcmask 261120
          %v685 = vsel %vm683, %v657, 0
          %687 = vmatprep.subr.bf16.mxu0 0
          %688 = vmatpush1.bf16.msra.mxu0 %v679
          %689 = vmatprep.subr.bf16.mxu0 0
          %690 = vmatpush1.bf16.msra.mxu0 %v680
          %691 = vmatprep.subr.bf16.mxu0 0
          %692 = vmatpush1.bf16.msra.mxu0 0
          %693 = vmatprep.subr.bf16.mxu0 0
          %694 = vmatpush1.bf16.msra.mxu0 0
          %695 = vmatprep.subr.bf16.mxu0 0
          %696 = vmatpush1.bf16.msra.mxu0 0
          %697 = vmatprep.subr.bf16.mxu0 0
          %698 = vmatpush1.bf16.msra.mxu0 0
          %699 = vmatprep.subr.bf16.mxu0 0
          %700 = vmatpush1.bf16.msra.mxu0 0
          %701 = vmatprep.subr.bf16.mxu0 0
          %702 = vmatpush1.bf16.msra.mxu0 0
          %703 = vmatprep.subr.bf16.mxu0 0
          %704 = vmatpush1.bf16.msra.mxu0 0
          %705 = vmatprep.subr.bf16.mxu0 0
          %706 = vmatpush1.bf16.msra.mxu0 0
          %707 = vmatprep.subr.bf16.mxu0 0
          %708 = vmatpush1.bf16.msra.mxu0 0
          %709 = vmatprep.subr.bf16.mxu0 0
          %710 = vmatpush1.bf16.msra.mxu0 0
          %711 = vmatprep.subr.bf16.mxu0 0
          %712 = vmatpush1.bf16.msra.mxu0 0
          %713 = vmatprep.subr.bf16.mxu0 0
          %714 = vmatpush1.bf16.msra.mxu0 0
          %715 = vmatprep.subr.bf16.mxu0 0
          %716 = vmatpush1.bf16.msra.mxu0 0
          %717 = vmatprep.subr.bf16.mxu0 0
          %718 = vmatpush1.bf16.msra.mxu0 0
          %719 = vmatprep.mubr.bf16.mxu0 0
          %720 = vmatmul.mubr.bf16.gmra.mrb[0].mxu0 %v685
          %v721 = vpop.f32.mrb[0].mxu0
          %v722 = vadd.f32 %v669, %v721
          %v723 = vpop.f32.mrb[0].mxu0
          %v724 = vpop.f32.mrb[0].mxu0
          %v725 = vpop.f32.mrb[0].mxu0
          %726 = vdwg.mxu0
          %v727 = vld [vmem:[#allocation13] sm:$0xf]
          %v728 = vld [vmem:[#allocation13 + $0x4] sm:$0xf]
          %v729 = vld [vmem:[#allocation13 + $0x8] sm:$0xf]
          %v730 = vld [vmem:[#allocation13 + $0xc] sm:$0xf]
          %v731 = vld [vmem:[#allocation15] sm:$0x1]
          %v733 = vlaneseq
          %v734 = vshrl.u32 %v733, 7
          %v735 = vsub.s32 0, %v734
          %v736 = vrot.slane %v731, %v735
          %v742 = vunpack.c.l.b16 %v727
          %v743 = vunpack.c.l.b16 %v728
          %v744 = vunpack.c.l.b16 %v729
          %v745 = vunpack.c.l.b16 %v730
          %v746 = vpack.c.b16 %v743, %v742
          %v747 = vpack.c.b16 %v745, %v744
          %v751 = vsel %vm683, %v659, 0
          %753 = vmatprep.subr.bf16.mxu0 0
          %754 = vmatpush1.bf16.msra.mxu0 %v746
          %755 = vmatprep.subr.bf16.mxu0 0
          %756 = vmatpush1.bf16.msra.mxu0 %v747
          %757 = vmatprep.subr.bf16.mxu0 0
          %758 = vmatpush1.bf16.msra.mxu0 0
          %759 = vmatprep.subr.bf16.mxu0 0
          %760 = vmatpush1.bf16.msra.mxu0 0
          %761 = vmatprep.subr.bf16.mxu0 0
          %762 = vmatpush1.bf16.msra.mxu0 0
          %763 = vmatprep.subr.bf16.mxu0 0
          %764 = vmatpush1.bf16.msra.mxu0 0
          %765 = vmatprep.subr.bf16.mxu0 0
          %766 = vmatpush1.bf16.msra.mxu0 0
          %767 = vmatprep.subr.bf16.mxu0 0
          %768 = vmatpush1.bf16.msra.mxu0 0
          %769 = vmatprep.subr.bf16.mxu0 0
          %770 = vmatpush1.bf16.msra.mxu0 0
          %771 = vmatprep.subr.bf16.mxu0 0
          %772 = vmatpush1.bf16.msra.mxu0 0
          %773 = vmatprep.subr.bf16.mxu0 0
          %774 = vmatpush1.bf16.msra.mxu0 0
          %775 = vmatprep.subr.bf16.mxu0 0
          %776 = vmatpush1.bf16.msra.mxu0 0
          %777 = vmatprep.subr.bf16.mxu0 0
          %778 = vmatpush1.bf16.msra.mxu0 0
          %779 = vmatprep.subr.bf16.mxu0 0
          %780 = vmatpush1.bf16.msra.mxu0 0
          %781 = vmatprep.subr.bf16.mxu0 0
          %782 = vmatpush1.bf16.msra.mxu0 0
          %783 = vmatprep.subr.bf16.mxu0 0
          %784 = vmatpush1.bf16.msra.mxu0 0
          %785 = vmatprep.mubr.bf16.mxu0 0
          %786 = vmatmul.mubr.bf16.gmra.mrb[0].mxu0 %v751
          %v787 = vpop.f32.mrb[0].mxu0
          %v788 = vadd.f32 %v736, %v787
          %v789 = vpop.f32.mrb[0].mxu0
          %v790 = vpop.f32.mrb[0].mxu0
          %v791 = vpop.f32.mrb[0].mxu0
          %792 = vdwg.mxu0
          %v793 = vpack.c.bf16 %v722, %v722
          %vm794 = vcmask 257024
          %795 = vst.msk [vmem:[#allocation2] sm:$0xf] %vm794, %v793
          %v796 = vld [vmem:[%s11] sm:$0xf]
          %v798 = vunpack.c.l.b16 %v796
          %v799 = vpack.c.b16 %v798, %v798
          %vm801 = vcmask 261124
          %802 = vst.msk [vmem:[#allocation2] sm:$0xf0] %vm801, %v799
          %v803 = vpack.c.bf16 %v788, %v788
          %804 = vst.msk [vmem:[#allocation3] sm:$0xf] %vm794, %v803
          %v805 = vld [vmem:[%s12] sm:$0xf]
          %v807 = vunpack.c.l.b16 %v805
          %v808 = vpack.c.b16 %v807, %v807
          %810 = vst.msk [vmem:[#allocation3] sm:$0xf0] %vm801, %v808
        $region108: #{tpu_custom_call.1} parent=71 // pred_fallthru
          _
        %v811 = vld [vmem:[%s553] sm:$0xff]
        %v812 = vpack.c.bf16 %v811, %v811
        %v813 = vld [vmem:[#allocation10] sm:$0xf]
        %v814 = vld [vmem:[#allocation10 + $0x4] sm:$0xf]
        %v815 = vld [vmem:[#allocation10 + $0x8] sm:$0xf]
        %v816 = vld [vmem:[#allocation10 + $0xc] sm:$0xf]
        %v817 = vld [vmem:[%s4] sm:$0x1]
        %v819 = vlaneseq
        %v820 = vshrl.u32 %v819, 7
        %v821 = vsub.s32 0, %v820
        %v822 = vrot.slane %v817, %v821
        %v828 = vunpack.c.l.b16 %v813
        %v829 = vunpack.c.l.b16 %v814
        %v830 = vunpack.c.l.b16 %v815
        %v831 = vunpack.c.l.b16 %v816
        %v832 = vpack.c.b16 %v829, %v828
        %v833 = vpack.c.b16 %v831, %v830
        %vm836 = vcmask 261120
        %v838 = vsel %vm836, %v812, 0
        %840 = vmatprep.subr.bf16.mxu0 0
        %841 = vmatpush1.bf16.msra.mxu0 %v832
        %842 = vmatprep.subr.bf16.mxu0 0
        %843 = vmatpush1.bf16.msra.mxu0 %v833
        %844 = vmatprep.subr.bf16.mxu0 0
        %845 = vmatpush1.bf16.msra.mxu0 0
        %846 = vmatprep.subr.bf16.mxu0 0
        %847 = vmatpush1.bf16.msra.mxu0 0
        %848 = vmatprep.subr.bf16.mxu0 0
        %849 = vmatpush1.bf16.msra.mxu0 0
        %850 = vmatprep.subr.bf16.mxu0 0
        %851 = vmatpush1.bf16.msra.mxu0 0
        %852 = vmatprep.subr.bf16.mxu0 0
        %853 = vmatpush1.bf16.msra.mxu0 0
        %854 = vmatprep.subr.bf16.mxu0 0
        %855 = vmatpush1.bf16.msra.mxu0 0
        %856 = vmatprep.subr.bf16.mxu0 0
        %857 = vmatpush1.bf16.msra.mxu0 0
        %858 = vmatprep.subr.bf16.mxu0 0
        %859 = vmatpush1.bf16.msra.mxu0 0
        %860 = vmatprep.subr.bf16.mxu0 0
        %861 = vmatpush1.bf16.msra.mxu0 0
        %862 = vmatprep.subr.bf16.mxu0 0
        %863 = vmatpush1.bf16.msra.mxu0 0
        %864 = vmatprep.subr.bf16.mxu0 0
        %865 = vmatpush1.bf16.msra.mxu0 0
        %866 = vmatprep.subr.bf16.mxu0 0
        %867 = vmatpush1.bf16.msra.mxu0 0
        %868 = vmatprep.subr.bf16.mxu0 0
        %869 = vmatpush1.bf16.msra.mxu0 0
        %870 = vmatprep.subr.bf16.mxu0 0
        %871 = vmatpush1.bf16.msra.mxu0 0
        %872 = vmatprep.mubr.bf16.mxu0 0
        %873 = vmatmul.mubr.bf16.gmra.mrb[0].mxu0 %v838
        %v874 = vpop.f32.mrb[0].mxu0
        %v875 = vadd.f32 %v822, %v874
        %v876 = vpop.f32.mrb[0].mxu0
        %v877 = vpop.f32.mrb[0].mxu0
        %v878 = vpop.f32.mrb[0].mxu0
        %879 = vdwg.mxu0
        %v880 = vmul.f32 %v875, 0.35355338
        %v881 = vpack.c.bf16 %v880, %v880
        %v882 = vld [vmem:[#allocation2] sm:$0xff]
        %v883 = vld [vmem:[#allocation3] sm:$0xff]
        %vm884 = vcmask 64512
        %v886 = vsel %vm884, %v881, 0
        %v889 = vsel %vm884, %v882, 0
        %891 = vmatprep.subr.bf16.mxu0 0
        %892 = vmatpush1.bf16.xpose.msra.mxu0 %v889
        %893 = vmatprep.subr.bf16.mxu0 0
        %894 = vmatpush1.bf16.xpose.msra.mxu0 0
        %895 = vmatprep.subr.bf16.mxu0 0
        %896 = vmatpush1.bf16.xpose.msra.mxu0 0
        %897 = vmatprep.subr.bf16.mxu0 0
        %898 = vmatpush1.bf16.xpose.msra.mxu0 0
        %899 = vmatprep.subr.bf16.mxu0 0
        %900 = vmatpush1.bf16.xpose.msra.mxu0 0
        %901 = vmatprep.subr.bf16.mxu0 0
        %902 = vmatpush1.bf16.xpose.msra.mxu0 0
        %903 = vmatprep.subr.bf16.mxu0 0
        %904 = vmatpush1.bf16.xpose.msra.mxu0 0
        %905 = vmatprep.subr.bf16.mxu0 0
        %906 = vmatpush1.bf16.xpose.msra.mxu0 0
        %907 = vmatprep.subr.bf16.mxu0 0
        %908 = vmatpush1.bf16.xpose.msra.mxu0 0
        %909 = vmatprep.subr.bf16.mxu0 0
        %910 = vmatpush1.bf16.xpose.msra.mxu0 0
        %911 = vmatprep.subr.bf16.mxu0 0
        %912 = vmatpush1.bf16.xpose.msra.mxu0 0
        %913 = vmatprep.subr.bf16.mxu0 0
        %914 = vmatpush1.bf16.xpose.msra.mxu0 0
        %915 = vmatprep.subr.bf16.mxu0 0
        %916 = vmatpush1.bf16.xpose.msra.mxu0 0
        %917 = vmatprep.subr.bf16.mxu0 0
        %918 = vmatpush1.bf16.xpose.msra.mxu0 0
        %919 = vmatprep.subr.bf16.mxu0 0
        %920 = vmatpush1.bf16.xpose.msra.mxu0 0
        %921 = vmatprep.subr.bf16.mxu0 0
        %922 = vmatpush1.bf16.xpose.msra.mxu0 0
        %923 = vmatprep.mubr.bf16.mxu0 0
        %924 = vmatmul.mubr.bf16.gmra.mrb[0].mxu0 %v886
        %v925 = vpop.f32.mrb[0].mxu0
        %v926 = vadd.f32 0.0, %v925
        %v927 = vpop.f32.mrb[0].mxu0
        %v928 = vpop.f32.mrb[0].mxu0
        %v929 = vpop.f32.mrb[0].mxu0
        %930 = vdwg.mxu0
        %vm931 = vcmask 130048
        %v932 = vsel %vm931, %v926, -inf
        %933 = vmax.xlane.f32.xlu0 %v932
        %v934 = vpop.xlane.xlu0 %933
        %v935 = vsub.f32 %v926, %v934
        %v936 = vmul.f32 %v935, 1.442695
        %v937 = vpow.pop %v936
        %v938 = vsel %vm931, %v937, 0.0
        %939 = vadd.xlane.f32.xlu0 %v938
        %v940 = vpop.xlane.xlu0 %939
        %v941 = vrcp.pop %v940
        %v942 = vmul.f32 %v937, %v941
        %943 = vst.msk [vmem:[%s650] sm:$0xff] %vm931, %v942
        %v944 = vpack.c.bf16 %v942, %v942
        %v946 = vsel %vm931, %v944, 0
        %948 = vmatprep.subr.bf16.mxu0 0
        %949 = vmatpush1.bf16.msra.mxu0 %v883
        %950 = vmatprep.subr.bf16.mxu0 0
        %951 = vmatpush1.bf16.msra.mxu0 0
        %952 = vmatprep.subr.bf16.mxu0 0
        %953 = vmatpush1.bf16.msra.mxu0 0
        %954 = vmatprep.subr.bf16.mxu0 0
        %955 = vmatpush1.bf16.msra.mxu0 0
        %956 = vmatprep.subr.bf16.mxu0 0
        %957 = vmatpush1.bf16.msra.mxu0 0
        %958 = vmatprep.subr.bf16.mxu0 0
        %959 = vmatpush1.bf16.msra.mxu0 0
        %960 = vmatprep.subr.bf16.mxu0 0
        %961 = vmatpush1.bf16.msra.mxu0 0
        %962 = vmatprep.subr.bf16.mxu0 0
        %963 = vmatpush1.bf16.msra.mxu0 0
        %964 = vmatprep.subr.bf16.mxu0 0
        %965 = vmatpush1.bf16.msra.mxu0 0
        %966 = vmatprep.subr.bf16.mxu0 0
        %967 = vmatpush1.bf16.msra.mxu0 0
        %968 = vmatprep.subr.bf16.mxu0 0
        %969 = vmatpush1.bf16.msra.mxu0 0
        %970 = vmatprep.subr.bf16.mxu0 0
        %971 = vmatpush1.bf16.msra.mxu0 0
        %972 = vmatprep.subr.bf16.mxu0 0
        %973 = vmatpush1.bf16.msra.mxu0 0
        %974 = vmatprep.subr.bf16.mxu0 0
        %975 = vmatpush1.bf16.msra.mxu0 0
        %976 = vmatprep.subr.bf16.mxu0 0
        %977 = vmatpush1.bf16.msra.mxu0 0
        %978 = vmatprep.subr.bf16.mxu0 0
        %979 = vmatpush1.bf16.msra.mxu0 0
        %980 = vmatprep.mubr.bf16.mxu0 0
        %981 = vmatmul.mubr.bf16.gmra.mrb[0].mxu0 %v946
        %v982 = vpop.f32.mrb[0].mxu0
        %v983 = vadd.f32 0.0, %v982
        %v984 = vpop.f32.mrb[0].mxu0
        %v985 = vpop.f32.mrb[0].mxu0
        %v986 = vpop.f32.mrb[0].mxu0
        %987 = vdwg.mxu0
        %v988 = vpack.c.bf16 %v983, %v983
        %v989 = vld [vmem:[%s9] sm:$0xf]
        %991 = vrot.lane.b32.xlu0 %v881, 120
        %v992 = vpop.permute.xlu0 %991
        %994 = vrot.lane.b32.xlu0 %v882, 120
        %v995 = vpop.permute.xlu0 %994
        %v997 = vsel %vm884, %v992, 0
        %v1000 = vsel %vm884, %v995, 0
        %1002 = vmatprep.subr.bf16.mxu0 0
        %1003 = vmatpush1.bf16.xpose.msra.mxu0 %v1000
        %1004 = vmatprep.subr.bf16.mxu0 0
        %1005 = vmatpush1.bf16.xpose.msra.mxu0 0
        %1006 = vmatprep.subr.bf16.mxu0 0
        %1007 = vmatpush1.bf16.xpose.msra.mxu0 0
        %1008 = vmatprep.subr.bf16.mxu0 0
        %1009 = vmatpush1.bf16.xpose.msra.mxu0 0
        %1010 = vmatprep.subr.bf16.mxu0 0
        %1011 = vmatpush1.bf16.xpose.msra.mxu0 0
        %1012 = vmatprep.subr.bf16.mxu0 0
        %1013 = vmatpush1.bf16.xpose.msra.mxu0 0
        %1014 = vmatprep.subr.bf16.mxu0 0
        %1015 = vmatpush1.bf16.xpose.msra.mxu0 0
        %1016 = vmatprep.subr.bf16.mxu0 0
        %1017 = vmatpush1.bf16.xpose.msra.mxu0 0
        %1018 = vmatprep.subr.bf16.mxu0 0
        %1019 = vmatpush1.bf16.xpose.msra.mxu0 0
        %1020 = vmatprep.subr.bf16.mxu0 0
        %1021 = vmatpush1.bf16.xpose.msra.mxu0 0
        %1022 = vmatprep.subr.bf16.mxu0 0
        %1023 = vmatpush1.bf16.xpose.msra.mxu0 0
        %1024 = vmatprep.subr.bf16.mxu0 0
        %1025 = vmatpush1.bf16.xpose.msra.mxu0 0
        %1026 = vmatprep.subr.bf16.mxu0 0
        %1027 = vmatpush1.bf16.xpose.msra.mxu0 0
        %1028 = vmatprep.subr.bf16.mxu0 0
        %1029 = vmatpush1.bf16.xpose.msra.mxu0 0
        %1030 = vmatprep.subr.bf16.mxu0 0
        %1031 = vmatpush1.bf16.xpose.msra.mxu0 0
        %1032 = vmatprep.subr.bf16.mxu0 0
        %1033 = vmatpush1.bf16.xpose.msra.mxu0 0
        %1034 = vmatprep.mubr.bf16.mxu0 0
        %1035 = vmatmul.mubr.bf16.gmra.mrb[0].mxu0 %v997
        %v1036 = vpop.f32.mrb[0].mxu0
        %v1037 = vadd.f32 0.0, %v1036
        %v1038 = vpop.f32.mrb[0].mxu0
        %v1039 = vpop.f32.mrb[0].mxu0
        %v1040 = vpop.f32.mrb[0].mxu0
        %1041 = vdwg.mxu0
        %v1042 = vsel %vm931, %v1037, -inf
        %1043 = vmax.xlane.f32.xlu0 %v1042
        %v1044 = vpop.xlane.xlu0 %1043
        %v1045 = vsub.f32 %v1037, %v1044
        %v1046 = vmul.f32 %v1045, 1.442695
        %v1047 = vpow.pop %v1046
        %v1048 = vsel %vm931, %v1047, 0.0
        %1049 = vadd.xlane.f32.xlu0 %v1048
        %v1050 = vpop.xlane.xlu0 %1049
        %v1051 = vrcp.pop %v1050
        %v1052 = vmul.f32 %v1047, %v1051
        %1054 = vrot.lane.b32.xlu0 %v1052, 16
        %v1055 = vpop.permute.xlu0 %1054
        %vm1057 = vcmask 261248
        %1058 = vst.msk [vmem:[%s650] sm:$0xff] %vm1057, %v1055
        %v1059 = vpack.c.bf16 %v1052, %v1052
        %1061 = vrot.lane.b32.xlu0 %v883, 120
        %v1062 = vpop.permute.xlu0 %1061
        %v1065 = vsel %vm931, %v1059, 0
        %1067 = vmatprep.subr.bf16.mxu0 0
        %1068 = vmatpush1.bf16.msra.mxu0 %v1062
        %1069 = vmatprep.subr.bf16.mxu0 0
        %1070 = vmatpush1.bf16.msra.mxu0 0
        %1071 = vmatprep.subr.bf16.mxu0 0
        %1072 = vmatpush1.bf16.msra.mxu0 0
        %1073 = vmatprep.subr.bf16.mxu0 0
        %1074 = vmatpush1.bf16.msra.mxu0 0
        %1075 = vmatprep.subr.bf16.mxu0 0
        %1076 = vmatpush1.bf16.msra.mxu0 0
        %1077 = vmatprep.subr.bf16.mxu0 0
        %1078 = vmatpush1.bf16.msra.mxu0 0
        %1079 = vmatprep.subr.bf16.mxu0 0
        %1080 = vmatpush1.bf16.msra.mxu0 0
        %1081 = vmatprep.subr.bf16.mxu0 0
        %1082 = vmatpush1.bf16.msra.mxu0 0
        %1083 = vmatprep.subr.bf16.mxu0 0
        %1084 = vmatpush1.bf16.msra.mxu0 0
        %1085 = vmatprep.subr.bf16.mxu0 0
        %1086 = vmatpush1.bf16.msra.mxu0 0
        %1087 = vmatprep.subr.bf16.mxu0 0
        %1088 = vmatpush1.bf16.msra.mxu0 0
        %1089 = vmatprep.subr.bf16.mxu0 0
        %1090 = vmatpush1.bf16.msra.mxu0 0
        %1091 = vmatprep.subr.bf16.mxu0 0
        %1092 = vmatpush1.bf16.msra.mxu0 0
        %1093 = vmatprep.subr.bf16.mxu0 0
        %1094 = vmatpush1.bf16.msra.mxu0 0
        %1095 = vmatprep.subr.bf16.mxu0 0
        %1096 = vmatpush1.bf16.msra.mxu0 0
        %1097 = vmatprep.subr.bf16.mxu0 0
        %1098 = vmatpush1.bf16.msra.mxu0 0
        %1099 = vmatprep.mubr.bf16.mxu0 0
        %1100 = vmatmul.mubr.bf16.gmra.mrb[0].mxu0 %v1065
        %v1101 = vpop.f32.mrb[0].mxu0
        %v1102 = vadd.f32 0.0, %v1101
        %v1103 = vpop.f32.mrb[0].mxu0
        %v1104 = vpop.f32.mrb[0].mxu0
        %v1105 = vpop.f32.mrb[0].mxu0
        %1106 = vdwg.mxu0
        %v1107 = vpack.c.bf16 %v1102, %v1102
        %s1108 = scalar_lea.vmem %s9, 4
        %v1109 = vld [vmem:[%s1108] sm:$0xf]
        %v1111 = vsel %vm884, %v1107, 0
        %vm1113 = vcmask 1043456
        %v1115 = vsel %vm1113, %v1109, 0
        %1117 = vmatprep.subr.bf16.mxu0 0
        %1118 = vmatpush1.bf16.msra.mxu0 %v1115
        %1119 = vmatprep.subr.bf16.mxu0 0
        %1120 = vmatpush1.bf16.msra.mxu0 0
        %1121 = vmatprep.subr.bf16.mxu0 0
        %1122 = vmatpush1.bf16.msra.mxu0 0
        %1123 = vmatprep.subr.bf16.mxu0 0
        %1124 = vmatpush1.bf16.msra.mxu0 0
        %1125 = vmatprep.subr.bf16.mxu0 0
        %1126 = vmatpush1.bf16.msra.mxu0 0
        %1127 = vmatprep.subr.bf16.mxu0 0
        %1128 = vmatpush1.bf16.msra.mxu0 0
        %1129 = vmatprep.subr.bf16.mxu0 0
        %1130 = vmatpush1.bf16.msra.mxu0 0
        %1131 = vmatprep.subr.bf16.mxu0 0
        %1132 = vmatpush1.bf16.msra.mxu0 0
        %1133 = vmatprep.subr.bf16.mxu0 0
        %1134 = vmatpush1.bf16.msra.mxu0 0
        %1135 = vmatprep.subr.bf16.mxu0 0
        %1136 = vmatpush1.bf16.msra.mxu0 0
        %1137 = vmatprep.subr.bf16.mxu0 0
        %1138 = vmatpush1.bf16.msra.mxu0 0
        %1139 = vmatprep.subr.bf16.mxu0 0
        %1140 = vmatpush1.bf16.msra.mxu0 0
        %1141 = vmatprep.subr.bf16.mxu0 0
        %1142 = vmatpush1.bf16.msra.mxu0 0
        %1143 = vmatprep.subr.bf16.mxu0 0
        %1144 = vmatpush1.bf16.msra.mxu0 0
        %1145 = vmatprep.subr.bf16.mxu0 0
        %1146 = vmatpush1.bf16.msra.mxu0 0
        %1147 = vmatprep.subr.bf16.mxu0 0
        %1148 = vmatpush1.bf16.msra.mxu0 0
        %1149 = vmatprep.mubr.bf16.mxu0 0
        %1150 = vmatmul.mubr.bf16.gmra.mrb[0].mxu0 %v1111
        %v1151 = vpop.f32.mrb[0].mxu0
        %v1152 = vadd.f32 0.0, %v1151
        %v1153 = vpop.f32.mrb[0].mxu0
        %v1154 = vpop.f32.mrb[0].mxu0
        %v1155 = vpop.f32.mrb[0].mxu0
        %1156 = vdwg.mxu0
        %v1158 = vsel %vm884, %v988, 0
        %v1161 = vsel %vm1113, %v989, 0
        %1163 = vmatprep.subr.bf16.mxu0 0
        %1164 = vmatpush1.bf16.msra.mxu0 %v1161
        %1165 = vmatprep.subr.bf16.mxu0 0
        %1166 = vmatpush1.bf16.msra.mxu0 0
        %1167 = vmatprep.subr.bf16.mxu0 0
        %1168 = vmatpush1.bf16.msra.mxu0 0
        %1169 = vmatprep.subr.bf16.mxu0 0
        %1170 = vmatpush1.bf16.msra.mxu0 0
        %1171 = vmatprep.subr.bf16.mxu0 0
        %1172 = vmatpush1.bf16.msra.mxu0 0
        %1173 = vmatprep.subr.bf16.mxu0 0
        %1174 = vmatpush1.bf16.msra.mxu0 0
        %1175 = vmatprep.subr.bf16.mxu0 0
        %1176 = vmatpush1.bf16.msra.mxu0 0
        %1177 = vmatprep.subr.bf16.mxu0 0
        %1178 = vmatpush1.bf16.msra.mxu0 0
        %1179 = vmatprep.subr.bf16.mxu0 0
        %1180 = vmatpush1.bf16.msra.mxu0 0
        %1181 = vmatprep.subr.bf16.mxu0 0
        %1182 = vmatpush1.bf16.msra.mxu0 0
        %1183 = vmatprep.subr.bf16.mxu0 0
        %1184 = vmatpush1.bf16.msra.mxu0 0
        %1185 = vmatprep.subr.bf16.mxu0 0
        %1186 = vmatpush1.bf16.msra.mxu0 0
        %1187 = vmatprep.subr.bf16.mxu0 0
        %1188 = vmatpush1.bf16.msra.mxu0 0
        %1189 = vmatprep.subr.bf16.mxu0 0
        %1190 = vmatpush1.bf16.msra.mxu0 0
        %1191 = vmatprep.subr.bf16.mxu0 0
        %1192 = vmatpush1.bf16.msra.mxu0 0
        %1193 = vmatprep.subr.bf16.mxu0 0
        %1194 = vmatpush1.bf16.msra.mxu0 0
        %1195 = vmatprep.mubr.bf16.mxu0 0
        %1196 = vmatmul.mubr.bf16.gmra.mrb[0].mxu0 %v1158
        %v1197 = vpop.f32.mrb[0].mxu0
        %v1198 = vadd.f32 %v1152, %v1197
        %v1199 = vpop.f32.mrb[0].mxu0
        %v1200 = vpop.f32.mrb[0].mxu0
        %v1201 = vpop.f32.mrb[0].mxu0
        %1202 = vdwg.mxu0
        %1203 = vrot.lane.b32.xlu0 %v881, 112
        %v1204 = vpop.permute.xlu0 %1203
        %1205 = vrot.lane.b32.xlu0 %v882, 112
        %v1206 = vpop.permute.xlu0 %1205
        %v1208 = vsel %vm884, %v1204, 0
        %v1211 = vsel %vm884, %v1206, 0
        %1213 = vmatprep.subr.bf16.mxu0 0
        %1214 = vmatpush1.bf16.xpose.msra.mxu0 %v1211
        %1215 = vmatprep.subr.bf16.mxu0 0
        %1216 = vmatpush1.bf16.xpose.msra.mxu0 0
        %1217 = vmatprep.subr.bf16.mxu0 0
        %1218 = vmatpush1.bf16.xpose.msra.mxu0 0
        %1219 = vmatprep.subr.bf16.mxu0 0
        %1220 = vmatpush1.bf16.xpose.msra.mxu0 0
        %1221 = vmatprep.subr.bf16.mxu0 0
        %1222 = vmatpush1.bf16.xpose.msra.mxu0 0
        %1223 = vmatprep.subr.bf16.mxu0 0
        %1224 = vmatpush1.bf16.xpose.msra.mxu0 0
        %1225 = vmatprep.subr.bf16.mxu0 0
        %1226 = vmatpush1.bf16.xpose.msra.mxu0 0
        %1227 = vmatprep.subr.bf16.mxu0 0
        %1228 = vmatpush1.bf16.xpose.msra.mxu0 0
        %1229 = vmatprep.subr.bf16.mxu0 0
        %1230 = vmatpush1.bf16.xpose.msra.mxu0 0
        %1231 = vmatprep.subr.bf16.mxu0 0
        %1232 = vmatpush1.bf16.xpose.msra.mxu0 0
        %1233 = vmatprep.subr.bf16.mxu0 0
        %1234 = vmatpush1.bf16.xpose.msra.mxu0 0
        %1235 = vmatprep.subr.bf16.mxu0 0
        %1236 = vmatpush1.bf16.xpose.msra.mxu0 0
        %1237 = vmatprep.subr.bf16.mxu0 0
        %1238 = vmatpush1.bf16.xpose.msra.mxu0 0
        %1239 = vmatprep.subr.bf16.mxu0 0
        %1240 = vmatpush1.bf16.xpose.msra.mxu0 0
        %1241 = vmatprep.subr.bf16.mxu0 0
        %1242 = vmatpush1.bf16.xpose.msra.mxu0 0
        %1243 = vmatprep.subr.bf16.mxu0 0
        %1244 = vmatpush1.bf16.xpose.msra.mxu0 0
        %1245 = vmatprep.mubr.bf16.mxu0 0
        %1246 = vmatmul.mubr.bf16.gmra.mrb[0].mxu0 %v1208
        %v1247 = vpop.f32.mrb[0].mxu0
        %v1248 = vadd.f32 0.0, %v1247
        %v1249 = vpop.f32.mrb[0].mxu0
        %v1250 = vpop.f32.mrb[0].mxu0
        %v1251 = vpop.f32.mrb[0].mxu0
        %1252 = vdwg.mxu0
        %v1253 = vsel %vm931, %v1248, -inf
        %1254 = vmax.xlane.f32.xlu0 %v1253
        %v1255 = vpop.xlane.xlu0 %1254
        %v1256 = vsub.f32 %v1248, %v1255
        %v1257 = vmul.f32 %v1256, 1.442695
        %v1258 = vpow.pop %v1257
        %v1259 = vsel %vm931, %v1258, 0.0
        %1260 = vadd.xlane.f32.xlu0 %v1259
        %v1261 = vpop.xlane.xlu0 %1260
        %v1262 = vrcp.pop %v1261
        %v1263 = vmul.f32 %v1258, %v1262
        %1265 = vrot.lane.b32.xlu0 %v1263, 32
        %v1266 = vpop.permute.xlu0 %1265
        %vm1268 = vcmask 392448
        %1269 = vst.msk [vmem:[%s650] sm:$0xff] %vm1268, %v1266
        %v1270 = vpack.c.bf16 %v1263, %v1263
        %1271 = vrot.lane.b32.xlu0 %v883, 112
        %v1272 = vpop.permute.xlu0 %1271
        %v1275 = vsel %vm931, %v1270, 0
        %1277 = vmatprep.subr.bf16.mxu0 0
        %1278 = vmatpush1.bf16.msra.mxu0 %v1272
        %1279 = vmatprep.subr.bf16.mxu0 0
        %1280 = vmatpush1.bf16.msra.mxu0 0
        %1281 = vmatprep.subr.bf16.mxu0 0
        %1282 = vmatpush1.bf16.msra.mxu0 0
        %1283 = vmatprep.subr.bf16.mxu0 0
        %1284 = vmatpush1.bf16.msra.mxu0 0
        %1285 = vmatprep.subr.bf16.mxu0 0
        %1286 = vmatpush1.bf16.msra.mxu0 0
        %1287 = vmatprep.subr.bf16.mxu0 0
        %1288 = vmatpush1.bf16.msra.mxu0 0
        %1289 = vmatprep.subr.bf16.mxu0 0
        %1290 = vmatpush1.bf16.msra.mxu0 0
        %1291 = vmatprep.subr.bf16.mxu0 0
        %1292 = vmatpush1.bf16.msra.mxu0 0
        %1293 = vmatprep.subr.bf16.mxu0 0
        %1294 = vmatpush1.bf16.msra.mxu0 0
        %1295 = vmatprep.subr.bf16.mxu0 0
        %1296 = vmatpush1.bf16.msra.mxu0 0
        %1297 = vmatprep.subr.bf16.mxu0 0
        %1298 = vmatpush1.bf16.msra.mxu0 0
        %1299 = vmatprep.subr.bf16.mxu0 0
        %1300 = vmatpush1.bf16.msra.mxu0 0
        %1301 = vmatprep.subr.bf16.mxu0 0
        %1302 = vmatpush1.bf16.msra.mxu0 0
        %1303 = vmatprep.subr.bf16.mxu0 0
        %1304 = vmatpush1.bf16.msra.mxu0 0
        %1305 = vmatprep.subr.bf16.mxu0 0
        %1306 = vmatpush1.bf16.msra.mxu0 0
        %1307 = vmatprep.subr.bf16.mxu0 0
        %1308 = vmatpush1.bf16.msra.mxu0 0
        %1309 = vmatprep.mubr.bf16.mxu0 0
        %1310 = vmatmul.mubr.bf16.gmra.mrb[0].mxu0 %v1275
        %v1311 = vpop.f32.mrb[0].mxu0
        %v1312 = vadd.f32 0.0, %v1311
        %v1313 = vpop.f32.mrb[0].mxu0
        %v1314 = vpop.f32.mrb[0].mxu0
        %v1315 = vpop.f32.mrb[0].mxu0
        %1316 = vdwg.mxu0
        %v1317 = vpack.c.bf16 %v1312, %v1312
        %s1318 = scalar_lea.vmem %s9, 8
        %v1319 = vld [vmem:[%s1318] sm:$0xf]
        %v1321 = vsel %vm884, %v1317, 0
        %v1324 = vsel %vm1113, %v1319, 0
        %1326 = vmatprep.subr.bf16.mxu0 0
        %1327 = vmatpush1.bf16.msra.mxu0 %v1324
        %1328 = vmatprep.subr.bf16.mxu0 0
        %1329 = vmatpush1.bf16.msra.mxu0 0
        %1330 = vmatprep.subr.bf16.mxu0 0
        %1331 = vmatpush1.bf16.msra.mxu0 0
        %1332 = vmatprep.subr.bf16.mxu0 0
        %1333 = vmatpush1.bf16.msra.mxu0 0
        %1334 = vmatprep.subr.bf16.mxu0 0
        %1335 = vmatpush1.bf16.msra.mxu0 0
        %1336 = vmatprep.subr.bf16.mxu0 0
        %1337 = vmatpush1.bf16.msra.mxu0 0
        %1338 = vmatprep.subr.bf16.mxu0 0
        %1339 = vmatpush1.bf16.msra.mxu0 0
        %1340 = vmatprep.subr.bf16.mxu0 0
        %1341 = vmatpush1.bf16.msra.mxu0 0
        %1342 = vmatprep.subr.bf16.mxu0 0
        %1343 = vmatpush1.bf16.msra.mxu0 0
        %1344 = vmatprep.subr.bf16.mxu0 0
        %1345 = vmatpush1.bf16.msra.mxu0 0
        %1346 = vmatprep.subr.bf16.mxu0 0
        %1347 = vmatpush1.bf16.msra.mxu0 0
        %1348 = vmatprep.subr.bf16.mxu0 0
        %1349 = vmatpush1.bf16.msra.mxu0 0
        %1350 = vmatprep.subr.bf16.mxu0 0
        %1351 = vmatpush1.bf16.msra.mxu0 0
        %1352 = vmatprep.subr.bf16.mxu0 0
        %1353 = vmatpush1.bf16.msra.mxu0 0
        %1354 = vmatprep.subr.bf16.mxu0 0
        %1355 = vmatpush1.bf16.msra.mxu0 0
        %1356 = vmatprep.subr.bf16.mxu0 0
        %1357 = vmatpush1.bf16.msra.mxu0 0
        %1358 = vmatprep.mubr.bf16.mxu0 0
        %1359 = vmatmul.mubr.bf16.gmra.mrb[0].mxu0 %v1321
        %v1360 = vpop.f32.mrb[0].mxu0
        %v1361 = vadd.f32 0.0, %v1360
        %v1362 = vpop.f32.mrb[0].mxu0
        %v1363 = vpop.f32.mrb[0].mxu0
        %v1364 = vpop.f32.mrb[0].mxu0
        %1365 = vdwg.mxu0
        %v1366 = vadd.f32 %v1198, %v1361
        %1367 = vrot.lane.b32.xlu0 %v881, 104
        %v1368 = vpop.permute.xlu0 %1367
        %1369 = vrot.lane.b32.xlu0 %v882, 104
        %v1370 = vpop.permute.xlu0 %1369
        %v1372 = vsel %vm884, %v1368, 0
        %v1375 = vsel %vm884, %v1370, 0
        %1377 = vmatprep.subr.bf16.mxu0 0
        %1378 = vmatpush1.bf16.xpose.msra.mxu0 %v1375
        %1379 = vmatprep.subr.bf16.mxu0 0
        %1380 = vmatpush1.bf16.xpose.msra.mxu0 0
        %1381 = vmatprep.subr.bf16.mxu0 0
        %1382 = vmatpush1.bf16.xpose.msra.mxu0 0
        %1383 = vmatprep.subr.bf16.mxu0 0
        %1384 = vmatpush1.bf16.xpose.msra.mxu0 0
        %1385 = vmatprep.subr.bf16.mxu0 0
        %1386 = vmatpush1.bf16.xpose.msra.mxu0 0
        %1387 = vmatprep.subr.bf16.mxu0 0
        %1388 = vmatpush1.bf16.xpose.msra.mxu0 0
        %1389 = vmatprep.subr.bf16.mxu0 0
        %1390 = vmatpush1.bf16.xpose.msra.mxu0 0
        %1391 = vmatprep.subr.bf16.mxu0 0
        %1392 = vmatpush1.bf16.xpose.msra.mxu0 0
        %1393 = vmatprep.subr.bf16.mxu0 0
        %1394 = vmatpush1.bf16.xpose.msra.mxu0 0
        %1395 = vmatprep.subr.bf16.mxu0 0
        %1396 = vmatpush1.bf16.xpose.msra.mxu0 0
        %1397 = vmatprep.subr.bf16.mxu0 0
        %1398 = vmatpush1.bf16.xpose.msra.mxu0 0
        %1399 = vmatprep.subr.bf16.mxu0 0
        %1400 = vmatpush1.bf16.xpose.msra.mxu0 0
        %1401 = vmatprep.subr.bf16.mxu0 0
        %1402 = vmatpush1.bf16.xpose.msra.mxu0 0
        %1403 = vmatprep.subr.bf16.mxu0 0
        %1404 = vmatpush1.bf16.xpose.msra.mxu0 0
        %1405 = vmatprep.subr.bf16.mxu0 0
        %1406 = vmatpush1.bf16.xpose.msra.mxu0 0
        %1407 = vmatprep.subr.bf16.mxu0 0
        %1408 = vmatpush1.bf16.xpose.msra.mxu0 0
        %1409 = vmatprep.mubr.bf16.mxu0 0
        %1410 = vmatmul.mubr.bf16.gmra.mrb[0].mxu0 %v1372
        %v1411 = vpop.f32.mrb[0].mxu0
        %v1412 = vadd.f32 0.0, %v1411
        %v1413 = vpop.f32.mrb[0].mxu0
        %v1414 = vpop.f32.mrb[0].mxu0
        %v1415 = vpop.f32.mrb[0].mxu0
        %1416 = vdwg.mxu0
        %v1417 = vsel %vm931, %v1412, -inf
        %1418 = vmax.xlane.f32.xlu0 %v1417
        %v1419 = vpop.xlane.xlu0 %1418
        %v1420 = vsub.f32 %v1412, %v1419
        %v1421 = vmul.f32 %v1420, 1.442695
        %v1422 = vpow.pop %v1421
        %v1423 = vsel %vm931, %v1422, 0.0
        %1424 = vadd.xlane.f32.xlu0 %v1423
        %v1425 = vpop.xlane.xlu0 %1424
        %v1426 = vrcp.pop %v1425
        %v1427 = vmul.f32 %v1422, %v1426
        %1429 = vrot.lane.b32.xlu0 %v1427, 48
        %v1430 = vpop.permute.xlu0 %1429
        %vm1432 = vcmask 523648
        %1433 = vst.msk [vmem:[%s650] sm:$0xff] %vm1432, %v1430
        %v1434 = vpack.c.bf16 %v1427, %v1427
        %1435 = vrot.lane.b32.xlu0 %v883, 104
        %v1436 = vpop.permute.xlu0 %1435
        %v1439 = vsel %vm931, %v1434, 0
        %1441 = vmatprep.subr.bf16.mxu0 0
        %1442 = vmatpush1.bf16.msra.mxu0 %v1436
        %1443 = vmatprep.subr.bf16.mxu0 0
        %1444 = vmatpush1.bf16.msra.mxu0 0
        %1445 = vmatprep.subr.bf16.mxu0 0
        %1446 = vmatpush1.bf16.msra.mxu0 0
        %1447 = vmatprep.subr.bf16.mxu0 0
        %1448 = vmatpush1.bf16.msra.mxu0 0
        %1449 = vmatprep.subr.bf16.mxu0 0
        %1450 = vmatpush1.bf16.msra.mxu0 0
        %1451 = vmatprep.subr.bf16.mxu0 0
        %1452 = vmatpush1.bf16.msra.mxu0 0
        %1453 = vmatprep.subr.bf16.mxu0 0
        %1454 = vmatpush1.bf16.msra.mxu0 0
        %1455 = vmatprep.subr.bf16.mxu0 0
        %1456 = vmatpush1.bf16.msra.mxu0 0
        %1457 = vmatprep.subr.bf16.mxu0 0
        %1458 = vmatpush1.bf16.msra.mxu0 0
        %1459 = vmatprep.subr.bf16.mxu0 0
        %1460 = vmatpush1.bf16.msra.mxu0 0
        %1461 = vmatprep.subr.bf16.mxu0 0
        %1462 = vmatpush1.bf16.msra.mxu0 0
        %1463 = vmatprep.subr.bf16.mxu0 0
        %1464 = vmatpush1.bf16.msra.mxu0 0
        %1465 = vmatprep.subr.bf16.mxu0 0
        %1466 = vmatpush1.bf16.msra.mxu0 0
        %1467 = vmatprep.subr.bf16.mxu0 0
        %1468 = vmatpush1.bf16.msra.mxu0 0
        %1469 = vmatprep.subr.bf16.mxu0 0
        %1470 = vmatpush1.bf16.msra.mxu0 0
        %1471 = vmatprep.subr.bf16.mxu0 0
        %1472 = vmatpush1.bf16.msra.mxu0 0
        %1473 = vmatprep.mubr.bf16.mxu0 0
        %1474 = vmatmul.mubr.bf16.gmra.mrb[0].mxu0 %v1439
        %v1475 = vpop.f32.mrb[0].mxu0
        %v1476 = vadd.f32 0.0, %v1475
        %v1477 = vpop.f32.mrb[0].mxu0
        %v1478 = vpop.f32.mrb[0].mxu0
        %v1479 = vpop.f32.mrb[0].mxu0
        %1480 = vdwg.mxu0
        %v1481 = vpack.c.bf16 %v1476, %v1476
        %s1482 = scalar_lea.vmem %s9, 12
        %v1483 = vld [vmem:[%s1482] sm:$0xf]
        %v1485 = vsel %vm884, %v1481, 0
        %v1488 = vsel %vm1113, %v1483, 0
        %1490 = vmatprep.subr.bf16.mxu0 0
        %1491 = vmatpush1.bf16.msra.mxu0 %v1488
        %1492 = vmatprep.subr.bf16.mxu0 0
        %1493 = vmatpush1.bf16.msra.mxu0 0
        %1494 = vmatprep.subr.bf16.mxu0 0
        %1495 = vmatpush1.bf16.msra.mxu0 0
        %1496 = vmatprep.subr.bf16.mxu0 0
        %1497 = vmatpush1.bf16.msra.mxu0 0
        %1498 = vmatprep.subr.bf16.mxu0 0
        %1499 = vmatpush1.bf16.msra.mxu0 0
        %1500 = vmatprep.subr.bf16.mxu0 0
        %1501 = vmatpush1.bf16.msra.mxu0 0
        %1502 = vmatprep.subr.bf16.mxu0 0
        %1503 = vmatpush1.bf16.msra.mxu0 0
        %1504 = vmatprep.subr.bf16.mxu0 0
        %1505 = vmatpush1.bf16.msra.mxu0 0
        %1506 = vmatprep.subr.bf16.mxu0 0
        %1507 = vmatpush1.bf16.msra.mxu0 0
        %1508 = vmatprep.subr.bf16.mxu0 0
        %1509 = vmatpush1.bf16.msra.mxu0 0
        %1510 = vmatprep.subr.bf16.mxu0 0
        %1511 = vmatpush1.bf16.msra.mxu0 0
        %1512 = vmatprep.subr.bf16.mxu0 0
        %1513 = vmatpush1.bf16.msra.mxu0 0
        %1514 = vmatprep.subr.bf16.mxu0 0
        %1515 = vmatpush1.bf16.msra.mxu0 0
        %1516 = vmatprep.subr.bf16.mxu0 0
        %1517 = vmatpush1.bf16.msra.mxu0 0
        %1518 = vmatprep.subr.bf16.mxu0 0
        %1519 = vmatpush1.bf16.msra.mxu0 0
        %1520 = vmatprep.subr.bf16.mxu0 0
        %1521 = vmatpush1.bf16.msra.mxu0 0
        %1522 = vmatprep.mubr.bf16.mxu0 0
        %1523 = vmatmul.mubr.bf16.gmra.mrb[0].mxu0 %v1485
        %v1524 = vpop.f32.mrb[0].mxu0
        %v1525 = vadd.f32 0.0, %v1524
        %v1526 = vpop.f32.mrb[0].mxu0
        %v1527 = vpop.f32.mrb[0].mxu0
        %v1528 = vpop.f32.mrb[0].mxu0
        %1529 = vdwg.mxu0
        %v1530 = vadd.f32 %v1366, %v1525
        %v1531 = vld [vmem:[#allocation16] sm:$0x1]
        %v1533 = vlaneseq
        %v1534 = vshrl.u32 %v1533, 7
        %v1535 = vsub.s32 0, %v1534
        %v1536 = vrot.slane %v1531, %v1535
        %v1538 = vadd.f32 %v1530, %v1536
        %1539 = vst.msk [vmem:[%s643] sm:$0xff] %vm836, %v1538
        %s1540 = sand.u32 %s353, 1
        %s1541 = scalar_lea.sflag [#allocation6], %s1540
        %s1542 = sand.u32 %s353, 1
        %s1543 = smul.addr %s1542, 8
        %s1544 = scalar_lea.vmem [#allocation18], %s1543
        %s1545 = sand.u32 %s381, 1
        %s1546 = scalar_lea.sflag [#allocation20], %s1545
        %s1547 = sand.u32 %s381, 1
        %s1548 = smul.addr %s1547, 8
        %s1549 = scalar_lea.vmem [#allocation19], %s1548
        // Predicated region
        $region109: #{tpu_custom_call.1} parent=71 // pred_check
          %p1550 = pneg %p363
        $region110: #{tpu_custom_call.1} parent=71 // pred_check_branch
          %1552 = sbr.rel (%p1550) target = $region112
        $region111: #{tpu_custom_call.1} parent=71 // pred_region
          %s1554 = ssub.s32 128, 128
          %1555 = vsyncadd %s1541, %s1554
          %s1556 = sadd.s32 %s46, %s45
          %s1557 = smul.addr %s1556, 128
          %s1558 = scalar_lea.hbm %s13, %s1557
          %s1560 = sshll.u32 %s1544, 4
          %s1561 = int_to_ptr.vmem [resolvable:$true] %s1560
          %1563 = dma.vmem_to_hbm [thread:$0]  %s1561, 128, %s1558, %s1541
        $region112: #{tpu_custom_call.1} parent=71 // pred_fallthru
          _
        // Predicated region
        $region113: #{tpu_custom_call.1} parent=71 // pred_check
          %p1564 = pneg %p391
        $region114: #{tpu_custom_call.1} parent=71 // pred_check_branch
          %1566 = sbr.rel (%p1564) target = $region116
        $region115: #{tpu_custom_call.1} parent=71 // pred_region
          %s1568 = ssub.s32 128, 128
          %1569 = vsyncadd %s1546, %s1568
          %s1570 = sadd.s32 %s46, %s45
          %s1571 = smul.addr %s1570, 128
          %s1572 = scalar_lea.hbm %s14, %s1571
          %s1574 = sshll.u32 %s1549, 4
          %s1575 = int_to_ptr.vmem [resolvable:$true] %s1574
          %1577 = dma.vmem_to_hbm [thread:$0]  %s1575, 128, %s1572, %s1546
        $region116: #{tpu_custom_call.1} parent=71 // pred_fallthru
          _
      $region72: #{tpu_custom_call.1} parent=5 // pred_fallthru
        _
      %p1578 = scmp.le.s32.totalorder 2, %s36
      // Predicated region
      $region117: #{tpu_custom_call.1} parent=5 // pred_check
        %p1579 = pneg %p1578
      $region118: #{tpu_custom_call.1} parent=5 // pred_check_branch
        %1581 = sbr.rel (%p1579) target = $region120
      $region119: #{tpu_custom_call.1} parent=5 // pred_region
        %s1582 = ssub.s32 %s36, 2
        // Predicated region
        $region121: #{tpu_custom_call.1} parent=119 // pred_check
          %p1583 = pneg %p369
        $region122: #{tpu_custom_call.1} parent=119 // pred_check_branch
          %1585 = sbr.rel (%p1583) target = $region124
        $region123: #{tpu_custom_call.1} parent=119 // pred_region
          %s1586 = sand.u32 %s354, 1
          %s1587 = scalar_lea.sflag [#allocation6], %s1586
          %s1588 = sand.u32 %s354, 1
          %s1589 = smul.addr %s1588, 8
          %s1590 = scalar_lea.vmem [#allocation18], %s1589
          %1591 = dma.done %s1587, 128
        $region124: #{tpu_custom_call.1} parent=119 // pred_fallthru
          _
        // Predicated region
        $region125: #{tpu_custom_call.1} parent=119 // pred_check
          %p1592 = pneg %p397
        $region126: #{tpu_custom_call.1} parent=119 // pred_check_branch
          %1594 = sbr.rel (%p1592) target = $region128
        $region127: #{tpu_custom_call.1} parent=119 // pred_region
          %s1595 = sand.u32 %s382, 1
          %s1596 = scalar_lea.sflag [#allocation20], %s1595
          %s1597 = sand.u32 %s382, 1
          %s1598 = smul.addr %s1597, 8
          %s1599 = scalar_lea.vmem [#allocation19], %s1598
          %1600 = dma.done %s1596, 128
        $region128: #{tpu_custom_call.1} parent=119 // pred_fallthru
          _
      $region120: #{tpu_custom_call.1} parent=5 // pred_fallthru
        _
    $region6: #{tpu_custom_call.1} parent=1 // loop_footer
      %s40 = sadd.s32 1, %s36
    $region7: #{tpu_custom_call.1} parent=1 // loop_footer_branch
      %35 = sbr.rel target = $region3
    $region8: #{tpu_custom_call.1} parent=1 // loop_exit
      _
    %1601 = vsyncpa [#allocation5], 1
    %s1602 = scalar_lea.sflag [#allocation5], 1
    %1603 = vsyncpa %s1602, 1
    %1604 = vsyncpa [#allocation8], 1
    %s1605 = scalar_lea.sflag [#allocation8], 1
    %1606 = vsyncpa %s1605, 1
    %1607 = vsyncpa [#allocation11], 1
    %1608 = vsyncpa [#allocation14], 1
    %1609 = vsyncpa [#allocation17], 1
    %1610 = vsyncpa [#allocation6], 1
    %s1611 = scalar_lea.sflag [#allocation6], 1
    %1612 = vsyncpa %s1611, 1
    %1613 = vsyncpa [#allocation20], 1
    %s1614 = scalar_lea.sflag [#allocation20], 1
    %1615 = vsyncpa %s1614, 1

</llo_original>
